<compile_context>
chip_gen: v5e
topology: v5e:2x2
jax: 0.10.0
libtpu: 0.0.40
codegen_flags: <defaults>
</compile_context>

<pallas_src>
import functools

import jax
import jax.numpy as jnp
from jax.experimental import pallas as pl
from jax.experimental.pallas import tpu as pltpu


def _round_up(x, m):
    return (x + m - 1) // m * m


def _m_tiling(M, align=16, tm_max=512):
    """Pick (padded_M, tile_m, grid_m). tile_m is bf16-sublane aligned (16)."""
    Mp = _round_up(M, align)
    if Mp <= tm_max:
        return Mp, Mp, 1
    Mp = _round_up(M, tm_max)
    return Mp, tm_max, Mp // tm_max


# ---------------------------------------------------------------------------
# Pallas kernels
# ---------------------------------------------------------------------------
def _conv_pool_kernel(c0_ref, c1_ref, c2_ref, c3_ref, w_ref, b_ref, o_ref, *, relu):
    """Fused conv-as-matmul + bias + activation + 2x2 max-pool.

    c{q}_ref : [tm, K] bf16 im2col rows for pool-window offset q in {00,01,10,11}
    w_ref    : [K, N]  bf16 (kh*kw*Cin, Cout)
    b_ref    : [1, N]  f32
    o_ref    : [tm, N] bf16 pooled activation
    """
    w = w_ref[...]
    b = b_ref[...]
    res = None
    for c_ref in (c0_ref, c1_ref, c2_ref, c3_ref):
        acc = jnp.dot(c_ref[...], w, preferred_element_type=jnp.float32) + b
        if relu:
            acc = jnp.maximum(acc, 0.0)
        res = acc if res is None else jnp.maximum(res, acc)
    o_ref[...] = res.astype(o_ref.dtype)


def _mlp_kernel(x_ref, w1_ref, b1_ref, w2_ref, b2_ref, w3_ref, b3_ref, o_ref, *, relu):
    """Fused fc1 -> fc2 -> fc3 (bf16 matmuls, f32 accumulate / bias / ReLU)."""
    h = jnp.dot(x_ref[...], w1_ref[...], preferred_element_type=jnp.float32) + b1_ref[...]
    if relu:
        h = jnp.maximum(h, 0.0)
    h = jnp.dot(h.astype(jnp.bfloat16), w2_ref[...],
                preferred_element_type=jnp.float32) + b2_ref[...]
    if relu:
        h = jnp.maximum(h, 0.0)
    h = jnp.dot(h.astype(jnp.bfloat16), w3_ref[...],
                preferred_element_type=jnp.float32) + b3_ref[...]
    o_ref[...] = h.astype(o_ref.dtype)


# ---------------------------------------------------------------------------
# Pallas wrappers
# ---------------------------------------------------------------------------
def conv_relu_pool_pallas(cols, w, b, relu):
    """cols: 4 x [M, K] bf16; w: [K, N] bf16; b: [1, N] f32 -> [M, N] bf16."""
    M, K = cols[0].shape
    N = w.shape[1]
    Mp, tm, grid_m = _m_tiling(M)
    if Mp != M:
        cols = [jnp.pad(c, ((0, Mp - M), (0, 0))) for c in cols]
    out = pl.pallas_call(
        functools.partial(_conv_pool_kernel, relu=relu),
        grid=(grid_m,),
        in_specs=[pl.BlockSpec((tm, K), lambda i: (i, 0))] * 4
        + [pl.BlockSpec((K, N), lambda i: (0, 0)),
           pl.BlockSpec((1, N), lambda i: (0, 0))],
        out_specs=pl.BlockSpec((tm, N), lambda i: (i, 0)),
        out_shape=jax.ShapeDtypeStruct((Mp, N), jnp.bfloat16),
        compiler_params=pltpu.CompilerParams(dimension_semantics=("parallel",)),
    )(*cols, w, b)
    return out if Mp == M else out[:M]


def mlp_pallas(x, w1, b1, w2, b2, w3, b3, relu):
    """Fused 3-layer MLP head. x: [M, 400] bf16 -> [M, 10] f32."""
    M, K = x.shape
    N = w3.shape[1]
    Mp, tm, grid_m = _m_tiling(M)
    if Mp != M:
        x = jnp.pad(x, ((0, Mp - M), (0, 0)))
    full = lambda i: (0, 0)
    out = pl.pallas_call(
        functools.partial(_mlp_kernel, relu=relu),
        grid=(grid_m,),
        in_specs=[
            pl.BlockSpec((tm, K), lambda i: (i, 0)),
            pl.BlockSpec(w1.shape, full), pl.BlockSpec(b1.shape, full),
            pl.BlockSpec(w2.shape, full), pl.BlockSpec(b2.shape, full),
            pl.BlockSpec(w3.shape, full), pl.BlockSpec(b3.shape, full),
        ],
        out_specs=pl.BlockSpec((tm, N), lambda i: (i, 0)),
        out_shape=jax.ShapeDtypeStruct((Mp, N), jnp.float32),
        compiler_params=pltpu.CompilerParams(dimension_semantics=("parallel",)),
    )(x, w1, b1, w2, b2, w3, b3)
    return out if Mp == M else out[:M]


# ---------------------------------------------------------------------------
# XLA glue: pool-aware im2col + parameter handling
# ---------------------------------------------------------------------------
# TODO(synk): assemble the 5x5 patches fully inside the conv kernel (from a
# VMEM-resident NHWC tile) to avoid the 25x im2col expansion in HBM; kept in
# XLA here for portability/compile robustness at these small shapes.
def im2col_pooled(x, kh, kw):
    """NHWC x -> 4 matrices [B*Hp*Wp, kh*kw*C] (one per 2x2 pool offset) + (Hp, Wp).

    Column order (dy, dx, ci) matches weights reshaped from (kh, kw, Cin, Cout).
    """
    B, H, W, C = x.shape
    Ho, Wo = H - kh + 1, W - kw + 1      # conv (VALID, stride 1) output
    Hp, Wp = Ho // 2, Wo // 2            # after 2x2/2 max-pool
    cols = []
    for py in range(2):
        for px in range(2):
            patches = []
            for dy in range(kh):
                for dx in range(kw):
                    ys, xs = py + dy, px + dx
                    patches.append(
                        x[:, ys: ys + 2 * (Hp - 1) + 1: 2,
                             xs: xs + 2 * (Wp - 1) + 1: 2, :])
            p = jnp.stack(patches, axis=3)               # [B, Hp, Wp, kh*kw, C]
            cols.append(p.reshape(B * Hp * Wp, kh * kw * C))
    return cols, Hp, Wp


def _uniform(key, shape, fan_in):
    bound = 1.0 / (fan_in ** 0.5)
    return jax.random.uniform(key, shape, jnp.float32, -bound, bound)


def init_params(key, conv1_out_channels=20, fc1_out_channels=120):
    ks = jax.random.split(key, 10)
    return {
        # PyTorch conv weight layout: [Cout, Cin, kh, kw]
        "conv1_w": _uniform(ks[0], (conv1_out_channels, 3, 5, 5), 3 * 5 * 5),
        "conv1_b": _uniform(ks[1], (conv1_out_channels,), 3 * 5 * 5),
        "conv2_w": _uniform(ks[2], (16, conv1_out_channels, 5, 5),
                            conv1_out_channels * 5 * 5),
        "conv2_b": _uniform(ks[3], (16,), conv1_out_channels * 5 * 5),
        # PyTorch linear weight layout: [out, in]
        "fc1_w": _uniform(ks[4], (fc1_out_channels, 16 * 5 * 5), 16 * 5 * 5),
        "fc1_b": _uniform(ks[5], (fc1_out_channels,), 16 * 5 * 5),
        "fc2_w": _uniform(ks[6], (84, fc1_out_channels), fc1_out_channels),
        "fc2_b": _uniform(ks[7], (84,), fc1_out_channels),
        "fc3_w": _uniform(ks[8], (10, 84), 84),
        "fc3_b": _uniform(ks[9], (10,), 84),
    }


def prepare_params(p):
    """One-time layout/dtype transform (outside the forward, per review)."""
    def conv_w(w):   # [Cout, Cin, kh, kw] -> [kh*kw*Cin, Cout] bf16
        co, ci, kh, kw = w.shape
        return jnp.transpose(w, (2, 3, 1, 0)).reshape(kh * kw * ci, co).astype(jnp.bfloat16)

    def fc_w(w):     # [out, in] -> [in, out] bf16
        return jnp.transpose(w).astype(jnp.bfloat16)

    def bias(b):
        return b.reshape(1, -1).astype(jnp.float32)

    return {
        "conv1_w": conv_w(p["conv1_w"]), "conv1_b": bias(p["conv1_b"]),
        "conv2_w": conv_w(p["conv2_w"]), "conv2_b": bias(p["conv2_b"]),
        "fc1_w": fc_w(p["fc1_w"]), "fc1_b": bias(p["fc1_b"]),
        "fc2_w": fc_w(p["fc2_w"]), "fc2_b": bias(p["fc2_b"]),
        "fc3_w": fc_w(p["fc3_w"]), "fc3_b": bias(p["fc3_b"]),
    }


def net_forward(mp, x_nchw, non_linear=True):
    """Exact forward of Net: x_nchw [B, 3, 32, 32] f32 -> [B, 10] f32."""
    B = x_nchw.shape[0]
    x = jnp.transpose(x_nchw, (0, 2, 3, 1)).astype(jnp.bfloat16)  # NCHW -> NHWC bf16

    # conv1 (5x5 valid) + activation + 2x2 max-pool, fused in one pallas_call
    cols, Hp, Wp = im2col_pooled(x, 5, 5)                          # 4 x [B*14*14, 75]
    y = conv_relu_pool_pallas(cols, mp["conv1_w"], mp["conv1_b"], relu=non_linear)
    y = y.reshape(B, Hp, Wp, -1)                                   # [B,14,14,20]

    # conv2 (5x5 valid) + activation + 2x2 max-pool, fused
    cols, Hp, Wp = im2col_pooled(y, 5, 5)                          # 4 x [B*5*5, 500]
    y = conv_relu_pool_pallas(cols, mp["conv2_w"], mp["conv2_b"], relu=non_linear)
    y = y.reshape(B, Hp, Wp, 16)                                   # [B,5,5,16]

    # flatten in PyTorch NCHW order: (C, H, W) contiguous
    flat = jnp.transpose(y, (0, 3, 1, 2)).reshape(B, 16 * 5 * 5)   # [B, 400] bf16

    # fc1 -> fc2 -> fc3 fused in a single pallas_call
    return mlp_pallas(flat, mp["fc1_w"], mp["fc1_b"], mp["fc2_w"], mp["fc2_b"],
                      mp["fc3_w"], mp["fc3_b"], relu=non_linear)


if __name__ == "__main__":
    key = jax.random.PRNGKey(0)
    pkey, xkey = jax.random.split(key)
    params = init_params(pkey, conv1_out_channels=20, fc1_out_channels=120)
    mat_params = prepare_params(params)   # one-time, outside the forward
    # 32x32 input so the feature map is 16x5x5 before fc1 (as the module requires).
    x = jax.random.normal(xkey, (2, 3, 32, 32), dtype=jnp.float32)

    fwd = jax.jit(functools.partial(net_forward, non_linear=True))
    out = jax.block_until_ready(fwd(mat_params, x))
    assert out.shape == (2, 10), out.shape
    print("KERNEL_OK")
</pallas_src>

<mosaic_0001>
module attributes {stable_mosaic.version = 11 : i64} {
  func.func @_conv_pool_kernel(%arg0: i32, %arg1: memref<400x75xbf16, #tpu.memory_space<vmem>>, %arg2: memref<400x75xbf16, #tpu.memory_space<vmem>>, %arg3: memref<400x75xbf16, #tpu.memory_space<vmem>>, %arg4: memref<400x75xbf16, #tpu.memory_space<vmem>>, %arg5: memref<75x20xbf16, #tpu.memory_space<vmem>>, %arg6: memref<1x20xf32, #tpu.memory_space<vmem>>, %arg7: memref<400x20xbf16, #tpu.memory_space<vmem>>) attributes {dimension_semantics = [#tpu.dimension_semantics<parallel>], iteration_bounds = array<i64: 1>, scalar_prefetch = 0 : i64, scratch_operands = 0 : i64, tpu.core_type = #tpu.core_type<tc>, window_params = [{transform_indices = @transform_0, window_bounds = array<i64: 400, 75>}, {transform_indices = @transform_1, window_bounds = array<i64: 400, 75>}, {transform_indices = @transform_2, window_bounds = array<i64: 400, 75>}, {transform_indices = @transform_3, window_bounds = array<i64: 400, 75>}, {pipeline_mode = #tpu.pipeline_mode<synchronous>, transform_indices = @transform_4, window_bounds = array<i64: 75, 20>}, {pipeline_mode = #tpu.pipeline_mode<synchronous>, transform_indices = @transform_5, window_bounds = array<i64: 1, 20>}, {transform_indices = @transform_6, window_bounds = array<i64: 400, 20>}]} {
    %c0 = arith.constant 0 : index
    %c0_0 = arith.constant 0 : index
    %0 = vector.load %arg5[%c0, %c0_0] : memref<75x20xbf16, #tpu.memory_space<vmem>>, vector<75x20xbf16>
    %c0_1 = arith.constant 0 : index
    %c0_2 = arith.constant 0 : index
    %1 = vector.load %arg6[%c0_1, %c0_2] : memref<1x20xf32, #tpu.memory_space<vmem>>, vector<1x20xf32>
    %c0_3 = arith.constant 0 : index
    %c0_4 = arith.constant 0 : index
    %2 = vector.load %arg1[%c0_3, %c0_4] : memref<400x75xbf16, #tpu.memory_space<vmem>>, vector<400x75xbf16>
    %cst = arith.constant dense<0.000000e+00> : vector<400x20xf32>
    %3 = tpu.matmul %2, %0, %cst {dimension_numbers = #tpu.dot_dimension_numbers<[1], [0], [0], [1], [0, 0, 1, 1], [], []>} : vector<400x75xbf16>, vector<75x20xbf16>, vector<400x20xf32> -> vector<400x20xf32>
    %4 = vector.broadcast %1 : vector<1x20xf32> to vector<400x20xf32>
    %5 = arith.addf %3, %4 : vector<400x20xf32>
    %cst_5 = arith.constant 0.000000e+00 : f32
    %6 = vector.broadcast %cst_5 : f32 to vector<400x20xf32>
    %7 = arith.maximumf %5, %6 : vector<400x20xf32>
    %c0_6 = arith.constant 0 : index
    %c0_7 = arith.constant 0 : index
    %8 = vector.load %arg2[%c0_6, %c0_7] : memref<400x75xbf16, #tpu.memory_space<vmem>>, vector<400x75xbf16>
    %cst_8 = arith.constant dense<0.000000e+00> : vector<400x20xf32>
    %9 = tpu.matmul %8, %0, %cst_8 {dimension_numbers = #tpu.dot_dimension_numbers<[1], [0], [0], [1], [0, 0, 1, 1], [], []>} : vector<400x75xbf16>, vector<75x20xbf16>, vector<400x20xf32> -> vector<400x20xf32>
    %10 = vector.broadcast %1 : vector<1x20xf32> to vector<400x20xf32>
    %11 = arith.addf %9, %10 : vector<400x20xf32>
    %cst_9 = arith.constant 0.000000e+00 : f32
    %12 = vector.broadcast %cst_9 : f32 to vector<400x20xf32>
    %13 = arith.maximumf %11, %12 : vector<400x20xf32>
    %14 = arith.maximumf %7, %13 : vector<400x20xf32>
    %c0_10 = arith.constant 0 : index
    %c0_11 = arith.constant 0 : index
    %15 = vector.load %arg3[%c0_10, %c0_11] : memref<400x75xbf16, #tpu.memory_space<vmem>>, vector<400x75xbf16>
    %cst_12 = arith.constant dense<0.000000e+00> : vector<400x20xf32>
    %16 = tpu.matmul %15, %0, %cst_12 {dimension_numbers = #tpu.dot_dimension_numbers<[1], [0], [0], [1], [0, 0, 1, 1], [], []>} : vector<400x75xbf16>, vector<75x20xbf16>, vector<400x20xf32> -> vector<400x20xf32>
    %17 = vector.broadcast %1 : vector<1x20xf32> to vector<400x20xf32>
    %18 = arith.addf %16, %17 : vector<400x20xf32>
    %cst_13 = arith.constant 0.000000e+00 : f32
    %19 = vector.broadcast %cst_13 : f32 to vector<400x20xf32>
    %20 = arith.maximumf %18, %19 : vector<400x20xf32>
    %21 = arith.maximumf %14, %20 : vector<400x20xf32>
    %c0_14 = arith.constant 0 : index
    %c0_15 = arith.constant 0 : index
    %22 = vector.load %arg4[%c0_14, %c0_15] : memref<400x75xbf16, #tpu.memory_space<vmem>>, vector<400x75xbf16>
    %cst_16 = arith.constant dense<0.000000e+00> : vector<400x20xf32>
    %23 = tpu.matmul %22, %0, %cst_16 {dimension_numbers = #tpu.dot_dimension_numbers<[1], [0], [0], [1], [0, 0, 1, 1], [], []>} : vector<400x75xbf16>, vector<75x20xbf16>, vector<400x20xf32> -> vector<400x20xf32>
    %24 = vector.broadcast %1 : vector<1x20xf32> to vector<400x20xf32>
    %25 = arith.addf %23, %24 : vector<400x20xf32>
    %cst_17 = arith.constant 0.000000e+00 : f32
    %26 = vector.broadcast %cst_17 : f32 to vector<400x20xf32>
    %27 = arith.maximumf %25, %26 : vector<400x20xf32>
    %28 = arith.maximumf %21, %27 : vector<400x20xf32>
    %29 = arith.truncf %28 : vector<400x20xf32> to vector<400x20xbf16>
    %c0_18 = arith.constant 0 : index
    %c0_19 = arith.constant 0 : index
    %30 = vector.load %arg7[%c0_18, %c0_19] : memref<400x20xbf16, #tpu.memory_space<vmem>>, vector<400x20xbf16>
    tpu.vector_store %arg7[%c0_18, %c0_19], %29 {strides = array<i32>} : memref<400x20xbf16, #tpu.memory_space<vmem>>, vector<400x20xbf16>,
    return
  }
  func.func @transform_0(%arg0: i32) -> (i32, i32) {
    %c0_i32 = arith.constant 0 : i32
    %c0_i32_0 = arith.constant 0 : i32
    return %arg0, %c0_i32 : i32, i32
  }
  func.func @transform_1(%arg0: i32) -> (i32, i32) {
    %c0_i32 = arith.constant 0 : i32
    %c0_i32_0 = arith.constant 0 : i32
    return %arg0, %c0_i32 : i32, i32
  }
  func.func @transform_2(%arg0: i32) -> (i32, i32) {
    %c0_i32 = arith.constant 0 : i32
    %c0_i32_0 = arith.constant 0 : i32
    return %arg0, %c0_i32 : i32, i32
  }
  func.func @transform_3(%arg0: i32) -> (i32, i32) {
    %c0_i32 = arith.constant 0 : i32
    %c0_i32_0 = arith.constant 0 : i32
    return %arg0, %c0_i32 : i32, i32
  }
  func.func @transform_4(%arg0: i32) -> (i32, i32) {
    %c0_i32 = arith.constant 0 : i32
    %c0_i32_0 = arith.constant 0 : i32
    %c0_i32_1 = arith.constant 0 : i32
    return %c0_i32, %c0_i32_0 : i32, i32
  }
  func.func @transform_5(%arg0: i32) -> (i32, i32) {
    %c0_i32 = arith.constant 0 : i32
    %c0_i32_0 = arith.constant 0 : i32
    %c0_i32_1 = arith.constant 0 : i32
    return %c0_i32, %c0_i32_0 : i32, i32
  }
  func.func @transform_6(%arg0: i32) -> (i32, i32) {
    %c0_i32 = arith.constant 0 : i32
    %c0_i32_0 = arith.constant 0 : i32
    return %arg0, %c0_i32 : i32, i32
  }
}

module attributes {stable_mosaic.version = 11 : i64} {
  func.func @_conv_pool_kernel(%arg0: i32, %arg1: memref<64x500xbf16, #tpu.memory_space<vmem>>, %arg2: memref<64x500xbf16, #tpu.memory_space<vmem>>, %arg3: memref<64x500xbf16, #tpu.memory_space<vmem>>, %arg4: memref<64x500xbf16, #tpu.memory_space<vmem>>, %arg5: memref<500x16xbf16, #tpu.memory_space<vmem>>, %arg6: memref<1x16xf32, #tpu.memory_space<vmem>>, %arg7: memref<64x16xbf16, #tpu.memory_space<vmem>>) attributes {dimension_semantics = [#tpu.dimension_semantics<parallel>], iteration_bounds = array<i64: 1>, scalar_prefetch = 0 : i64, scratch_operands = 0 : i64, tpu.core_type = #tpu.core_type<tc>, window_params = [{transform_indices = @transform_0, window_bounds = array<i64: 64, 500>}, {transform_indices = @transform_1, window_bounds = array<i64: 64, 500>}, {transform_indices = @transform_2, window_bounds = array<i64: 64, 500>}, {transform_indices = @transform_3, window_bounds = array<i64: 64, 500>}, {pipeline_mode = #tpu.pipeline_mode<synchronous>, transform_indices = @transform_4, window_bounds = array<i64: 500, 16>}, {pipeline_mode = #tpu.pipeline_mode<synchronous>, transform_indices = @transform_5, window_bounds = array<i64: 1, 16>}, {transform_indices = @transform_6, window_bounds = array<i64: 64, 16>}]} {
    %c0 = arith.constant 0 : index
    %c0_0 = arith.constant 0 : index
    %0 = vector.load %arg5[%c0, %c0_0] : memref<500x16xbf16, #tpu.memory_space<vmem>>, vector<500x16xbf16>
    %c0_1 = arith.constant 0 : index
    %c0_2 = arith.constant 0 : index
    %1 = vector.load %arg6[%c0_1, %c0_2] : memref<1x16xf32, #tpu.memory_space<vmem>>, vector<1x16xf32>
    %c0_3 = arith.constant 0 : index
    %c0_4 = arith.constant 0 : index
    %2 = vector.load %arg1[%c0_3, %c0_4] : memref<64x500xbf16, #tpu.memory_space<vmem>>, vector<64x500xbf16>
    %cst = arith.constant dense<0.000000e+00> : vector<64x16xf32>
    %3 = tpu.matmul %2, %0, %cst {dimension_numbers = #tpu.dot_dimension_numbers<[1], [0], [0], [1], [0, 0, 1, 1], [], []>} : vector<64x500xbf16>, vector<500x16xbf16>, vector<64x16xf32> -> vector<64x16xf32>
    %4 = vector.broadcast %1 : vector<1x16xf32> to vector<64x16xf32>
    %5 = arith.addf %3, %4 : vector<64x16xf32>
    %cst_5 = arith.constant 0.000000e+00 : f32
    %6 = vector.broadcast %cst_5 : f32 to vector<64x16xf32>
    %7 = arith.maximumf %5, %6 : vector<64x16xf32>
    %c0_6 = arith.constant 0 : index
    %c0_7 = arith.constant 0 : index
    %8 = vector.load %arg2[%c0_6, %c0_7] : memref<64x500xbf16, #tpu.memory_space<vmem>>, vector<64x500xbf16>
    %cst_8 = arith.constant dense<0.000000e+00> : vector<64x16xf32>
    %9 = tpu.matmul %8, %0, %cst_8 {dimension_numbers = #tpu.dot_dimension_numbers<[1], [0], [0], [1], [0, 0, 1, 1], [], []>} : vector<64x500xbf16>, vector<500x16xbf16>, vector<64x16xf32> -> vector<64x16xf32>
    %10 = vector.broadcast %1 : vector<1x16xf32> to vector<64x16xf32>
    %11 = arith.addf %9, %10 : vector<64x16xf32>
    %cst_9 = arith.constant 0.000000e+00 : f32
    %12 = vector.broadcast %cst_9 : f32 to vector<64x16xf32>
    %13 = arith.maximumf %11, %12 : vector<64x16xf32>
    %14 = arith.maximumf %7, %13 : vector<64x16xf32>
    %c0_10 = arith.constant 0 : index
    %c0_11 = arith.constant 0 : index
    %15 = vector.load %arg3[%c0_10, %c0_11] : memref<64x500xbf16, #tpu.memory_space<vmem>>, vector<64x500xbf16>
    %cst_12 = arith.constant dense<0.000000e+00> : vector<64x16xf32>
    %16 = tpu.matmul %15, %0, %cst_12 {dimension_numbers = #tpu.dot_dimension_numbers<[1], [0], [0], [1], [0, 0, 1, 1], [], []>} : vector<64x500xbf16>, vector<500x16xbf16>, vector<64x16xf32> -> vector<64x16xf32>
    %17 = vector.broadcast %1 : vector<1x16xf32> to vector<64x16xf32>
    %18 = arith.addf %16, %17 : vector<64x16xf32>
    %cst_13 = arith.constant 0.000000e+00 : f32
    %19 = vector.broadcast %cst_13 : f32 to vector<64x16xf32>
    %20 = arith.maximumf %18, %19 : vector<64x16xf32>
    %21 = arith.maximumf %14, %20 : vector<64x16xf32>
    %c0_14 = arith.constant 0 : index
    %c0_15 = arith.constant 0 : index
    %22 = vector.load %arg4[%c0_14, %c0_15] : memref<64x500xbf16, #tpu.memory_space<vmem>>, vector<64x500xbf16>
    %cst_16 = arith.constant dense<0.000000e+00> : vector<64x16xf32>
    %23 = tpu.matmul %22, %0, %cst_16 {dimension_numbers = #tpu.dot_dimension_numbers<[1], [0], [0], [1], [0, 0, 1, 1], [], []>} : vector<64x500xbf16>, vector<500x16xbf16>, vector<64x16xf32> -> vector<64x16xf32>
    %24 = vector.broadcast %1 : vector<1x16xf32> to vector<64x16xf32>
    %25 = arith.addf %23, %24 : vector<64x16xf32>
    %cst_17 = arith.constant 0.000000e+00 : f32
    %26 = vector.broadcast %cst_17 : f32 to vector<64x16xf32>
    %27 = arith.maximumf %25, %26 : vector<64x16xf32>
    %28 = arith.maximumf %21, %27 : vector<64x16xf32>
    %29 = arith.truncf %28 : vector<64x16xf32> to vector<64x16xbf16>
    %c0_18 = arith.constant 0 : index
    %c0_19 = arith.constant 0 : index
    %30 = vector.load %arg7[%c0_18, %c0_19] : memref<64x16xbf16, #tpu.memory_space<vmem>>, vector<64x16xbf16>
    tpu.vector_store %arg7[%c0_18, %c0_19], %29 {strides = array<i32>} : memref<64x16xbf16, #tpu.memory_space<vmem>>, vector<64x16xbf16>,
    return
  }
  func.func @transform_0(%arg0: i32) -> (i32, i32) {
    %c0_i32 = arith.constant 0 : i32
    %c0_i32_0 = arith.constant 0 : i32
    return %arg0, %c0_i32 : i32, i32
  }
  func.func @transform_1(%arg0: i32) -> (i32, i32) {
    %c0_i32 = arith.constant 0 : i32
    %c0_i32_0 = arith.constant 0 : i32
    return %arg0, %c0_i32 : i32, i32
  }
  func.func @transform_2(%arg0: i32) -> (i32, i32) {
    %c0_i32 = arith.constant 0 : i32
    %c0_i32_0 = arith.constant 0 : i32
    return %arg0, %c0_i32 : i32, i32
  }
  func.func @transform_3(%arg0: i32) -> (i32, i32) {
    %c0_i32 = arith.constant 0 : i32
    %c0_i32_0 = arith.constant 0 : i32
    return %arg0, %c0_i32 : i32, i32
  }
  func.func @transform_4(%arg0: i32) -> (i32, i32) {
    %c0_i32 = arith.constant 0 : i32
    %c0_i32_0 = arith.constant 0 : i32
    %c0_i32_1 = arith.constant 0 : i32
    return %c0_i32, %c0_i32_0 : i32, i32
  }
  func.func @transform_5(%arg0: i32) -> (i32, i32) {
    %c0_i32 = arith.constant 0 : i32
    %c0_i32_0 = arith.constant 0 : i32
    %c0_i32_1 = arith.constant 0 : i32
    return %c0_i32, %c0_i32_0 : i32, i32
  }
  func.func @transform_6(%arg0: i32) -> (i32, i32) {
    %c0_i32 = arith.constant 0 : i32
    %c0_i32_0 = arith.constant 0 : i32
    return %arg0, %c0_i32 : i32, i32
  }
}

module attributes {stable_mosaic.version = 11 : i64} {
  func.func @_mlp_kernel(%arg0: i32, %arg1: memref<16x400xbf16, #tpu.memory_space<vmem>>, %arg2: memref<400x120xbf16, #tpu.memory_space<vmem>>, %arg3: memref<1x120xf32, #tpu.memory_space<vmem>>, %arg4: memref<120x84xbf16, #tpu.memory_space<vmem>>, %arg5: memref<1x84xf32, #tpu.memory_space<vmem>>, %arg6: memref<84x10xbf16, #tpu.memory_space<vmem>>, %arg7: memref<1x10xf32, #tpu.memory_space<vmem>>, %arg8: memref<16x10xf32, #tpu.memory_space<vmem>>) attributes {dimension_semantics = [#tpu.dimension_semantics<parallel>], iteration_bounds = array<i64: 1>, scalar_prefetch = 0 : i64, scratch_operands = 0 : i64, tpu.core_type = #tpu.core_type<tc>, window_params = [{transform_indices = @transform_0, window_bounds = array<i64: 16, 400>}, {pipeline_mode = #tpu.pipeline_mode<synchronous>, transform_indices = @transform_1, window_bounds = array<i64: 400, 120>}, {pipeline_mode = #tpu.pipeline_mode<synchronous>, transform_indices = @transform_2, window_bounds = array<i64: 1, 120>}, {pipeline_mode = #tpu.pipeline_mode<synchronous>, transform_indices = @transform_3, window_bounds = array<i64: 120, 84>}, {pipeline_mode = #tpu.pipeline_mode<synchronous>, transform_indices = @transform_4, window_bounds = array<i64: 1, 84>}, {pipeline_mode = #tpu.pipeline_mode<synchronous>, transform_indices = @transform_5, window_bounds = array<i64: 84, 10>}, {pipeline_mode = #tpu.pipeline_mode<synchronous>, transform_indices = @transform_6, window_bounds = array<i64: 1, 10>}, {transform_indices = @transform_7, window_bounds = array<i64: 16, 10>}]} {
    %c0 = arith.constant 0 : index
    %c0_0 = arith.constant 0 : index
    %0 = vector.load %arg1[%c0, %c0_0] : memref<16x400xbf16, #tpu.memory_space<vmem>>, vector<16x400xbf16>
    %c0_1 = arith.constant 0 : index
    %c0_2 = arith.constant 0 : index
    %1 = vector.load %arg2[%c0_1, %c0_2] : memref<400x120xbf16, #tpu.memory_space<vmem>>, vector<400x120xbf16>
    %cst = arith.constant dense<0.000000e+00> : vector<16x120xf32>
    %2 = tpu.matmul %0, %1, %cst {dimension_numbers = #tpu.dot_dimension_numbers<[1], [0], [0], [1], [0, 0, 1, 1], [], []>} : vector<16x400xbf16>, vector<400x120xbf16>, vector<16x120xf32> -> vector<16x120xf32>
    %c0_3 = arith.constant 0 : index
    %c0_4 = arith.constant 0 : index
    %3 = vector.load %arg3[%c0_3, %c0_4] : memref<1x120xf32, #tpu.memory_space<vmem>>, vector<1x120xf32>
    %4 = vector.broadcast %3 : vector<1x120xf32> to vector<16x120xf32>
    %5 = arith.addf %2, %4 : vector<16x120xf32>
    %cst_5 = arith.constant 0.000000e+00 : f32
    %6 = vector.broadcast %cst_5 : f32 to vector<16x120xf32>
    %7 = arith.maximumf %5, %6 : vector<16x120xf32>
    %8 = arith.truncf %7 : vector<16x120xf32> to vector<16x120xbf16>
    %c0_6 = arith.constant 0 : index
    %c0_7 = arith.constant 0 : index
    %9 = vector.load %arg4[%c0_6, %c0_7] : memref<120x84xbf16, #tpu.memory_space<vmem>>, vector<120x84xbf16>
    %cst_8 = arith.constant dense<0.000000e+00> : vector<16x84xf32>
    %10 = tpu.matmul %8, %9, %cst_8 {dimension_numbers = #tpu.dot_dimension_numbers<[1], [0], [0], [1], [0, 0, 1, 1], [], []>} : vector<16x120xbf16>, vector<120x84xbf16>, vector<16x84xf32> -> vector<16x84xf32>
    %c0_9 = arith.constant 0 : index
    %c0_10 = arith.constant 0 : index
    %11 = vector.load %arg5[%c0_9, %c0_10] : memref<1x84xf32, #tpu.memory_space<vmem>>, vector<1x84xf32>
    %12 = vector.broadcast %11 : vector<1x84xf32> to vector<16x84xf32>
    %13 = arith.addf %10, %12 : vector<16x84xf32>
    %cst_11 = arith.constant 0.000000e+00 : f32
    %14 = vector.broadcast %cst_11 : f32 to vector<16x84xf32>
    %15 = arith.maximumf %13, %14 : vector<16x84xf32>
    %16 = arith.truncf %15 : vector<16x84xf32> to vector<16x84xbf16>
    %c0_12 = arith.constant 0 : index
    %c0_13 = arith.constant 0 : index
    %17 = vector.load %arg6[%c0_12, %c0_13] : memref<84x10xbf16, #tpu.memory_space<vmem>>, vector<84x10xbf16>
    %cst_14 = arith.constant dense<0.000000e+00> : vector<16x10xf32>
    %18 = tpu.matmul %16, %17, %cst_14 {dimension_numbers = #tpu.dot_dimension_numbers<[1], [0], [0], [1], [0, 0, 1, 1], [], []>} : vector<16x84xbf16>, vector<84x10xbf16>, vector<16x10xf32> -> vector<16x10xf32>
    %c0_15 = arith.constant 0 : index
    %c0_16 = arith.constant 0 : index
    %19 = vector.load %arg7[%c0_15, %c0_16] : memref<1x10xf32, #tpu.memory_space<vmem>>, vector<1x10xf32>
    %20 = vector.broadcast %19 : vector<1x10xf32> to vector<16x10xf32>
    %21 = arith.addf %18, %20 : vector<16x10xf32>
    %c0_17 = arith.constant 0 : index
    %c0_18 = arith.constant 0 : index
    %22 = vector.load %arg8[%c0_17, %c0_18] : memref<16x10xf32, #tpu.memory_space<vmem>>, vector<16x10xf32>
    tpu.vector_store %arg8[%c0_17, %c0_18], %21 {strides = array<i32>} : memref<16x10xf32, #tpu.memory_space<vmem>>, vector<16x10xf32>,
    return
  }
  func.func @transform_0(%arg0: i32) -> (i32, i32) {
    %c0_i32 = arith.constant 0 : i32
    %c0_i32_0 = arith.constant 0 : i32
    return %arg0, %c0_i32 : i32, i32
  }
  func.func @transform_1(%arg0: i32) -> (i32, i32) {
    %c0_i32 = arith.constant 0 : i32
    %c0_i32_0 = arith.constant 0 : i32
    %c0_i32_1 = arith.constant 0 : i32
    return %c0_i32, %c0_i32_0 : i32, i32
  }
  func.func @transform_2(%arg0: i32) -> (i32, i32) {
    %c0_i32 = arith.constant 0 : i32
    %c0_i32_0 = arith.constant 0 : i32
    %c0_i32_1 = arith.constant 0 : i32
    return %c0_i32, %c0_i32_0 : i32, i32
  }
  func.func @transform_3(%arg0: i32) -> (i32, i32) {
    %c0_i32 = arith.constant 0 : i32
    %c0_i32_0 = arith.constant 0 : i32
    %c0_i32_1 = arith.constant 0 : i32
    return %c0_i32, %c0_i32_0 : i32, i32
  }
  func.func @transform_4(%arg0: i32) -> (i32, i32) {
    %c0_i32 = arith.constant 0 : i32
    %c0_i32_0 = arith.constant 0 : i32
    %c0_i32_1 = arith.constant 0 : i32
    return %c0_i32, %c0_i32_0 : i32, i32
  }
  func.func @transform_5(%arg0: i32) -> (i32, i32) {
    %c0_i32 = arith.constant 0 : i32
    %c0_i32_0 = arith.constant 0 : i32
    %c0_i32_1 = arith.constant 0 : i32
    return %c0_i32, %c0_i32_0 : i32, i32
  }
  func.func @transform_6(%arg0: i32) -> (i32, i32) {
    %c0_i32 = arith.constant 0 : i32
    %c0_i32_0 = arith.constant 0 : i32
    %c0_i32_1 = arith.constant 0 : i32
    return %c0_i32, %c0_i32_0 : i32, i32
  }
  func.func @transform_7(%arg0: i32) -> (i32, i32) {
    %c0_i32 = arith.constant 0 : i32
    %c0_i32_0 = arith.constant 0 : i32
    return %arg0, %c0_i32 : i32, i32
  }
}

</mosaic_0001>

<llo_original>
// kernel: net_forward.3
$region0: #{net_forward.3}
  #allocation0 [shape = 'u32[]', space=smem, size = 0x4, offset = 0x4, fixed_abs, tag = 'smem constant byte address 0x4 - core index']
  #allocation1 [shape = 'u32[72,128]{1,0:T(1,128)}', space=vmem, size = 0x9000, scoped, tag = 'internal scratch']
  %s0 = inlined_call_operand.vmem [shape: bf16[400,75], index: 0, kind: input, shape index: {}]
  %s1 = inlined_call_operand.vmem [shape: bf16[400,75], index: 1, kind: input, shape index: {}]
  %s2 = inlined_call_operand.vmem [shape: bf16[400,75], index: 2, kind: input, shape index: {}]
  %s3 = inlined_call_operand.vmem [shape: bf16[400,75], index: 3, kind: input, shape index: {}]
  %s4 = inlined_call_operand.vmem [shape: bf16[75,20], index: 4, kind: input, shape index: {}]
  %s5 = inlined_call_operand.vmem [shape: f32[1,20], index: 5, kind: input, shape index: {}]
  %s6 = inlined_call_operand.vmem [shape: bf16[400,20], index: 6, kind: output, shape index: {}]
  %s7 = sld [smem:[#allocation0]]
  $region34: #{net_forward.3} parent=0
    _
  %s9 = ssub.s32 1, %s7
  %s10 = scalar_select 0, %s9, %s7
  // Predicated region
  $region2: #{net_forward.3} parent=0 // pred_check
    _
  $region3: #{net_forward.3} parent=0 // pred_check_branch
    %12 = sbr.rel (0) target = $region5
  $region4: #{net_forward.3} parent=0 // pred_region
    _
  $region5: #{net_forward.3} parent=0 // pred_fallthru
    _
  // Predicated region
  $region6: #{net_forward.3} parent=0 // pred_check
    _
  $region7: #{net_forward.3} parent=0 // pred_check_branch
    %14 = sbr.rel (0) target = $region9
  $region8: #{net_forward.3} parent=0 // pred_region
    _
  $region9: #{net_forward.3} parent=0 // pred_fallthru
    _
  // Predicated region
  $region10: #{net_forward.3} parent=0 // pred_check
    _
  $region11: #{net_forward.3} parent=0 // pred_check_branch
    %16 = sbr.rel (0) target = $region13
  $region12: #{net_forward.3} parent=0 // pred_region
    _
  $region13: #{net_forward.3} parent=0 // pred_fallthru
    _
  // Predicated region
  $region14: #{net_forward.3} parent=0 // pred_check
    _
  $region15: #{net_forward.3} parent=0 // pred_check_branch
    %18 = sbr.rel (0) target = $region17
  $region16: #{net_forward.3} parent=0 // pred_region
    _
  $region17: #{net_forward.3} parent=0 // pred_fallthru
    _
  // Predicated region
  $region18: #{net_forward.3} parent=0 // pred_check
    _
  $region19: #{net_forward.3} parent=0 // pred_check_branch
    %20 = sbr.rel (0) target = $region21
  $region20: #{net_forward.3} parent=0 // pred_region
    _
  $region21: #{net_forward.3} parent=0 // pred_fallthru
    _
  // Predicated region
  $region22: #{net_forward.3} parent=0 // pred_check
    _
  $region23: #{net_forward.3} parent=0 // pred_check_branch
    %22 = sbr.rel (0) target = $region25
  $region24: #{net_forward.3} parent=0 // pred_region
    _
  $region25: #{net_forward.3} parent=0 // pred_fallthru
    _
  %v24 = vld [vmem:[%s4] sm:$0xf]
  %v25 = vld [vmem:[%s4 + $0x4] sm:$0xf]
  %v26 = vld [vmem:[%s4 + $0x8] sm:$0xf]
  %v27 = vld [vmem:[%s4 + $0xc] sm:$0xf]
  %v28 = vld [vmem:[%s4 + $0x10] sm:$0xf]
  %v29 = vld [vmem:[%s4 + $0x14] sm:$0xf]
  %v30 = vld [vmem:[%s4 + $0x18] sm:$0xf]
  %v31 = vld [vmem:[%s4 + $0x1c] sm:$0xf]
  %v32 = vld [vmem:[%s4 + $0x20] sm:$0xf]
  %v33 = vld [vmem:[%s4 + $0x24] sm:$0x3]
  %v34 = vld [vmem:[%s5] sm:$0x1]
  %v35 = vld [vmem:[%s0] sm:$0xf]
  %v36 = vld [vmem:[%s0 + $0x4] sm:$0xf]
  %v37 = vld [vmem:[%s0 + $0x8] sm:$0xf]
  %v38 = vld [vmem:[%s0 + $0xc] sm:$0xf]
  %v39 = vld [vmem:[%s0 + $0x10] sm:$0xf]
  %v40 = vld [vmem:[%s0 + $0x14] sm:$0xf]
  %v41 = vld [vmem:[%s0 + $0x18] sm:$0xf]
  %v42 = vld [vmem:[%s0 + $0x1c] sm:$0xf]
  %v43 = vld [vmem:[%s0 + $0x20] sm:$0xf]
  %v44 = vld [vmem:[%s0 + $0x24] sm:$0xf]
  %v45 = vld [vmem:[%s0 + $0x28] sm:$0xf]
  %v46 = vld [vmem:[%s0 + $0x2c] sm:$0xf]
  %v47 = vld [vmem:[%s0 + $0x30] sm:$0xf]
  %v48 = vld [vmem:[%s0 + $0x34] sm:$0xf]
  %v49 = vld [vmem:[%s0 + $0x38] sm:$0xf]
  %v50 = vld [vmem:[%s0 + $0x3c] sm:$0xf]
  %v51 = vld [vmem:[%s0 + $0x40] sm:$0xf]
  %v52 = vld [vmem:[%s0 + $0x44] sm:$0xf]
  %v53 = vld [vmem:[%s0 + $0x48] sm:$0xf]
  %v54 = vld [vmem:[%s0 + $0x4c] sm:$0xf]
  %v55 = vld [vmem:[%s0 + $0x50] sm:$0xf]
  %v56 = vld [vmem:[%s0 + $0x54] sm:$0xf]
  %v57 = vld [vmem:[%s0 + $0x58] sm:$0xf]
  %v58 = vld [vmem:[%s0 + $0x5c] sm:$0xf]
  %v59 = vld [vmem:[%s0 + $0x60] sm:$0xf]
  %v60 = vld [vmem:[%s0 + $0x64] sm:$0xf]
  %v61 = vld [vmem:[%s0 + $0x68] sm:$0xf]
  %v62 = vld [vmem:[%s0 + $0x6c] sm:$0xf]
  %v63 = vld [vmem:[%s0 + $0x70] sm:$0xf]
  %v64 = vld [vmem:[%s0 + $0x74] sm:$0xf]
  %v65 = vld [vmem:[%s0 + $0x78] sm:$0xf]
  %v66 = vld [vmem:[%s0 + $0x7c] sm:$0xf]
  %v67 = vld [vmem:[%s0 + $0x80] sm:$0xf]
  %v68 = vld [vmem:[%s0 + $0x84] sm:$0xf]
  %v69 = vld [vmem:[%s0 + $0x88] sm:$0xf]
  %v70 = vld [vmem:[%s0 + $0x8c] sm:$0xf]
  %v71 = vld [vmem:[%s0 + $0x90] sm:$0xf]
  %v72 = vld [vmem:[%s0 + $0x94] sm:$0xf]
  %v73 = vld [vmem:[%s0 + $0x98] sm:$0xf]
  %v74 = vld [vmem:[%s0 + $0x9c] sm:$0xf]
  %v75 = vld [vmem:[%s0 + $0xa0] sm:$0xf]
  %v76 = vld [vmem:[%s0 + $0xa4] sm:$0xf]
  %v77 = vld [vmem:[%s0 + $0xa8] sm:$0xf]
  %v78 = vld [vmem:[%s0 + $0xac] sm:$0xf]
  %v79 = vld [vmem:[%s0 + $0xb0] sm:$0xf]
  %v80 = vld [vmem:[%s0 + $0xb4] sm:$0xf]
  %v81 = vld [vmem:[%s0 + $0xb8] sm:$0xf]
  %v82 = vld [vmem:[%s0 + $0xbc] sm:$0xf]
  %v83 = vld [vmem:[%s0 + $0xc0] sm:$0xf]
  %v84 = vld [vmem:[%s0 + $0xc4] sm:$0xf]
  %v86 = vperm.slane %v34, 0
  %v138 = vunpack.c.l.b16 %v35
  %v139 = vunpack.c.l.b16 %v36
  %v140 = vunpack.c.l.b16 %v37
  %v141 = vunpack.c.l.b16 %v38
  %v142 = vunpack.c.l.b16 %v39
  %v143 = vunpack.c.l.b16 %v40
  %v144 = vunpack.c.l.b16 %v41
  %v145 = vunpack.c.l.b16 %v42
  %v146 = vunpack.c.l.b16 %v43
  %v147 = vunpack.c.l.b16 %v44
  %v148 = vunpack.c.l.b16 %v45
  %v149 = vunpack.c.l.b16 %v46
  %v150 = vunpack.c.l.b16 %v47
  %v151 = vunpack.c.l.b16 %v48
  %v152 = vunpack.c.l.b16 %v49
  %v153 = vunpack.c.l.b16 %v50
  %v154 = vunpack.c.l.b16 %v51
  %v155 = vunpack.c.l.b16 %v52
  %v156 = vunpack.c.l.b16 %v53
  %v157 = vunpack.c.l.b16 %v54
  %v158 = vunpack.c.l.b16 %v55
  %v159 = vunpack.c.l.b16 %v56
  %v160 = vunpack.c.l.b16 %v57
  %v161 = vunpack.c.l.b16 %v58
  %v162 = vunpack.c.l.b16 %v59
  %v163 = vunpack.c.l.b16 %v60
  %v164 = vunpack.c.l.b16 %v61
  %v165 = vunpack.c.l.b16 %v62
  %v166 = vunpack.c.l.b16 %v63
  %v167 = vunpack.c.l.b16 %v64
  %v168 = vunpack.c.l.b16 %v65
  %v169 = vunpack.c.l.b16 %v66
  %v170 = vunpack.c.l.b16 %v67
  %v171 = vunpack.c.l.b16 %v68
  %v172 = vunpack.c.l.b16 %v69
  %v173 = vunpack.c.l.b16 %v70
  %v174 = vunpack.c.l.b16 %v71
  %v175 = vunpack.c.l.b16 %v72
  %v176 = vunpack.c.l.b16 %v73
  %v177 = vunpack.c.l.b16 %v74
  %v178 = vunpack.c.l.b16 %v75
  %v179 = vunpack.c.l.b16 %v76
  %v180 = vunpack.c.l.b16 %v77
  %v181 = vunpack.c.l.b16 %v78
  %v182 = vunpack.c.l.b16 %v79
  %v183 = vunpack.c.l.b16 %v80
  %v184 = vunpack.c.l.b16 %v81
  %v185 = vunpack.c.l.b16 %v82
  %v186 = vunpack.c.l.b16 %v83
  %v187 = vunpack.c.l.b16 %v84
  %v188 = vpack.c.b16 %v139, %v138
  %v189 = vpack.c.b16 %v141, %v140
  %v190 = vpack.c.b16 %v143, %v142
  %v191 = vpack.c.b16 %v145, %v144
  %v192 = vpack.c.b16 %v147, %v146
  %v193 = vpack.c.b16 %v149, %v148
  %v194 = vpack.c.b16 %v151, %v150
  %v195 = vpack.c.b16 %v153, %v152
  %v196 = vpack.c.b16 %v155, %v154
  %v197 = vpack.c.b16 %v157, %v156
  %v198 = vpack.c.b16 %v159, %v158
  %v199 = vpack.c.b16 %v161, %v160
  %v200 = vpack.c.b16 %v163, %v162
  %v201 = vpack.c.b16 %v165, %v164
  %v202 = vpack.c.b16 %v167, %v166
  %v203 = vpack.c.b16 %v169, %v168
  %v204 = vpack.c.b16 %v171, %v170
  %v205 = vpack.c.b16 %v173, %v172
  %v206 = vpack.c.b16 %v175, %v174
  %v207 = vpack.c.b16 %v177, %v176
  %v208 = vpack.c.b16 %v179, %v178
  %v209 = vpack.c.b16 %v181, %v180
  %v210 = vpack.c.b16 %v183, %v182
  %v211 = vpack.c.b16 %v185, %v184
  %v212 = vpack.c.b16 %v187, %v186
  %v223 = vunpack.c.l.b16 %v24
  %v224 = vunpack.c.l.b16 %v25
  %v225 = vunpack.c.l.b16 %v26
  %v226 = vunpack.c.l.b16 %v27
  %v227 = vunpack.c.l.b16 %v28
  %v228 = vunpack.c.l.b16 %v29
  %v229 = vunpack.c.l.b16 %v30
  %v230 = vunpack.c.l.b16 %v31
  %v231 = vunpack.c.l.b16 %v32
  %v232 = vunpack.c.l.b16 %v33
  %v233 = vpack.c.b16 %v224, %v223
  %v234 = vpack.c.b16 %v226, %v225
  %v235 = vpack.c.b16 %v228, %v227
  %v236 = vpack.c.b16 %v230, %v229
  %v237 = vpack.c.b16 %v232, %v231
  %vm242 = vcmask 613376
  %v244 = vsel %vm242, %v188, 0
  %v247 = vsel %vm242, %v189, 0
  %v250 = vsel %vm242, %v190, 0
  %v253 = vsel %vm242, %v191, 0
  %v256 = vsel %vm242, %v192, 0
  %v259 = vsel %vm242, %v193, 0
  %v262 = vsel %vm242, %v194, 0
  %v265 = vsel %vm242, %v195, 0
  %v268 = vsel %vm242, %v196, 0
  %v271 = vsel %vm242, %v197, 0
  %v274 = vsel %vm242, %v198, 0
  %v277 = vsel %vm242, %v199, 0
  %v280 = vsel %vm242, %v200, 0
  %v283 = vsel %vm242, %v201, 0
  %v286 = vsel %vm242, %v202, 0
  %v289 = vsel %vm242, %v203, 0
  %v292 = vsel %vm242, %v204, 0
  %v295 = vsel %vm242, %v205, 0
  %v298 = vsel %vm242, %v206, 0
  %v301 = vsel %vm242, %v207, 0
  %v304 = vsel %vm242, %v208, 0
  %v307 = vsel %vm242, %v209, 0
  %v310 = vsel %vm242, %v210, 0
  %v313 = vsel %vm242, %v211, 0
  %v316 = vsel %vm242, %v212, 0
  %vm318 = vcmask 1044480
  %vm319 = vcmask 1045504
  %v320 = vsel %vm318, 4294967295, 65535
  %v321 = vsel %vm319, %v320, 0
  %v323 = vand.u32 %v237, %v321
  %325 = vmatpush.bf16.msra.mxu0 0
  %326 = vmatpush.bf16.msra.mxu0 0
  %327 = vmatpush.bf16.msra.mxu0 0
  %328 = vmatpush.bf16.msra.mxu0 %v323
  %329 = vmatpush.bf16.msra.mxu0 %v236
  %330 = vmatpush.bf16.msra.mxu0 %v235
  %331 = vmatpush.bf16.msra.mxu0 %v234
  %332 = vmatpush.bf16.msra.mxu0 %v233
  %333 = vmatmul.bf16.gmra.mxu0 %v244
  %v334 = vpop.f32.mrf.mxu0
  %v335 = vadd.f32 %v86, %v334
  %v336 = vpop.f32.mrf.mxu0
  %v337 = vadd.f32 %v86, %v336
  %338 = vmatmul.bf16.gmra.mxu0 %v247
  %v339 = vpop.f32.mrf.mxu0
  %v340 = vadd.f32 %v86, %v339
  %v341 = vpop.f32.mrf.mxu0
  %v342 = vadd.f32 %v86, %v341
  %343 = vmatmul.bf16.gmra.mxu0 %v250
  %v344 = vpop.f32.mrf.mxu0
  %v345 = vadd.f32 %v86, %v344
  %v346 = vpop.f32.mrf.mxu0
  %v347 = vadd.f32 %v86, %v346
  %348 = vmatmul.bf16.gmra.mxu0 %v253
  %v349 = vpop.f32.mrf.mxu0
  %v350 = vadd.f32 %v86, %v349
  %v351 = vpop.f32.mrf.mxu0
  %v352 = vadd.f32 %v86, %v351
  %353 = vmatmul.bf16.gmra.mxu0 %v256
  %v354 = vpop.f32.mrf.mxu0
  %v355 = vadd.f32 %v86, %v354
  %v356 = vpop.f32.mrf.mxu0
  %v357 = vadd.f32 %v86, %v356
  %358 = vmatmul.bf16.gmra.mxu0 %v259
  %v359 = vpop.f32.mrf.mxu0
  %v360 = vadd.f32 %v86, %v359
  %v361 = vpop.f32.mrf.mxu0
  %v362 = vadd.f32 %v86, %v361
  %363 = vmatmul.bf16.gmra.mxu0 %v262
  %v364 = vpop.f32.mrf.mxu0
  %v365 = vadd.f32 %v86, %v364
  %v366 = vpop.f32.mrf.mxu0
  %v367 = vadd.f32 %v86, %v366
  %368 = vmatmul.bf16.gmra.mxu0 %v265
  %v369 = vpop.f32.mrf.mxu0
  %v370 = vadd.f32 %v86, %v369
  %v371 = vpop.f32.mrf.mxu0
  %v372 = vadd.f32 %v86, %v371
  %373 = vmatmul.bf16.gmra.mxu0 %v268
  %v374 = vpop.f32.mrf.mxu0
  %v375 = vadd.f32 %v86, %v374
  %v376 = vpop.f32.mrf.mxu0
  %v377 = vadd.f32 %v86, %v376
  %378 = vmatmul.bf16.gmra.mxu0 %v271
  %v379 = vpop.f32.mrf.mxu0
  %v380 = vadd.f32 %v86, %v379
  %v381 = vpop.f32.mrf.mxu0
  %v382 = vadd.f32 %v86, %v381
  %383 = vmatmul.bf16.gmra.mxu0 %v274
  %v384 = vpop.f32.mrf.mxu0
  %v385 = vadd.f32 %v86, %v384
  %v386 = vpop.f32.mrf.mxu0
  %v387 = vadd.f32 %v86, %v386
  %388 = vmatmul.bf16.gmra.mxu0 %v277
  %v389 = vpop.f32.mrf.mxu0
  %v390 = vadd.f32 %v86, %v389
  %v391 = vpop.f32.mrf.mxu0
  %v392 = vadd.f32 %v86, %v391
  %393 = vmatmul.bf16.gmra.mxu0 %v280
  %v394 = vpop.f32.mrf.mxu0
  %v395 = vadd.f32 %v86, %v394
  %v396 = vpop.f32.mrf.mxu0
  %v397 = vadd.f32 %v86, %v396
  %398 = vmatmul.bf16.gmra.mxu0 %v283
  %v399 = vpop.f32.mrf.mxu0
  %v400 = vadd.f32 %v86, %v399
  %v401 = vpop.f32.mrf.mxu0
  %v402 = vadd.f32 %v86, %v401
  %403 = vmatmul.bf16.gmra.mxu0 %v286
  %v404 = vpop.f32.mrf.mxu0
  %v405 = vadd.f32 %v86, %v404
  %v406 = vpop.f32.mrf.mxu0
  %v407 = vadd.f32 %v86, %v406
  %408 = vmatmul.bf16.gmra.mxu0 %v289
  %v409 = vpop.f32.mrf.mxu0
  %v410 = vadd.f32 %v86, %v409
  %v411 = vpop.f32.mrf.mxu0
  %v412 = vadd.f32 %v86, %v411
  %413 = vmatmul.bf16.gmra.mxu0 %v292
  %v414 = vpop.f32.mrf.mxu0
  %v415 = vadd.f32 %v86, %v414
  %v416 = vpop.f32.mrf.mxu0
  %v417 = vadd.f32 %v86, %v416
  %418 = vmatmul.bf16.gmra.mxu0 %v295
  %v419 = vpop.f32.mrf.mxu0
  %v420 = vadd.f32 %v86, %v419
  %v421 = vpop.f32.mrf.mxu0
  %v422 = vadd.f32 %v86, %v421
  %423 = vmatmul.bf16.gmra.mxu0 %v298
  %v424 = vpop.f32.mrf.mxu0
  %v425 = vadd.f32 %v86, %v424
  %v426 = vpop.f32.mrf.mxu0
  %v427 = vadd.f32 %v86, %v426
  %428 = vmatmul.bf16.gmra.mxu0 %v301
  %v429 = vpop.f32.mrf.mxu0
  %v430 = vadd.f32 %v86, %v429
  %v431 = vpop.f32.mrf.mxu0
  %v432 = vadd.f32 %v86, %v431
  %433 = vmatmul.bf16.gmra.mxu0 %v304
  %v434 = vpop.f32.mrf.mxu0
  %v435 = vadd.f32 %v86, %v434
  %v436 = vpop.f32.mrf.mxu0
  %v437 = vadd.f32 %v86, %v436
  %438 = vmatmul.bf16.gmra.mxu0 %v307
  %v439 = vpop.f32.mrf.mxu0
  %v440 = vadd.f32 %v86, %v439
  %v441 = vpop.f32.mrf.mxu0
  %v442 = vadd.f32 %v86, %v441
  %443 = vmatmul.bf16.gmra.mxu0 %v310
  %v444 = vpop.f32.mrf.mxu0
  %v445 = vadd.f32 %v86, %v444
  %v446 = vpop.f32.mrf.mxu0
  %v447 = vadd.f32 %v86, %v446
  %448 = vmatmul.bf16.gmra.mxu0 %v313
  %v449 = vpop.f32.mrf.mxu0
  %v450 = vadd.f32 %v86, %v449
  %v451 = vpop.f32.mrf.mxu0
  %v452 = vadd.f32 %v86, %v451
  %453 = vmatmul.bf16.gmra.mxu0 %v316
  %v454 = vpop.f32.mrf.mxu0
  %v455 = vadd.f32 %v86, %v454
  %v456 = vpop.f32.mrf.mxu0
  %v457 = vadd.f32 %v86, %v456
  %458 = vdwg.mxu0
  %v459 = vmax.f32 %v335, 0.0
  %v460 = vmax.f32 %v337, 0.0
  %v461 = vmax.f32 %v340, 0.0
  %v462 = vmax.f32 %v342, 0.0
  %v463 = vmax.f32 %v345, 0.0
  %v464 = vmax.f32 %v347, 0.0
  %v465 = vmax.f32 %v350, 0.0
  %v466 = vmax.f32 %v352, 0.0
  %v467 = vmax.f32 %v355, 0.0
  %v468 = vmax.f32 %v357, 0.0
  %v469 = vmax.f32 %v360, 0.0
  %v470 = vmax.f32 %v362, 0.0
  %v471 = vmax.f32 %v365, 0.0
  %v472 = vmax.f32 %v367, 0.0
  %v473 = vmax.f32 %v370, 0.0
  %v474 = vmax.f32 %v372, 0.0
  %v475 = vmax.f32 %v375, 0.0
  %v476 = vmax.f32 %v377, 0.0
  %v477 = vmax.f32 %v380, 0.0
  %v478 = vmax.f32 %v382, 0.0
  %v479 = vmax.f32 %v385, 0.0
  %v480 = vmax.f32 %v387, 0.0
  %v481 = vmax.f32 %v390, 0.0
  %v482 = vmax.f32 %v392, 0.0
  %v483 = vmax.f32 %v395, 0.0
  %v484 = vmax.f32 %v397, 0.0
  %v485 = vmax.f32 %v400, 0.0
  %v486 = vmax.f32 %v402, 0.0
  %v487 = vmax.f32 %v405, 0.0
  %v488 = vmax.f32 %v407, 0.0
  %v489 = vmax.f32 %v410, 0.0
  %v490 = vmax.f32 %v412, 0.0
  %v491 = vmax.f32 %v415, 0.0
  %v492 = vmax.f32 %v417, 0.0
  %v493 = vmax.f32 %v420, 0.0
  %v494 = vmax.f32 %v422, 0.0
  %v495 = vmax.f32 %v425, 0.0
  %v496 = vmax.f32 %v427, 0.0
  %v497 = vmax.f32 %v430, 0.0
  %v498 = vmax.f32 %v432, 0.0
  %v499 = vmax.f32 %v435, 0.0
  %v500 = vmax.f32 %v437, 0.0
  %v501 = vmax.f32 %v440, 0.0
  %v502 = vmax.f32 %v442, 0.0
  %v503 = vmax.f32 %v445, 0.0
  %v504 = vmax.f32 %v447, 0.0
  %v505 = vmax.f32 %v450, 0.0
  %v506 = vmax.f32 %v452, 0.0
  %v507 = vmax.f32 %v455, 0.0
  %v508 = vmax.f32 %v457, 0.0
  %v509 = vld [vmem:[%s1] sm:$0xf]
  %v510 = vld [vmem:[%s1 + $0x4] sm:$0xf]
  %v511 = vld [vmem:[%s1 + $0x8] sm:$0xf]
  %v512 = vld [vmem:[%s1 + $0xc] sm:$0xf]
  %v513 = vld [vmem:[%s1 + $0x10] sm:$0xf]
  %v514 = vld [vmem:[%s1 + $0x14] sm:$0xf]
  %v515 = vld [vmem:[%s1 + $0x18] sm:$0xf]
  %v516 = vld [vmem:[%s1 + $0x1c] sm:$0xf]
  %v517 = vld [vmem:[%s1 + $0x20] sm:$0xf]
  %v518 = vld [vmem:[%s1 + $0x24] sm:$0xf]
  %v519 = vld [vmem:[%s1 + $0x28] sm:$0xf]
  %v520 = vld [vmem:[%s1 + $0x2c] sm:$0xf]
  %v521 = vld [vmem:[%s1 + $0x30] sm:$0xf]
  %v522 = vld [vmem:[%s1 + $0x34] sm:$0xf]
  %v523 = vld [vmem:[%s1 + $0x38] sm:$0xf]
  %v524 = vld [vmem:[%s1 + $0x3c] sm:$0xf]
  %v525 = vld [vmem:[%s1 + $0x40] sm:$0xf]
  %v526 = vld [vmem:[%s1 + $0x44] sm:$0xf]
  %v527 = vld [vmem:[%s1 + $0x48] sm:$0xf]
  %v528 = vld [vmem:[%s1 + $0x4c] sm:$0xf]
  %v529 = vld [vmem:[%s1 + $0x50] sm:$0xf]
  %v530 = vld [vmem:[%s1 + $0x54] sm:$0xf]
  %v531 = vld [vmem:[%s1 + $0x58] sm:$0xf]
  %v532 = vld [vmem:[%s1 + $0x5c] sm:$0xf]
  %v533 = vld [vmem:[%s1 + $0x60] sm:$0xf]
  %v534 = vld [vmem:[%s1 + $0x64] sm:$0xf]
  %v535 = vld [vmem:[%s1 + $0x68] sm:$0xf]
  %v536 = vld [vmem:[%s1 + $0x6c] sm:$0xf]
  %v537 = vld [vmem:[%s1 + $0x70] sm:$0xf]
  %v538 = vld [vmem:[%s1 + $0x74] sm:$0xf]
  %v539 = vld [vmem:[%s1 + $0x78] sm:$0xf]
  %v540 = vld [vmem:[%s1 + $0x7c] sm:$0xf]
  %v541 = vld [vmem:[%s1 + $0x80] sm:$0xf]
  %v542 = vld [vmem:[%s1 + $0x84] sm:$0xf]
  %v543 = vld [vmem:[%s1 + $0x88] sm:$0xf]
  %v544 = vld [vmem:[%s1 + $0x8c] sm:$0xf]
  %v545 = vld [vmem:[%s1 + $0x90] sm:$0xf]
  %v546 = vld [vmem:[%s1 + $0x94] sm:$0xf]
  %v547 = vld [vmem:[%s1 + $0x98] sm:$0xf]
  %v548 = vld [vmem:[%s1 + $0x9c] sm:$0xf]
  %v549 = vld [vmem:[%s1 + $0xa0] sm:$0xf]
  %v550 = vld [vmem:[%s1 + $0xa4] sm:$0xf]
  %v551 = vld [vmem:[%s1 + $0xa8] sm:$0xf]
  %v552 = vld [vmem:[%s1 + $0xac] sm:$0xf]
  %v553 = vld [vmem:[%s1 + $0xb0] sm:$0xf]
  %v554 = vld [vmem:[%s1 + $0xb4] sm:$0xf]
  %v555 = vld [vmem:[%s1 + $0xb8] sm:$0xf]
  %v556 = vld [vmem:[%s1 + $0xbc] sm:$0xf]
  %v557 = vld [vmem:[%s1 + $0xc0] sm:$0xf]
  %v558 = vld [vmem:[%s1 + $0xc4] sm:$0xf]
  %v609 = vunpack.c.l.b16 %v509
  %v610 = vunpack.c.l.b16 %v510
  %v611 = vunpack.c.l.b16 %v511
  %v612 = vunpack.c.l.b16 %v512
  %v613 = vunpack.c.l.b16 %v513
  %v614 = vunpack.c.l.b16 %v514
  %v615 = vunpack.c.l.b16 %v515
  %v616 = vunpack.c.l.b16 %v516
  %v617 = vunpack.c.l.b16 %v517
  %v618 = vunpack.c.l.b16 %v518
  %v619 = vunpack.c.l.b16 %v519
  %v620 = vunpack.c.l.b16 %v520
  %v621 = vunpack.c.l.b16 %v521
  %v622 = vunpack.c.l.b16 %v522
  %v623 = vunpack.c.l.b16 %v523
  %v624 = vunpack.c.l.b16 %v524
  %v625 = vunpack.c.l.b16 %v525
  %v626 = vunpack.c.l.b16 %v526
  %v627 = vunpack.c.l.b16 %v527
  %v628 = vunpack.c.l.b16 %v528
  %v629 = vunpack.c.l.b16 %v529
  %v630 = vunpack.c.l.b16 %v530
  %v631 = vunpack.c.l.b16 %v531
  %v632 = vunpack.c.l.b16 %v532
  %v633 = vunpack.c.l.b16 %v533
  %v634 = vunpack.c.l.b16 %v534
  %v635 = vunpack.c.l.b16 %v535
  %v636 = vunpack.c.l.b16 %v536
  %v637 = vunpack.c.l.b16 %v537
  %v638 = vunpack.c.l.b16 %v538
  %v639 = vunpack.c.l.b16 %v539
  %v640 = vunpack.c.l.b16 %v540
  %v641 = vunpack.c.l.b16 %v541
  %v642 = vunpack.c.l.b16 %v542
  %v643 = vunpack.c.l.b16 %v543
  %v644 = vunpack.c.l.b16 %v544
  %v645 = vunpack.c.l.b16 %v545
  %v646 = vunpack.c.l.b16 %v546
  %v647 = vunpack.c.l.b16 %v547
  %v648 = vunpack.c.l.b16 %v548
  %v649 = vunpack.c.l.b16 %v549
  %v650 = vunpack.c.l.b16 %v550
  %v651 = vunpack.c.l.b16 %v551
  %v652 = vunpack.c.l.b16 %v552
  %v653 = vunpack.c.l.b16 %v553
  %v654 = vunpack.c.l.b16 %v554
  %v655 = vunpack.c.l.b16 %v555
  %v656 = vunpack.c.l.b16 %v556
  %v657 = vunpack.c.l.b16 %v557
  %v658 = vunpack.c.l.b16 %v558
  %v659 = vpack.c.b16 %v610, %v609
  %v660 = vpack.c.b16 %v612, %v611
  %v661 = vpack.c.b16 %v614, %v613
  %v662 = vpack.c.b16 %v616, %v615
  %v663 = vpack.c.b16 %v618, %v617
  %v664 = vpack.c.b16 %v620, %v619
  %v665 = vpack.c.b16 %v622, %v621
  %v666 = vpack.c.b16 %v624, %v623
  %v667 = vpack.c.b16 %v626, %v625
  %v668 = vpack.c.b16 %v628, %v627
  %v669 = vpack.c.b16 %v630, %v629
  %v670 = vpack.c.b16 %v632, %v631
  %v671 = vpack.c.b16 %v634, %v633
  %v672 = vpack.c.b16 %v636, %v635
  %v673 = vpack.c.b16 %v638, %v637
  %v674 = vpack.c.b16 %v640, %v639
  %v675 = vpack.c.b16 %v642, %v641
  %v676 = vpack.c.b16 %v644, %v643
  %v677 = vpack.c.b16 %v646, %v645
  %v678 = vpack.c.b16 %v648, %v647
  %v679 = vpack.c.b16 %v650, %v649
  %v680 = vpack.c.b16 %v652, %v651
  %v681 = vpack.c.b16 %v654, %v653
  %v682 = vpack.c.b16 %v656, %v655
  %v683 = vpack.c.b16 %v658, %v657
  %v685 = vsel %vm242, %v659, 0
  %v688 = vsel %vm242, %v660, 0
  %v691 = vsel %vm242, %v661, 0
  %v694 = vsel %vm242, %v662, 0
  %v697 = vsel %vm242, %v663, 0
  %v700 = vsel %vm242, %v664, 0
  %v703 = vsel %vm242, %v665, 0
  %v706 = vsel %vm242, %v666, 0
  %v709 = vsel %vm242, %v667, 0
  %v712 = vsel %vm242, %v668, 0
  %v715 = vsel %vm242, %v669, 0
  %v718 = vsel %vm242, %v670, 0
  %v721 = vsel %vm242, %v671, 0
  %v724 = vsel %vm242, %v672, 0
  %v727 = vsel %vm242, %v673, 0
  %v730 = vsel %vm242, %v674, 0
  %v733 = vsel %vm242, %v675, 0
  %v736 = vsel %vm242, %v676, 0
  %v739 = vsel %vm242, %v677, 0
  %v742 = vsel %vm242, %v678, 0
  %v745 = vsel %vm242, %v679, 0
  %v748 = vsel %vm242, %v680, 0
  %v751 = vsel %vm242, %v681, 0
  %v754 = vsel %vm242, %v682, 0
  %v757 = vsel %vm242, %v683, 0
  %759 = vmatpush.bf16.msra.mxu0 0
  %760 = vmatpush.bf16.msra.mxu0 0
  %761 = vmatpush.bf16.msra.mxu0 0
  %762 = vmatpush.bf16.msra.mxu0 %v323
  %763 = vmatpush.bf16.msra.mxu0 %v236
  %764 = vmatpush.bf16.msra.mxu0 %v235
  %765 = vmatpush.bf16.msra.mxu0 %v234
  %766 = vmatpush.bf16.msra.mxu0 %v233
  %767 = vmatmul.bf16.gmra.mxu0 %v685
  %v768 = vpop.f32.mrf.mxu0
  %v769 = vadd.f32 %v86, %v768
  %v770 = vpop.f32.mrf.mxu0
  %v771 = vadd.f32 %v86, %v770
  %772 = vmatmul.bf16.gmra.mxu0 %v688
  %v773 = vpop.f32.mrf.mxu0
  %v774 = vadd.f32 %v86, %v773
  %v775 = vpop.f32.mrf.mxu0
  %v776 = vadd.f32 %v86, %v775
  %777 = vmatmul.bf16.gmra.mxu0 %v691
  %v778 = vpop.f32.mrf.mxu0
  %v779 = vadd.f32 %v86, %v778
  %v780 = vpop.f32.mrf.mxu0
  %v781 = vadd.f32 %v86, %v780
  %782 = vmatmul.bf16.gmra.mxu0 %v694
  %v783 = vpop.f32.mrf.mxu0
  %v784 = vadd.f32 %v86, %v783
  %v785 = vpop.f32.mrf.mxu0
  %v786 = vadd.f32 %v86, %v785
  %787 = vmatmul.bf16.gmra.mxu0 %v697
  %v788 = vpop.f32.mrf.mxu0
  %v789 = vadd.f32 %v86, %v788
  %v790 = vpop.f32.mrf.mxu0
  %v791 = vadd.f32 %v86, %v790
  %792 = vmatmul.bf16.gmra.mxu0 %v700
  %v793 = vpop.f32.mrf.mxu0
  %v794 = vadd.f32 %v86, %v793
  %v795 = vpop.f32.mrf.mxu0
  %v796 = vadd.f32 %v86, %v795
  %797 = vmatmul.bf16.gmra.mxu0 %v703
  %v798 = vpop.f32.mrf.mxu0
  %v799 = vadd.f32 %v86, %v798
  %v800 = vpop.f32.mrf.mxu0
  %v801 = vadd.f32 %v86, %v800
  %802 = vmatmul.bf16.gmra.mxu0 %v706
  %v803 = vpop.f32.mrf.mxu0
  %v804 = vadd.f32 %v86, %v803
  %v805 = vpop.f32.mrf.mxu0
  %v806 = vadd.f32 %v86, %v805
  %807 = vmatmul.bf16.gmra.mxu0 %v709
  %v808 = vpop.f32.mrf.mxu0
  %v809 = vadd.f32 %v86, %v808
  %v810 = vpop.f32.mrf.mxu0
  %v811 = vadd.f32 %v86, %v810
  %812 = vmatmul.bf16.gmra.mxu0 %v712
  %v813 = vpop.f32.mrf.mxu0
  %v814 = vadd.f32 %v86, %v813
  %v815 = vpop.f32.mrf.mxu0
  %v816 = vadd.f32 %v86, %v815
  %817 = vmatmul.bf16.gmra.mxu0 %v715
  %v818 = vpop.f32.mrf.mxu0
  %v819 = vadd.f32 %v86, %v818
  %v820 = vpop.f32.mrf.mxu0
  %v821 = vadd.f32 %v86, %v820
  %822 = vmatmul.bf16.gmra.mxu0 %v718
  %v823 = vpop.f32.mrf.mxu0
  %v824 = vadd.f32 %v86, %v823
  %v825 = vpop.f32.mrf.mxu0
  %v826 = vadd.f32 %v86, %v825
  %827 = vmatmul.bf16.gmra.mxu0 %v721
  %v828 = vpop.f32.mrf.mxu0
  %v829 = vadd.f32 %v86, %v828
  %v830 = vpop.f32.mrf.mxu0
  %v831 = vadd.f32 %v86, %v830
  %832 = vmatmul.bf16.gmra.mxu0 %v724
  %v833 = vpop.f32.mrf.mxu0
  %v834 = vadd.f32 %v86, %v833
  %v835 = vpop.f32.mrf.mxu0
  %v836 = vadd.f32 %v86, %v835
  %837 = vmatmul.bf16.gmra.mxu0 %v727
  %v838 = vpop.f32.mrf.mxu0
  %v839 = vadd.f32 %v86, %v838
  %v840 = vpop.f32.mrf.mxu0
  %v841 = vadd.f32 %v86, %v840
  %842 = vmatmul.bf16.gmra.mxu0 %v730
  %v843 = vpop.f32.mrf.mxu0
  %v844 = vadd.f32 %v86, %v843
  %v845 = vpop.f32.mrf.mxu0
  %v846 = vadd.f32 %v86, %v845
  %847 = vmatmul.bf16.gmra.mxu0 %v733
  %v848 = vpop.f32.mrf.mxu0
  %v849 = vadd.f32 %v86, %v848
  %v850 = vpop.f32.mrf.mxu0
  %v851 = vadd.f32 %v86, %v850
  %852 = vmatmul.bf16.gmra.mxu0 %v736
  %v853 = vpop.f32.mrf.mxu0
  %v854 = vadd.f32 %v86, %v853
  %v855 = vpop.f32.mrf.mxu0
  %v856 = vadd.f32 %v86, %v855
  %857 = vmatmul.bf16.gmra.mxu0 %v739
  %v858 = vpop.f32.mrf.mxu0
  %v859 = vadd.f32 %v86, %v858
  %v860 = vpop.f32.mrf.mxu0
  %v861 = vadd.f32 %v86, %v860
  %862 = vmatmul.bf16.gmra.mxu0 %v742
  %v863 = vpop.f32.mrf.mxu0
  %v864 = vadd.f32 %v86, %v863
  %v865 = vpop.f32.mrf.mxu0
  %v866 = vadd.f32 %v86, %v865
  %867 = vmatmul.bf16.gmra.mxu0 %v745
  %v868 = vpop.f32.mrf.mxu0
  %v869 = vadd.f32 %v86, %v868
  %v870 = vpop.f32.mrf.mxu0
  %v871 = vadd.f32 %v86, %v870
  %872 = vmatmul.bf16.gmra.mxu0 %v748
  %v873 = vpop.f32.mrf.mxu0
  %v874 = vadd.f32 %v86, %v873
  %v875 = vpop.f32.mrf.mxu0
  %v876 = vadd.f32 %v86, %v875
  %877 = vmatmul.bf16.gmra.mxu0 %v751
  %v878 = vpop.f32.mrf.mxu0
  %v879 = vadd.f32 %v86, %v878
  %v880 = vpop.f32.mrf.mxu0
  %v881 = vadd.f32 %v86, %v880
  %882 = vmatmul.bf16.gmra.mxu0 %v754
  %v883 = vpop.f32.mrf.mxu0
  %v884 = vadd.f32 %v86, %v883
  %v885 = vpop.f32.mrf.mxu0
  %v886 = vadd.f32 %v86, %v885
  %887 = vmatmul.bf16.gmra.mxu0 %v757
  %v888 = vpop.f32.mrf.mxu0
  %v889 = vadd.f32 %v86, %v888
  %v890 = vpop.f32.mrf.mxu0
  %v891 = vadd.f32 %v86, %v890
  %892 = vdwg.mxu0
  %v893 = vmax.f32 %v769, 0.0
  %v894 = vmax.f32 %v771, 0.0
  %v895 = vmax.f32 %v774, 0.0
  %v896 = vmax.f32 %v776, 0.0
  %v897 = vmax.f32 %v779, 0.0
  %v898 = vmax.f32 %v781, 0.0
  %v899 = vmax.f32 %v784, 0.0
  %v900 = vmax.f32 %v786, 0.0
  %v901 = vmax.f32 %v789, 0.0
  %v902 = vmax.f32 %v791, 0.0
  %v903 = vmax.f32 %v794, 0.0
  %v904 = vmax.f32 %v796, 0.0
  %v905 = vmax.f32 %v799, 0.0
  %v906 = vmax.f32 %v801, 0.0
  %v907 = vmax.f32 %v804, 0.0
  %v908 = vmax.f32 %v806, 0.0
  %v909 = vmax.f32 %v809, 0.0
  %v910 = vmax.f32 %v811, 0.0
  %v911 = vmax.f32 %v814, 0.0
  %v912 = vmax.f32 %v816, 0.0
  %v913 = vmax.f32 %v819, 0.0
  %v914 = vmax.f32 %v821, 0.0
  %v915 = vmax.f32 %v824, 0.0
  %v916 = vmax.f32 %v826, 0.0
  %v917 = vmax.f32 %v829, 0.0
  %v918 = vmax.f32 %v831, 0.0
  %v919 = vmax.f32 %v834, 0.0
  %v920 = vmax.f32 %v836, 0.0
  %v921 = vmax.f32 %v839, 0.0
  %v922 = vmax.f32 %v841, 0.0
  %v923 = vmax.f32 %v844, 0.0
  %v924 = vmax.f32 %v846, 0.0
  %v925 = vmax.f32 %v849, 0.0
  %v926 = vmax.f32 %v851, 0.0
  %v927 = vmax.f32 %v854, 0.0
  %v928 = vmax.f32 %v856, 0.0
  %v929 = vmax.f32 %v859, 0.0
  %v930 = vmax.f32 %v861, 0.0
  %v931 = vmax.f32 %v864, 0.0
  %v932 = vmax.f32 %v866, 0.0
  %v933 = vmax.f32 %v869, 0.0
  %v934 = vmax.f32 %v871, 0.0
  %v935 = vmax.f32 %v874, 0.0
  %v936 = vmax.f32 %v876, 0.0
  %v937 = vmax.f32 %v879, 0.0
  %v938 = vmax.f32 %v881, 0.0
  %v939 = vmax.f32 %v884, 0.0
  %v940 = vmax.f32 %v886, 0.0
  %v941 = vmax.f32 %v889, 0.0
  %v942 = vmax.f32 %v891, 0.0
  %v943 = vmax.f32 %v459, %v893
  %v944 = vmax.f32 %v460, %v894
  %v945 = vmax.f32 %v461, %v895
  %v946 = vmax.f32 %v462, %v896
  %v947 = vmax.f32 %v463, %v897
  %v948 = vmax.f32 %v464, %v898
  %v949 = vmax.f32 %v465, %v899
  %v950 = vmax.f32 %v466, %v900
  %v951 = vmax.f32 %v467, %v901
  %v952 = vmax.f32 %v468, %v902
  %v953 = vmax.f32 %v469, %v903
  %v954 = vmax.f32 %v470, %v904
  %v955 = vmax.f32 %v471, %v905
  %v956 = vmax.f32 %v472, %v906
  %v957 = vmax.f32 %v473, %v907
  %v958 = vmax.f32 %v474, %v908
  %v959 = vmax.f32 %v475, %v909
  %v960 = vmax.f32 %v476, %v910
  %v961 = vmax.f32 %v477, %v911
  %v962 = vmax.f32 %v478, %v912
  %v963 = vmax.f32 %v479, %v913
  %v964 = vmax.f32 %v480, %v914
  %v965 = vmax.f32 %v481, %v915
  %v966 = vmax.f32 %v482, %v916
  %v967 = vmax.f32 %v483, %v917
  %v968 = vmax.f32 %v484, %v918
  %v969 = vmax.f32 %v485, %v919
  %v970 = vmax.f32 %v486, %v920
  %v971 = vmax.f32 %v487, %v921
  %v972 = vmax.f32 %v488, %v922
  %v973 = vmax.f32 %v489, %v923
  %v974 = vmax.f32 %v490, %v924
  %v975 = vmax.f32 %v491, %v925
  %v976 = vmax.f32 %v492, %v926
  %v977 = vmax.f32 %v493, %v927
  %v978 = vmax.f32 %v494, %v928
  %v979 = vmax.f32 %v495, %v929
  %v980 = vmax.f32 %v496, %v930
  %v981 = vmax.f32 %v497, %v931
  %v982 = vmax.f32 %v498, %v932
  %v983 = vmax.f32 %v499, %v933
  %v984 = vmax.f32 %v500, %v934
  %v985 = vmax.f32 %v501, %v935
  %v986 = vmax.f32 %v502, %v936
  %v987 = vmax.f32 %v503, %v937
  %v988 = vmax.f32 %v504, %v938
  %v989 = vmax.f32 %v505, %v939
  %v990 = vmax.f32 %v506, %v940
  %v991 = vmax.f32 %v507, %v941
  %v992 = vmax.f32 %v508, %v942
  %v993 = vld [vmem:[%s2] sm:$0xf]
  %v994 = vld [vmem:[%s2 + $0x4] sm:$0xf]
  %v995 = vld [vmem:[%s2 + $0x8] sm:$0xf]
  %v996 = vld [vmem:[%s2 + $0xc] sm:$0xf]
  %v997 = vld [vmem:[%s2 + $0x10] sm:$0xf]
  %v998 = vld [vmem:[%s2 + $0x14] sm:$0xf]
  %v999 = vld [vmem:[%s2 + $0x18] sm:$0xf]
  %v1000 = vld [vmem:[%s2 + $0x1c] sm:$0xf]
  %v1001 = vld [vmem:[%s2 + $0x20] sm:$0xf]
  %v1002 = vld [vmem:[%s2 + $0x24] sm:$0xf]
  %v1003 = vld [vmem:[%s2 + $0x28] sm:$0xf]
  %v1004 = vld [vmem:[%s2 + $0x2c] sm:$0xf]
  %v1005 = vld [vmem:[%s2 + $0x30] sm:$0xf]
  %v1006 = vld [vmem:[%s2 + $0x34] sm:$0xf]
  %v1007 = vld [vmem:[%s2 + $0x38] sm:$0xf]
  %v1008 = vld [vmem:[%s2 + $0x3c] sm:$0xf]
  %v1009 = vld [vmem:[%s2 + $0x40] sm:$0xf]
  %v1010 = vld [vmem:[%s2 + $0x44] sm:$0xf]
  %v1011 = vld [vmem:[%s2 + $0x48] sm:$0xf]
  %v1012 = vld [vmem:[%s2 + $0x4c] sm:$0xf]
  %v1013 = vld [vmem:[%s2 + $0x50] sm:$0xf]
  %v1014 = vld [vmem:[%s2 + $0x54] sm:$0xf]
  %v1015 = vld [vmem:[%s2 + $0x58] sm:$0xf]
  %v1016 = vld [vmem:[%s2 + $0x5c] sm:$0xf]
  %v1017 = vld [vmem:[%s2 + $0x60] sm:$0xf]
  %v1018 = vld [vmem:[%s2 + $0x64] sm:$0xf]
  %v1019 = vld [vmem:[%s2 + $0x68] sm:$0xf]
  %v1020 = vld [vmem:[%s2 + $0x6c] sm:$0xf]
  %v1021 = vld [vmem:[%s2 + $0x70] sm:$0xf]
  %v1022 = vld [vmem:[%s2 + $0x74] sm:$0xf]
  %v1023 = vld [vmem:[%s2 + $0x78] sm:$0xf]
  %v1024 = vld [vmem:[%s2 + $0x7c] sm:$0xf]
  %v1025 = vld [vmem:[%s2 + $0x80] sm:$0xf]
  %v1026 = vld [vmem:[%s2 + $0x84] sm:$0xf]
  %v1027 = vld [vmem:[%s2 + $0x88] sm:$0xf]
  %v1028 = vld [vmem:[%s2 + $0x8c] sm:$0xf]
  %v1029 = vld [vmem:[%s2 + $0x90] sm:$0xf]
  %v1030 = vld [vmem:[%s2 + $0x94] sm:$0xf]
  %v1031 = vld [vmem:[%s2 + $0x98] sm:$0xf]
  %v1032 = vld [vmem:[%s2 + $0x9c] sm:$0xf]
  %v1033 = vld [vmem:[%s2 + $0xa0] sm:$0xf]
  %v1034 = vld [vmem:[%s2 + $0xa4] sm:$0xf]
  %v1035 = vld [vmem:[%s2 + $0xa8] sm:$0xf]
  %v1036 = vld [vmem:[%s2 + $0xac] sm:$0xf]
  %v1037 = vld [vmem:[%s2 + $0xb0] sm:$0xf]
  %v1038 = vld [vmem:[%s2 + $0xb4] sm:$0xf]
  %v1039 = vld [vmem:[%s2 + $0xb8] sm:$0xf]
  %v1040 = vld [vmem:[%s2 + $0xbc] sm:$0xf]
  %v1041 = vld [vmem:[%s2 + $0xc0] sm:$0xf]
  %v1042 = vld [vmem:[%s2 + $0xc4] sm:$0xf]
  %v1093 = vunpack.c.l.b16 %v993
  %v1094 = vunpack.c.l.b16 %v994
  %v1095 = vunpack.c.l.b16 %v995
  %v1096 = vunpack.c.l.b16 %v996
  %v1097 = vunpack.c.l.b16 %v997
  %v1098 = vunpack.c.l.b16 %v998
  %v1099 = vunpack.c.l.b16 %v999
  %v1100 = vunpack.c.l.b16 %v1000
  %v1101 = vunpack.c.l.b16 %v1001
  %v1102 = vunpack.c.l.b16 %v1002
  %v1103 = vunpack.c.l.b16 %v1003
  %v1104 = vunpack.c.l.b16 %v1004
  %v1105 = vunpack.c.l.b16 %v1005
  %v1106 = vunpack.c.l.b16 %v1006
  %v1107 = vunpack.c.l.b16 %v1007
  %v1108 = vunpack.c.l.b16 %v1008
  %v1109 = vunpack.c.l.b16 %v1009
  %v1110 = vunpack.c.l.b16 %v1010
  %v1111 = vunpack.c.l.b16 %v1011
  %v1112 = vunpack.c.l.b16 %v1012
  %v1113 = vunpack.c.l.b16 %v1013
  %v1114 = vunpack.c.l.b16 %v1014
  %v1115 = vunpack.c.l.b16 %v1015
  %v1116 = vunpack.c.l.b16 %v1016
  %v1117 = vunpack.c.l.b16 %v1017
  %v1118 = vunpack.c.l.b16 %v1018
  %v1119 = vunpack.c.l.b16 %v1019
  %v1120 = vunpack.c.l.b16 %v1020
  %v1121 = vunpack.c.l.b16 %v1021
  %v1122 = vunpack.c.l.b16 %v1022
  %v1123 = vunpack.c.l.b16 %v1023
  %v1124 = vunpack.c.l.b16 %v1024
  %v1125 = vunpack.c.l.b16 %v1025
  %v1126 = vunpack.c.l.b16 %v1026
  %v1127 = vunpack.c.l.b16 %v1027
  %v1128 = vunpack.c.l.b16 %v1028
  %v1129 = vunpack.c.l.b16 %v1029
  %v1130 = vunpack.c.l.b16 %v1030
  %v1131 = vunpack.c.l.b16 %v1031
  %v1132 = vunpack.c.l.b16 %v1032
  %v1133 = vunpack.c.l.b16 %v1033
  %v1134 = vunpack.c.l.b16 %v1034
  %v1135 = vunpack.c.l.b16 %v1035
  %v1136 = vunpack.c.l.b16 %v1036
  %v1137 = vunpack.c.l.b16 %v1037
  %v1138 = vunpack.c.l.b16 %v1038
  %v1139 = vunpack.c.l.b16 %v1039
  %v1140 = vunpack.c.l.b16 %v1040
  %v1141 = vunpack.c.l.b16 %v1041
  %v1142 = vunpack.c.l.b16 %v1042
  %v1143 = vpack.c.b16 %v1094, %v1093
  %v1144 = vpack.c.b16 %v1096, %v1095
  %v1145 = vpack.c.b16 %v1098, %v1097
  %v1146 = vpack.c.b16 %v1100, %v1099
  %v1147 = vpack.c.b16 %v1102, %v1101
  %v1148 = vpack.c.b16 %v1104, %v1103
  %v1149 = vpack.c.b16 %v1106, %v1105
  %v1150 = vpack.c.b16 %v1108, %v1107
  %v1151 = vpack.c.b16 %v1110, %v1109
  %v1152 = vpack.c.b16 %v1112, %v1111
  %v1153 = vpack.c.b16 %v1114, %v1113
  %v1154 = vpack.c.b16 %v1116, %v1115
  %v1155 = vpack.c.b16 %v1118, %v1117
  %v1156 = vpack.c.b16 %v1120, %v1119
  %v1157 = vpack.c.b16 %v1122, %v1121
  %v1158 = vpack.c.b16 %v1124, %v1123
  %v1159 = vpack.c.b16 %v1126, %v1125
  %v1160 = vpack.c.b16 %v1128, %v1127
  %v1161 = vpack.c.b16 %v1130, %v1129
  %v1162 = vpack.c.b16 %v1132, %v1131
  %v1163 = vpack.c.b16 %v1134, %v1133
  %v1164 = vpack.c.b16 %v1136, %v1135
  %v1165 = vpack.c.b16 %v1138, %v1137
  %v1166 = vpack.c.b16 %v1140, %v1139
  %v1167 = vpack.c.b16 %v1142, %v1141
  %v1169 = vsel %vm242, %v1143, 0
  %v1172 = vsel %vm242, %v1144, 0
  %v1175 = vsel %vm242, %v1145, 0
  %v1178 = vsel %vm242, %v1146, 0
  %v1181 = vsel %vm242, %v1147, 0
  %v1184 = vsel %vm242, %v1148, 0
  %v1187 = vsel %vm242, %v1149, 0
  %v1190 = vsel %vm242, %v1150, 0
  %v1193 = vsel %vm242, %v1151, 0
  %v1196 = vsel %vm242, %v1152, 0
  %v1199 = vsel %vm242, %v1153, 0
  %v1202 = vsel %vm242, %v1154, 0
  %v1205 = vsel %vm242, %v1155, 0
  %v1208 = vsel %vm242, %v1156, 0
  %v1211 = vsel %vm242, %v1157, 0
  %v1214 = vsel %vm242, %v1158, 0
  %v1217 = vsel %vm242, %v1159, 0
  %v1220 = vsel %vm242, %v1160, 0
  %v1223 = vsel %vm242, %v1161, 0
  %v1226 = vsel %vm242, %v1162, 0
  %v1229 = vsel %vm242, %v1163, 0
  %v1232 = vsel %vm242, %v1164, 0
  %v1235 = vsel %vm242, %v1165, 0
  %v1238 = vsel %vm242, %v1166, 0
  %v1241 = vsel %vm242, %v1167, 0
  %1243 = vmatpush.bf16.msra.mxu0 0
  %1244 = vmatpush.bf16.msra.mxu0 0
  %1245 = vmatpush.bf16.msra.mxu0 0
  %1246 = vmatpush.bf16.msra.mxu0 %v323
  %1247 = vmatpush.bf16.msra.mxu0 %v236
  %1248 = vmatpush.bf16.msra.mxu0 %v235
  %1249 = vmatpush.bf16.msra.mxu0 %v234
  %1250 = vmatpush.bf16.msra.mxu0 %v233
  %1251 = vmatmul.bf16.gmra.mxu0 %v1169
  %v1252 = vpop.f32.mrf.mxu0
  %v1253 = vadd.f32 %v86, %v1252
  %v1254 = vpop.f32.mrf.mxu0
  %v1255 = vadd.f32 %v86, %v1254
  %1256 = vmatmul.bf16.gmra.mxu0 %v1172
  %v1257 = vpop.f32.mrf.mxu0
  %v1258 = vadd.f32 %v86, %v1257
  %v1259 = vpop.f32.mrf.mxu0
  %v1260 = vadd.f32 %v86, %v1259
  %1261 = vmatmul.bf16.gmra.mxu0 %v1175
  %v1262 = vpop.f32.mrf.mxu0
  %v1263 = vadd.f32 %v86, %v1262
  %v1264 = vpop.f32.mrf.mxu0
  %v1265 = vadd.f32 %v86, %v1264
  %1266 = vmatmul.bf16.gmra.mxu0 %v1178
  %v1267 = vpop.f32.mrf.mxu0
  %v1268 = vadd.f32 %v86, %v1267
  %v1269 = vpop.f32.mrf.mxu0
  %v1270 = vadd.f32 %v86, %v1269
  %1271 = vmatmul.bf16.gmra.mxu0 %v1181
  %v1272 = vpop.f32.mrf.mxu0
  %v1273 = vadd.f32 %v86, %v1272
  %v1274 = vpop.f32.mrf.mxu0
  %v1275 = vadd.f32 %v86, %v1274
  %1276 = vmatmul.bf16.gmra.mxu0 %v1184
  %v1277 = vpop.f32.mrf.mxu0
  %v1278 = vadd.f32 %v86, %v1277
  %v1279 = vpop.f32.mrf.mxu0
  %v1280 = vadd.f32 %v86, %v1279
  %1281 = vmatmul.bf16.gmra.mxu0 %v1187
  %v1282 = vpop.f32.mrf.mxu0
  %v1283 = vadd.f32 %v86, %v1282
  %v1284 = vpop.f32.mrf.mxu0
  %v1285 = vadd.f32 %v86, %v1284
  %1286 = vmatmul.bf16.gmra.mxu0 %v1190
  %v1287 = vpop.f32.mrf.mxu0
  %v1288 = vadd.f32 %v86, %v1287
  %v1289 = vpop.f32.mrf.mxu0
  %v1290 = vadd.f32 %v86, %v1289
  %1291 = vmatmul.bf16.gmra.mxu0 %v1193
  %v1292 = vpop.f32.mrf.mxu0
  %v1293 = vadd.f32 %v86, %v1292
  %v1294 = vpop.f32.mrf.mxu0
  %v1295 = vadd.f32 %v86, %v1294
  %1296 = vmatmul.bf16.gmra.mxu0 %v1196
  %v1297 = vpop.f32.mrf.mxu0
  %v1298 = vadd.f32 %v86, %v1297
  %v1299 = vpop.f32.mrf.mxu0
  %v1300 = vadd.f32 %v86, %v1299
  %1301 = vmatmul.bf16.gmra.mxu0 %v1199
  %v1302 = vpop.f32.mrf.mxu0
  %v1303 = vadd.f32 %v86, %v1302
  %v1304 = vpop.f32.mrf.mxu0
  %v1305 = vadd.f32 %v86, %v1304
  %1306 = vmatmul.bf16.gmra.mxu0 %v1202
  %v1307 = vpop.f32.mrf.mxu0
  %v1308 = vadd.f32 %v86, %v1307
  %v1309 = vpop.f32.mrf.mxu0
  %v1310 = vadd.f32 %v86, %v1309
  %1311 = vmatmul.bf16.gmra.mxu0 %v1205
  %v1312 = vpop.f32.mrf.mxu0
  %v1313 = vadd.f32 %v86, %v1312
  %v1314 = vpop.f32.mrf.mxu0
  %v1315 = vadd.f32 %v86, %v1314
  %1316 = vmatmul.bf16.gmra.mxu0 %v1208
  %v1317 = vpop.f32.mrf.mxu0
  %v1318 = vadd.f32 %v86, %v1317
  %v1319 = vpop.f32.mrf.mxu0
  %v1320 = vadd.f32 %v86, %v1319
  %1321 = vmatmul.bf16.gmra.mxu0 %v1211
  %v1322 = vpop.f32.mrf.mxu0
  %v1323 = vadd.f32 %v86, %v1322
  %v1324 = vpop.f32.mrf.mxu0
  %v1325 = vadd.f32 %v86, %v1324
  %1326 = vmatmul.bf16.gmra.mxu0 %v1214
  %v1327 = vpop.f32.mrf.mxu0
  %v1328 = vadd.f32 %v86, %v1327
  %v1329 = vpop.f32.mrf.mxu0
  %v1330 = vadd.f32 %v86, %v1329
  %1331 = vmatmul.bf16.gmra.mxu0 %v1217
  %v1332 = vpop.f32.mrf.mxu0
  %v1333 = vadd.f32 %v86, %v1332
  %v1334 = vpop.f32.mrf.mxu0
  %v1335 = vadd.f32 %v86, %v1334
  %1336 = vmatmul.bf16.gmra.mxu0 %v1220
  %v1337 = vpop.f32.mrf.mxu0
  %v1338 = vadd.f32 %v86, %v1337
  %v1339 = vpop.f32.mrf.mxu0
  %v1340 = vadd.f32 %v86, %v1339
  %1341 = vmatmul.bf16.gmra.mxu0 %v1223
  %v1342 = vpop.f32.mrf.mxu0
  %v1343 = vadd.f32 %v86, %v1342
  %v1344 = vpop.f32.mrf.mxu0
  %v1345 = vadd.f32 %v86, %v1344
  %1346 = vmatmul.bf16.gmra.mxu0 %v1226
  %v1347 = vpop.f32.mrf.mxu0
  %v1348 = vadd.f32 %v86, %v1347
  %v1349 = vpop.f32.mrf.mxu0
  %v1350 = vadd.f32 %v86, %v1349
  %1351 = vmatmul.bf16.gmra.mxu0 %v1229
  %v1352 = vpop.f32.mrf.mxu0
  %v1353 = vadd.f32 %v86, %v1352
  %v1354 = vpop.f32.mrf.mxu0
  %v1355 = vadd.f32 %v86, %v1354
  %1356 = vmatmul.bf16.gmra.mxu0 %v1232
  %v1357 = vpop.f32.mrf.mxu0
  %v1358 = vadd.f32 %v86, %v1357
  %v1359 = vpop.f32.mrf.mxu0
  %v1360 = vadd.f32 %v86, %v1359
  %1361 = vmatmul.bf16.gmra.mxu0 %v1235
  %v1362 = vpop.f32.mrf.mxu0
  %v1363 = vadd.f32 %v86, %v1362
  %v1364 = vpop.f32.mrf.mxu0
  %v1365 = vadd.f32 %v86, %v1364
  %1366 = vmatmul.bf16.gmra.mxu0 %v1238
  %v1367 = vpop.f32.mrf.mxu0
  %v1368 = vadd.f32 %v86, %v1367
  %v1369 = vpop.f32.mrf.mxu0
  %v1370 = vadd.f32 %v86, %v1369
  %1371 = vmatmul.bf16.gmra.mxu0 %v1241
  %v1372 = vpop.f32.mrf.mxu0
  %v1373 = vadd.f32 %v86, %v1372
  %v1374 = vpop.f32.mrf.mxu0
  %v1375 = vadd.f32 %v86, %v1374
  %1376 = vdwg.mxu0
  %v1377 = vmax.f32 %v1253, 0.0
  %v1378 = vmax.f32 %v1255, 0.0
  %v1379 = vmax.f32 %v1258, 0.0
  %v1380 = vmax.f32 %v1260, 0.0
  %v1381 = vmax.f32 %v1263, 0.0
  %v1382 = vmax.f32 %v1265, 0.0
  %v1383 = vmax.f32 %v1268, 0.0
  %v1384 = vmax.f32 %v1270, 0.0
  %v1385 = vmax.f32 %v1273, 0.0
  %v1386 = vmax.f32 %v1275, 0.0
  %v1387 = vmax.f32 %v1278, 0.0
  %v1388 = vmax.f32 %v1280, 0.0
  %v1389 = vmax.f32 %v1283, 0.0
  %v1390 = vmax.f32 %v1285, 0.0
  %v1391 = vmax.f32 %v1288, 0.0
  %v1392 = vmax.f32 %v1290, 0.0
  %v1393 = vmax.f32 %v1293, 0.0
  %v1394 = vmax.f32 %v1295, 0.0
  %v1395 = vmax.f32 %v1298, 0.0
  %v1396 = vmax.f32 %v1300, 0.0
  %v1397 = vmax.f32 %v1303, 0.0
  %v1398 = vmax.f32 %v1305, 0.0
  %v1399 = vmax.f32 %v1308, 0.0
  %v1400 = vmax.f32 %v1310, 0.0
  %v1401 = vmax.f32 %v1313, 0.0
  %v1402 = vmax.f32 %v1315, 0.0
  %v1403 = vmax.f32 %v1318, 0.0
  %v1404 = vmax.f32 %v1320, 0.0
  %v1405 = vmax.f32 %v1323, 0.0
  %v1406 = vmax.f32 %v1325, 0.0
  %v1407 = vmax.f32 %v1328, 0.0
  %v1408 = vmax.f32 %v1330, 0.0
  %v1409 = vmax.f32 %v1333, 0.0
  %v1410 = vmax.f32 %v1335, 0.0
  %v1411 = vmax.f32 %v1338, 0.0
  %v1412 = vmax.f32 %v1340, 0.0
  %v1413 = vmax.f32 %v1343, 0.0
  %v1414 = vmax.f32 %v1345, 0.0
  %v1415 = vmax.f32 %v1348, 0.0
  %v1416 = vmax.f32 %v1350, 0.0
  %v1417 = vmax.f32 %v1353, 0.0
  %v1418 = vmax.f32 %v1355, 0.0
  %v1419 = vmax.f32 %v1358, 0.0
  %v1420 = vmax.f32 %v1360, 0.0
  %v1421 = vmax.f32 %v1363, 0.0
  %v1422 = vmax.f32 %v1365, 0.0
  %v1423 = vmax.f32 %v1368, 0.0
  %v1424 = vmax.f32 %v1370, 0.0
  %v1425 = vmax.f32 %v1373, 0.0
  %v1426 = vmax.f32 %v1375, 0.0
  %v1427 = vmax.f32 %v943, %v1377
  %v1428 = vmax.f32 %v944, %v1378
  %v1429 = vmax.f32 %v945, %v1379
  %v1430 = vmax.f32 %v946, %v1380
  %v1431 = vmax.f32 %v947, %v1381
  %v1432 = vmax.f32 %v948, %v1382
  %v1433 = vmax.f32 %v949, %v1383
  %v1434 = vmax.f32 %v950, %v1384
  %v1435 = vmax.f32 %v951, %v1385
  %v1436 = vmax.f32 %v952, %v1386
  %v1437 = vmax.f32 %v953, %v1387
  %v1438 = vmax.f32 %v954, %v1388
  %v1439 = vmax.f32 %v955, %v1389
  %v1440 = vmax.f32 %v956, %v1390
  %v1441 = vmax.f32 %v957, %v1391
  %v1442 = vmax.f32 %v958, %v1392
  %v1443 = vmax.f32 %v959, %v1393
  %v1444 = vmax.f32 %v960, %v1394
  %v1445 = vmax.f32 %v961, %v1395
  %v1446 = vmax.f32 %v962, %v1396
  %v1447 = vmax.f32 %v963, %v1397
  %v1448 = vmax.f32 %v964, %v1398
  %v1449 = vmax.f32 %v965, %v1399
  %v1450 = vmax.f32 %v966, %v1400
  %v1451 = vmax.f32 %v967, %v1401
  %v1452 = vmax.f32 %v968, %v1402
  %v1453 = vmax.f32 %v969, %v1403
  %v1454 = vmax.f32 %v970, %v1404
  %v1455 = vmax.f32 %v971, %v1405
  %v1456 = vmax.f32 %v972, %v1406
  %v1457 = vmax.f32 %v973, %v1407
  %v1458 = vmax.f32 %v974, %v1408
  %v1459 = vmax.f32 %v975, %v1409
  %v1460 = vmax.f32 %v976, %v1410
  %v1461 = vmax.f32 %v977, %v1411
  %v1462 = vmax.f32 %v978, %v1412
  %v1463 = vmax.f32 %v979, %v1413
  %v1464 = vmax.f32 %v980, %v1414
  %v1465 = vmax.f32 %v981, %v1415
  %v1466 = vmax.f32 %v982, %v1416
  %v1467 = vmax.f32 %v983, %v1417
  %v1468 = vmax.f32 %v984, %v1418
  %v1469 = vmax.f32 %v985, %v1419
  %v1470 = vmax.f32 %v986, %v1420
  %v1471 = vmax.f32 %v987, %v1421
  %v1472 = vmax.f32 %v988, %v1422
  %v1473 = vmax.f32 %v989, %v1423
  %v1474 = vmax.f32 %v990, %v1424
  %v1475 = vmax.f32 %v991, %v1425
  %v1476 = vmax.f32 %v992, %v1426
  %v1477 = vld [vmem:[%s3] sm:$0xf]
  %v1478 = vld [vmem:[%s3 + $0x4] sm:$0xf]
  %v1479 = vld [vmem:[%s3 + $0x8] sm:$0xf]
  %v1480 = vld [vmem:[%s3 + $0xc] sm:$0xf]
  %v1481 = vld [vmem:[%s3 + $0x10] sm:$0xf]
  %v1482 = vld [vmem:[%s3 + $0x14] sm:$0xf]
  %v1483 = vld [vmem:[%s3 + $0x18] sm:$0xf]
  %v1484 = vld [vmem:[%s3 + $0x1c] sm:$0xf]
  %v1485 = vld [vmem:[%s3 + $0x20] sm:$0xf]
  %v1486 = vld [vmem:[%s3 + $0x24] sm:$0xf]
  %v1487 = vld [vmem:[%s3 + $0x28] sm:$0xf]
  %v1488 = vld [vmem:[%s3 + $0x2c] sm:$0xf]
  %v1489 = vld [vmem:[%s3 + $0x30] sm:$0xf]
  %v1490 = vld [vmem:[%s3 + $0x34] sm:$0xf]
  %v1491 = vld [vmem:[%s3 + $0x38] sm:$0xf]
  %v1492 = vld [vmem:[%s3 + $0x3c] sm:$0xf]
  %v1493 = vld [vmem:[%s3 + $0x40] sm:$0xf]
  %v1494 = vld [vmem:[%s3 + $0x44] sm:$0xf]
  %v1495 = vld [vmem:[%s3 + $0x48] sm:$0xf]
  %v1496 = vld [vmem:[%s3 + $0x4c] sm:$0xf]
  %v1497 = vld [vmem:[%s3 + $0x50] sm:$0xf]
  %v1498 = vld [vmem:[%s3 + $0x54] sm:$0xf]
  %v1499 = vld [vmem:[%s3 + $0x58] sm:$0xf]
  %v1500 = vld [vmem:[%s3 + $0x5c] sm:$0xf]
  %v1501 = vld [vmem:[%s3 + $0x60] sm:$0xf]
  %v1502 = vld [vmem:[%s3 + $0x64] sm:$0xf]
  %v1503 = vld [vmem:[%s3 + $0x68] sm:$0xf]
  %v1504 = vld [vmem:[%s3 + $0x6c] sm:$0xf]
  %v1505 = vld [vmem:[%s3 + $0x70] sm:$0xf]
  %v1506 = vld [vmem:[%s3 + $0x74] sm:$0xf]
  %v1507 = vld [vmem:[%s3 + $0x78] sm:$0xf]
  %v1508 = vld [vmem:[%s3 + $0x7c] sm:$0xf]
  %v1509 = vld [vmem:[%s3 + $0x80] sm:$0xf]
  %v1510 = vld [vmem:[%s3 + $0x84] sm:$0xf]
  %v1511 = vld [vmem:[%s3 + $0x88] sm:$0xf]
  %v1512 = vld [vmem:[%s3 + $0x8c] sm:$0xf]
  %v1513 = vld [vmem:[%s3 + $0x90] sm:$0xf]
  %v1514 = vld [vmem:[%s3 + $0x94] sm:$0xf]
  %v1515 = vld [vmem:[%s3 + $0x98] sm:$0xf]
  %v1516 = vld [vmem:[%s3 + $0x9c] sm:$0xf]
  %v1517 = vld [vmem:[%s3 + $0xa0] sm:$0xf]
  %v1518 = vld [vmem:[%s3 + $0xa4] sm:$0xf]
  %v1519 = vld [vmem:[%s3 + $0xa8] sm:$0xf]
  %v1520 = vld [vmem:[%s3 + $0xac] sm:$0xf]
  %v1521 = vld [vmem:[%s3 + $0xb0] sm:$0xf]
  %v1522 = vld [vmem:[%s3 + $0xb4] sm:$0xf]
  %v1523 = vld [vmem:[%s3 + $0xb8] sm:$0xf]
  %v1524 = vld [vmem:[%s3 + $0xbc] sm:$0xf]
  %v1525 = vld [vmem:[%s3 + $0xc0] sm:$0xf]
  %v1526 = vld [vmem:[%s3 + $0xc4] sm:$0xf]
  %v1577 = vunpack.c.l.b16 %v1477
  %v1578 = vunpack.c.l.b16 %v1478
  %v1579 = vunpack.c.l.b16 %v1479
  %v1580 = vunpack.c.l.b16 %v1480
  %v1581 = vunpack.c.l.b16 %v1481
  %v1582 = vunpack.c.l.b16 %v1482
  %v1583 = vunpack.c.l.b16 %v1483
  %v1584 = vunpack.c.l.b16 %v1484
  %v1585 = vunpack.c.l.b16 %v1485
  %v1586 = vunpack.c.l.b16 %v1486
  %v1587 = vunpack.c.l.b16 %v1487
  %v1588 = vunpack.c.l.b16 %v1488
  %v1589 = vunpack.c.l.b16 %v1489
  %v1590 = vunpack.c.l.b16 %v1490
  %v1591 = vunpack.c.l.b16 %v1491
  %v1592 = vunpack.c.l.b16 %v1492
  %v1593 = vunpack.c.l.b16 %v1493
  %v1594 = vunpack.c.l.b16 %v1494
  %v1595 = vunpack.c.l.b16 %v1495
  %v1596 = vunpack.c.l.b16 %v1496
  %v1597 = vunpack.c.l.b16 %v1497
  %v1598 = vunpack.c.l.b16 %v1498
  %v1599 = vunpack.c.l.b16 %v1499
  %v1600 = vunpack.c.l.b16 %v1500
  %v1601 = vunpack.c.l.b16 %v1501
  %v1602 = vunpack.c.l.b16 %v1502
  %v1603 = vunpack.c.l.b16 %v1503
  %v1604 = vunpack.c.l.b16 %v1504
  %v1605 = vunpack.c.l.b16 %v1505
  %v1606 = vunpack.c.l.b16 %v1506
  %v1607 = vunpack.c.l.b16 %v1507
  %v1608 = vunpack.c.l.b16 %v1508
  %v1609 = vunpack.c.l.b16 %v1509
  %v1610 = vunpack.c.l.b16 %v1510
  %v1611 = vunpack.c.l.b16 %v1511
  %v1612 = vunpack.c.l.b16 %v1512
  %v1613 = vunpack.c.l.b16 %v1513
  %v1614 = vunpack.c.l.b16 %v1514
  %v1615 = vunpack.c.l.b16 %v1515
  %v1616 = vunpack.c.l.b16 %v1516
  %v1617 = vunpack.c.l.b16 %v1517
  %v1618 = vunpack.c.l.b16 %v1518
  %v1619 = vunpack.c.l.b16 %v1519
  %v1620 = vunpack.c.l.b16 %v1520
  %v1621 = vunpack.c.l.b16 %v1521
  %v1622 = vunpack.c.l.b16 %v1522
  %v1623 = vunpack.c.l.b16 %v1523
  %v1624 = vunpack.c.l.b16 %v1524
  %v1625 = vunpack.c.l.b16 %v1525
  %v1626 = vunpack.c.l.b16 %v1526
  %v1627 = vpack.c.b16 %v1578, %v1577
  %v1628 = vpack.c.b16 %v1580, %v1579
  %v1629 = vpack.c.b16 %v1582, %v1581
  %v1630 = vpack.c.b16 %v1584, %v1583
  %v1631 = vpack.c.b16 %v1586, %v1585
  %v1632 = vpack.c.b16 %v1588, %v1587
  %v1633 = vpack.c.b16 %v1590, %v1589
  %v1634 = vpack.c.b16 %v1592, %v1591
  %v1635 = vpack.c.b16 %v1594, %v1593
  %v1636 = vpack.c.b16 %v1596, %v1595
  %v1637 = vpack.c.b16 %v1598, %v1597
  %v1638 = vpack.c.b16 %v1600, %v1599
  %v1639 = vpack.c.b16 %v1602, %v1601
  %v1640 = vpack.c.b16 %v1604, %v1603
  %v1641 = vpack.c.b16 %v1606, %v1605
  %v1642 = vpack.c.b16 %v1608, %v1607
  %v1643 = vpack.c.b16 %v1610, %v1609
  %v1644 = vpack.c.b16 %v1612, %v1611
  %v1645 = vpack.c.b16 %v1614, %v1613
  %v1646 = vpack.c.b16 %v1616, %v1615
  %v1647 = vpack.c.b16 %v1618, %v1617
  %v1648 = vpack.c.b16 %v1620, %v1619
  %v1649 = vpack.c.b16 %v1622, %v1621
  %v1650 = vpack.c.b16 %v1624, %v1623
  %v1651 = vpack.c.b16 %v1626, %v1625
  %v1653 = vsel %vm242, %v1627, 0
  %v1656 = vsel %vm242, %v1628, 0
  %v1659 = vsel %vm242, %v1629, 0
  %v1662 = vsel %vm242, %v1630, 0
  %v1665 = vsel %vm242, %v1631, 0
  %v1668 = vsel %vm242, %v1632, 0
  %v1671 = vsel %vm242, %v1633, 0
  %v1674 = vsel %vm242, %v1634, 0
  %v1677 = vsel %vm242, %v1635, 0
  %v1680 = vsel %vm242, %v1636, 0
  %v1683 = vsel %vm242, %v1637, 0
  %v1686 = vsel %vm242, %v1638, 0
  %v1689 = vsel %vm242, %v1639, 0
  %v1692 = vsel %vm242, %v1640, 0
  %v1695 = vsel %vm242, %v1641, 0
  %v1698 = vsel %vm242, %v1642, 0
  %v1701 = vsel %vm242, %v1643, 0
  %v1704 = vsel %vm242, %v1644, 0
  %v1707 = vsel %vm242, %v1645, 0
  %v1710 = vsel %vm242, %v1646, 0
  %v1713 = vsel %vm242, %v1647, 0
  %v1716 = vsel %vm242, %v1648, 0
  %v1719 = vsel %vm242, %v1649, 0
  %v1722 = vsel %vm242, %v1650, 0
  %v1725 = vsel %vm242, %v1651, 0
  %1727 = vmatpush.bf16.msra.mxu0 0
  %1728 = vmatpush.bf16.msra.mxu0 0
  %1729 = vmatpush.bf16.msra.mxu0 0
  %1730 = vmatpush.bf16.msra.mxu0 %v323
  %1731 = vmatpush.bf16.msra.mxu0 %v236
  %1732 = vmatpush.bf16.msra.mxu0 %v235
  %1733 = vmatpush.bf16.msra.mxu0 %v234
  %1734 = vmatpush.bf16.msra.mxu0 %v233
  %1735 = vmatmul.bf16.gmra.mxu0 %v1653
  %v1736 = vpop.f32.mrf.mxu0
  %v1737 = vadd.f32 %v86, %v1736
  %v1738 = vpop.f32.mrf.mxu0
  %v1739 = vadd.f32 %v86, %v1738
  %1740 = vmatmul.bf16.gmra.mxu0 %v1656
  %v1741 = vpop.f32.mrf.mxu0
  %v1742 = vadd.f32 %v86, %v1741
  %v1743 = vpop.f32.mrf.mxu0
  %v1744 = vadd.f32 %v86, %v1743
  %1745 = vmatmul.bf16.gmra.mxu0 %v1659
  %v1746 = vpop.f32.mrf.mxu0
  %v1747 = vadd.f32 %v86, %v1746
  %v1748 = vpop.f32.mrf.mxu0
  %v1749 = vadd.f32 %v86, %v1748
  %1750 = vmatmul.bf16.gmra.mxu0 %v1662
  %v1751 = vpop.f32.mrf.mxu0
  %v1752 = vadd.f32 %v86, %v1751
  %v1753 = vpop.f32.mrf.mxu0
  %v1754 = vadd.f32 %v86, %v1753
  %1755 = vmatmul.bf16.gmra.mxu0 %v1665
  %v1756 = vpop.f32.mrf.mxu0
  %v1757 = vadd.f32 %v86, %v1756
  %v1758 = vpop.f32.mrf.mxu0
  %v1759 = vadd.f32 %v86, %v1758
  %1760 = vmatmul.bf16.gmra.mxu0 %v1668
  %v1761 = vpop.f32.mrf.mxu0
  %v1762 = vadd.f32 %v86, %v1761
  %v1763 = vpop.f32.mrf.mxu0
  %v1764 = vadd.f32 %v86, %v1763
  %1765 = vmatmul.bf16.gmra.mxu0 %v1671
  %v1766 = vpop.f32.mrf.mxu0
  %v1767 = vadd.f32 %v86, %v1766
  %v1768 = vpop.f32.mrf.mxu0
  %v1769 = vadd.f32 %v86, %v1768
  %1770 = vmatmul.bf16.gmra.mxu0 %v1674
  %v1771 = vpop.f32.mrf.mxu0
  %v1772 = vadd.f32 %v86, %v1771
  %v1773 = vpop.f32.mrf.mxu0
  %v1774 = vadd.f32 %v86, %v1773
  %1775 = vmatmul.bf16.gmra.mxu0 %v1677
  %v1776 = vpop.f32.mrf.mxu0
  %v1777 = vadd.f32 %v86, %v1776
  %v1778 = vpop.f32.mrf.mxu0
  %v1779 = vadd.f32 %v86, %v1778
  %1780 = vmatmul.bf16.gmra.mxu0 %v1680
  %v1781 = vpop.f32.mrf.mxu0
  %v1782 = vadd.f32 %v86, %v1781
  %v1783 = vpop.f32.mrf.mxu0
  %v1784 = vadd.f32 %v86, %v1783
  %1785 = vmatmul.bf16.gmra.mxu0 %v1683
  %v1786 = vpop.f32.mrf.mxu0
  %v1787 = vadd.f32 %v86, %v1786
  %v1788 = vpop.f32.mrf.mxu0
  %v1789 = vadd.f32 %v86, %v1788
  %1790 = vmatmul.bf16.gmra.mxu0 %v1686
  %v1791 = vpop.f32.mrf.mxu0
  %v1792 = vadd.f32 %v86, %v1791
  %v1793 = vpop.f32.mrf.mxu0
  %v1794 = vadd.f32 %v86, %v1793
  %1795 = vmatmul.bf16.gmra.mxu0 %v1689
  %v1796 = vpop.f32.mrf.mxu0
  %v1797 = vadd.f32 %v86, %v1796
  %v1798 = vpop.f32.mrf.mxu0
  %v1799 = vadd.f32 %v86, %v1798
  %1800 = vmatmul.bf16.gmra.mxu0 %v1692
  %v1801 = vpop.f32.mrf.mxu0
  %v1802 = vadd.f32 %v86, %v1801
  %v1803 = vpop.f32.mrf.mxu0
  %v1804 = vadd.f32 %v86, %v1803
  %1805 = vmatmul.bf16.gmra.mxu0 %v1695
  %v1806 = vpop.f32.mrf.mxu0
  %v1807 = vadd.f32 %v86, %v1806
  %v1808 = vpop.f32.mrf.mxu0
  %v1809 = vadd.f32 %v86, %v1808
  %1810 = vmatmul.bf16.gmra.mxu0 %v1698
  %v1811 = vpop.f32.mrf.mxu0
  %v1812 = vadd.f32 %v86, %v1811
  %v1813 = vpop.f32.mrf.mxu0
  %v1814 = vadd.f32 %v86, %v1813
  %1815 = vmatmul.bf16.gmra.mxu0 %v1701
  %v1816 = vpop.f32.mrf.mxu0
  %v1817 = vadd.f32 %v86, %v1816
  %v1818 = vpop.f32.mrf.mxu0
  %v1819 = vadd.f32 %v86, %v1818
  %1820 = vmatmul.bf16.gmra.mxu0 %v1704
  %v1821 = vpop.f32.mrf.mxu0
  %v1822 = vadd.f32 %v86, %v1821
  %v1823 = vpop.f32.mrf.mxu0
  %v1824 = vadd.f32 %v86, %v1823
  %1825 = vmatmul.bf16.gmra.mxu0 %v1707
  %v1826 = vpop.f32.mrf.mxu0
  %v1827 = vadd.f32 %v86, %v1826
  %v1828 = vpop.f32.mrf.mxu0
  %v1829 = vadd.f32 %v86, %v1828
  %1830 = vmatmul.bf16.gmra.mxu0 %v1710
  %v1831 = vpop.f32.mrf.mxu0
  %v1832 = vadd.f32 %v86, %v1831
  %v1833 = vpop.f32.mrf.mxu0
  %v1834 = vadd.f32 %v86, %v1833
  %1835 = vmatmul.bf16.gmra.mxu0 %v1713
  %v1836 = vpop.f32.mrf.mxu0
  %v1837 = vadd.f32 %v86, %v1836
  %v1838 = vpop.f32.mrf.mxu0
  %v1839 = vadd.f32 %v86, %v1838
  %1840 = vmatmul.bf16.gmra.mxu0 %v1716
  %v1841 = vpop.f32.mrf.mxu0
  %v1842 = vadd.f32 %v86, %v1841
  %v1843 = vpop.f32.mrf.mxu0
  %v1844 = vadd.f32 %v86, %v1843
  %1845 = vmatmul.bf16.gmra.mxu0 %v1719
  %v1846 = vpop.f32.mrf.mxu0
  %v1847 = vadd.f32 %v86, %v1846
  %v1848 = vpop.f32.mrf.mxu0
  %v1849 = vadd.f32 %v86, %v1848
  %1850 = vmatmul.bf16.gmra.mxu0 %v1722
  %v1851 = vpop.f32.mrf.mxu0
  %v1852 = vadd.f32 %v86, %v1851
  %v1853 = vpop.f32.mrf.mxu0
  %v1854 = vadd.f32 %v86, %v1853
  %1855 = vmatmul.bf16.gmra.mxu0 %v1725
  %v1856 = vpop.f32.mrf.mxu0
  %v1857 = vadd.f32 %v86, %v1856
  %v1858 = vpop.f32.mrf.mxu0
  %v1859 = vadd.f32 %v86, %v1858
  %1860 = vdwg.mxu0
  %v1861 = vmax.f32 %v1737, 0.0
  %v1862 = vmax.f32 %v1739, 0.0
  %v1863 = vmax.f32 %v1742, 0.0
  %v1864 = vmax.f32 %v1744, 0.0
  %v1865 = vmax.f32 %v1747, 0.0
  %v1866 = vmax.f32 %v1749, 0.0
  %v1867 = vmax.f32 %v1752, 0.0
  %v1868 = vmax.f32 %v1754, 0.0
  %v1869 = vmax.f32 %v1757, 0.0
  %v1870 = vmax.f32 %v1759, 0.0
  %v1871 = vmax.f32 %v1762, 0.0
  %v1872 = vmax.f32 %v1764, 0.0
  %v1873 = vmax.f32 %v1767, 0.0
  %v1874 = vmax.f32 %v1769, 0.0
  %v1875 = vmax.f32 %v1772, 0.0
  %v1876 = vmax.f32 %v1774, 0.0
  %v1877 = vmax.f32 %v1777, 0.0
  %v1878 = vmax.f32 %v1779, 0.0
  %v1879 = vmax.f32 %v1782, 0.0
  %v1880 = vmax.f32 %v1784, 0.0
  %v1881 = vmax.f32 %v1787, 0.0
  %v1882 = vmax.f32 %v1789, 0.0
  %v1883 = vmax.f32 %v1792, 0.0
  %v1884 = vmax.f32 %v1794, 0.0
  %v1885 = vmax.f32 %v1797, 0.0
  %v1886 = vmax.f32 %v1799, 0.0
  %v1887 = vmax.f32 %v1802, 0.0
  %v1888 = vmax.f32 %v1804, 0.0
  %v1889 = vmax.f32 %v1807, 0.0
  %v1890 = vmax.f32 %v1809, 0.0
  %v1891 = vmax.f32 %v1812, 0.0
  %v1892 = vmax.f32 %v1814, 0.0
  %v1893 = vmax.f32 %v1817, 0.0
  %v1894 = vmax.f32 %v1819, 0.0
  %v1895 = vmax.f32 %v1822, 0.0
  %v1896 = vmax.f32 %v1824, 0.0
  %v1897 = vmax.f32 %v1827, 0.0
  %v1898 = vmax.f32 %v1829, 0.0
  %v1899 = vmax.f32 %v1832, 0.0
  %v1900 = vmax.f32 %v1834, 0.0
  %v1901 = vmax.f32 %v1837, 0.0
  %v1902 = vmax.f32 %v1839, 0.0
  %v1903 = vmax.f32 %v1842, 0.0
  %v1904 = vmax.f32 %v1844, 0.0
  %v1905 = vmax.f32 %v1847, 0.0
  %v1906 = vmax.f32 %v1849, 0.0
  %v1907 = vmax.f32 %v1852, 0.0
  %v1908 = vmax.f32 %v1854, 0.0
  %v1909 = vmax.f32 %v1857, 0.0
  %v1910 = vmax.f32 %v1859, 0.0
  %v1911 = vmax.f32 %v1427, %v1861
  %v1912 = vmax.f32 %v1428, %v1862
  %v1913 = vmax.f32 %v1429, %v1863
  %v1914 = vmax.f32 %v1430, %v1864
  %v1915 = vmax.f32 %v1431, %v1865
  %v1916 = vmax.f32 %v1432, %v1866
  %v1917 = vmax.f32 %v1433, %v1867
  %v1918 = vmax.f32 %v1434, %v1868
  %v1919 = vmax.f32 %v1435, %v1869
  %v1920 = vmax.f32 %v1436, %v1870
  %v1921 = vmax.f32 %v1437, %v1871
  %v1922 = vmax.f32 %v1438, %v1872
  %v1923 = vmax.f32 %v1439, %v1873
  %v1924 = vmax.f32 %v1440, %v1874
  %v1925 = vmax.f32 %v1441, %v1875
  %v1926 = vmax.f32 %v1442, %v1876
  %v1927 = vmax.f32 %v1443, %v1877
  %v1928 = vmax.f32 %v1444, %v1878
  %v1929 = vmax.f32 %v1445, %v1879
  %v1930 = vmax.f32 %v1446, %v1880
  %v1931 = vmax.f32 %v1447, %v1881
  %v1932 = vmax.f32 %v1448, %v1882
  %v1933 = vmax.f32 %v1449, %v1883
  %v1934 = vmax.f32 %v1450, %v1884
  %v1935 = vmax.f32 %v1451, %v1885
  %v1936 = vmax.f32 %v1452, %v1886
  %v1937 = vmax.f32 %v1453, %v1887
  %v1938 = vmax.f32 %v1454, %v1888
  %v1939 = vmax.f32 %v1455, %v1889
  %v1940 = vmax.f32 %v1456, %v1890
  %v1941 = vmax.f32 %v1457, %v1891
  %v1942 = vmax.f32 %v1458, %v1892
  %v1943 = vmax.f32 %v1459, %v1893
  %v1944 = vmax.f32 %v1460, %v1894
  %v1945 = vmax.f32 %v1461, %v1895
  %v1946 = vmax.f32 %v1462, %v1896
  %v1947 = vmax.f32 %v1463, %v1897
  %v1948 = vmax.f32 %v1464, %v1898
  %v1949 = vmax.f32 %v1465, %v1899
  %v1950 = vmax.f32 %v1466, %v1900
  %v1951 = vmax.f32 %v1467, %v1901
  %v1952 = vmax.f32 %v1468, %v1902
  %v1953 = vmax.f32 %v1469, %v1903
  %v1954 = vmax.f32 %v1470, %v1904
  %v1955 = vmax.f32 %v1471, %v1905
  %v1956 = vmax.f32 %v1472, %v1906
  %v1957 = vmax.f32 %v1473, %v1907
  %v1958 = vmax.f32 %v1474, %v1908
  %v1959 = vmax.f32 %v1475, %v1909
  %v1960 = vmax.f32 %v1476, %v1910
  %v1961 = vpack.c.bf16 %v1911, %v1911
  %v1962 = vpack.c.bf16 %v1912, %v1912
  %v1963 = vpack.c.bf16 %v1913, %v1913
  %v1964 = vpack.c.bf16 %v1914, %v1914
  %v1965 = vpack.c.bf16 %v1915, %v1915
  %v1966 = vpack.c.bf16 %v1916, %v1916
  %v1967 = vpack.c.bf16 %v1917, %v1917
  %v1968 = vpack.c.bf16 %v1918, %v1918
  %v1969 = vpack.c.bf16 %v1919, %v1919
  %v1970 = vpack.c.bf16 %v1920, %v1920
  %v1971 = vpack.c.bf16 %v1921, %v1921
  %v1972 = vpack.c.bf16 %v1922, %v1922
  %v1973 = vpack.c.bf16 %v1923, %v1923
  %v1974 = vpack.c.bf16 %v1924, %v1924
  %v1975 = vpack.c.bf16 %v1925, %v1925
  %v1976 = vpack.c.bf16 %v1926, %v1926
  %v1977 = vpack.c.bf16 %v1927, %v1927
  %v1978 = vpack.c.bf16 %v1928, %v1928
  %v1979 = vpack.c.bf16 %v1929, %v1929
  %v1980 = vpack.c.bf16 %v1930, %v1930
  %v1981 = vpack.c.bf16 %v1931, %v1931
  %v1982 = vpack.c.bf16 %v1932, %v1932
  %v1983 = vpack.c.bf16 %v1933, %v1933
  %v1984 = vpack.c.bf16 %v1934, %v1934
  %v1985 = vpack.c.bf16 %v1935, %v1935
  %v1986 = vpack.c.bf16 %v1936, %v1936
  %v1987 = vpack.c.bf16 %v1937, %v1937
  %v1988 = vpack.c.bf16 %v1938, %v1938
  %v1989 = vpack.c.bf16 %v1939, %v1939
  %v1990 = vpack.c.bf16 %v1940, %v1940
  %v1991 = vpack.c.bf16 %v1941, %v1941
  %v1992 = vpack.c.bf16 %v1942, %v1942
  %v1993 = vpack.c.bf16 %v1943, %v1943
  %v1994 = vpack.c.bf16 %v1944, %v1944
  %v1995 = vpack.c.bf16 %v1945, %v1945
  %v1996 = vpack.c.bf16 %v1946, %v1946
  %v1997 = vpack.c.bf16 %v1947, %v1947
  %v1998 = vpack.c.bf16 %v1948, %v1948
  %v1999 = vpack.c.bf16 %v1949, %v1949
  %v2000 = vpack.c.bf16 %v1950, %v1950
  %v2001 = vpack.c.bf16 %v1951, %v1951
  %v2002 = vpack.c.bf16 %v1952, %v1952
  %v2003 = vpack.c.bf16 %v1953, %v1953
  %v2004 = vpack.c.bf16 %v1954, %v1954
  %v2005 = vpack.c.bf16 %v1955, %v1955
  %v2006 = vpack.c.bf16 %v1956, %v1956
  %v2007 = vpack.c.bf16 %v1957, %v1957
  %v2008 = vpack.c.bf16 %v1958, %v1958
  %v2009 = vpack.c.bf16 %v1959, %v1959
  %v2010 = vpack.c.bf16 %v1960, %v1960
  %vm2011 = vcmask 158720
  %2012 = vst.msk [vmem:[%s6] sm:$0xf] %vm2011, %v1961
  %2013 = vst.msk [vmem:[%s6 + $0x4] sm:$0xf] %vm2011, %v1962
  %2014 = vst.msk [vmem:[%s6 + $0x8] sm:$0xf] %vm2011, %v1963
  %2015 = vst.msk [vmem:[%s6 + $0xc] sm:$0xf] %vm2011, %v1964
  %2016 = vst.msk [vmem:[%s6 + $0x10] sm:$0xf] %vm2011, %v1965
  %2017 = vst.msk [vmem:[%s6 + $0x14] sm:$0xf] %vm2011, %v1966
  %2018 = vst.msk [vmem:[%s6 + $0x18] sm:$0xf] %vm2011, %v1967
  %2019 = vst.msk [vmem:[%s6 + $0x1c] sm:$0xf] %vm2011, %v1968
  %2020 = vst.msk [vmem:[%s6 + $0x20] sm:$0xf] %vm2011, %v1969
  %2021 = vst.msk [vmem:[%s6 + $0x24] sm:$0xf] %vm2011, %v1970
  %2022 = vst.msk [vmem:[%s6 + $0x28] sm:$0xf] %vm2011, %v1971
  %2023 = vst.msk [vmem:[%s6 + $0x2c] sm:$0xf] %vm2011, %v1972
  %2024 = vst.msk [vmem:[%s6 + $0x30] sm:$0xf] %vm2011, %v1973
  %2025 = vst.msk [vmem:[%s6 + $0x34] sm:$0xf] %vm2011, %v1974
  %2026 = vst.msk [vmem:[%s6 + $0x38] sm:$0xf] %vm2011, %v1975
  %2027 = vst.msk [vmem:[%s6 + $0x3c] sm:$0xf] %vm2011, %v1976
  %2028 = vst.msk [vmem:[%s6 + $0x40] sm:$0xf] %vm2011, %v1977
  %2029 = vst.msk [vmem:[%s6 + $0x44] sm:$0xf] %vm2011, %v1978
  %2030 = vst.msk [vmem:[%s6 + $0x48] sm:$0xf] %vm2011, %v1979
  %2031 = vst.msk [vmem:[%s6 + $0x4c] sm:$0xf] %vm2011, %v1980
  %2032 = vst.msk [vmem:[%s6 + $0x50] sm:$0xf] %vm2011, %v1981
  %2033 = vst.msk [vmem:[%s6 + $0x54] sm:$0xf] %vm2011, %v1982
  %2034 = vst.msk [vmem:[%s6 + $0x58] sm:$0xf] %vm2011, %v1983
  %2035 = vst.msk [vmem:[%s6 + $0x5c] sm:$0xf] %vm2011, %v1984
  %2036 = vst.msk [vmem:[%s6 + $0x60] sm:$0xf] %vm2011, %v1985
  %2037 = vst.msk [vmem:[%s6 + $0x64] sm:$0xf] %vm2011, %v1986
  %2038 = vst.msk [vmem:[%s6 + $0x68] sm:$0xf] %vm2011, %v1987
  %2039 = vst.msk [vmem:[%s6 + $0x6c] sm:$0xf] %vm2011, %v1988
  %2040 = vst.msk [vmem:[%s6 + $0x70] sm:$0xf] %vm2011, %v1989
  %2041 = vst.msk [vmem:[%s6 + $0x74] sm:$0xf] %vm2011, %v1990
  %2042 = vst.msk [vmem:[%s6 + $0x78] sm:$0xf] %vm2011, %v1991
  %2043 = vst.msk [vmem:[%s6 + $0x7c] sm:$0xf] %vm2011, %v1992
  %2044 = vst.msk [vmem:[%s6 + $0x80] sm:$0xf] %vm2011, %v1993
  %2045 = vst.msk [vmem:[%s6 + $0x84] sm:$0xf] %vm2011, %v1994
  %2046 = vst.msk [vmem:[%s6 + $0x88] sm:$0xf] %vm2011, %v1995
  %2047 = vst.msk [vmem:[%s6 + $0x8c] sm:$0xf] %vm2011, %v1996
  %2048 = vst.msk [vmem:[%s6 + $0x90] sm:$0xf] %vm2011, %v1997
  %2049 = vst.msk [vmem:[%s6 + $0x94] sm:$0xf] %vm2011, %v1998
  %2050 = vst.msk [vmem:[%s6 + $0x98] sm:$0xf] %vm2011, %v1999
  %2051 = vst.msk [vmem:[%s6 + $0x9c] sm:$0xf] %vm2011, %v2000
  %2052 = vst.msk [vmem:[%s6 + $0xa0] sm:$0xf] %vm2011, %v2001
  %2053 = vst.msk [vmem:[%s6 + $0xa4] sm:$0xf] %vm2011, %v2002
  %2054 = vst.msk [vmem:[%s6 + $0xa8] sm:$0xf] %vm2011, %v2003
  %2055 = vst.msk [vmem:[%s6 + $0xac] sm:$0xf] %vm2011, %v2004
  %2056 = vst.msk [vmem:[%s6 + $0xb0] sm:$0xf] %vm2011, %v2005
  %2057 = vst.msk [vmem:[%s6 + $0xb4] sm:$0xf] %vm2011, %v2006
  %2058 = vst.msk [vmem:[%s6 + $0xb8] sm:$0xf] %vm2011, %v2007
  %2059 = vst.msk [vmem:[%s6 + $0xbc] sm:$0xf] %vm2011, %v2008
  %2060 = vst.msk [vmem:[%s6 + $0xc0] sm:$0xf] %vm2011, %v2009
  %2061 = vst.msk [vmem:[%s6 + $0xc4] sm:$0xf] %vm2011, %v2010
  // Predicated region
  $region26: #{net_forward.3} parent=0 // pred_check
    _
  $region27: #{net_forward.3} parent=0 // pred_check_branch
    %2063 = sbr.rel (0) target = $region29
  $region28: #{net_forward.3} parent=0 // pred_region
    _
  $region29: #{net_forward.3} parent=0 // pred_fallthru
    _
  // Predicated region
  $region30: #{net_forward.3} parent=0 // pred_check
    _
  $region31: #{net_forward.3} parent=0 // pred_check_branch
    %2065 = sbr.rel (0) target = $region33
  $region32: #{net_forward.3} parent=0 // pred_region
    _
  $region33: #{net_forward.3} parent=0 // pred_fallthru
    _

// kernel: net_forward.4
$region0: #{net_forward.4}
  #allocation0 [shape = 'u32[]', space=smem, size = 0x4, offset = 0x4, fixed_abs, tag = 'smem constant byte address 0x4 - core index']
  #allocation1 [shape = 'u32[72,128]{1,0:T(1,128)}', space=vmem, size = 0x9000, scoped, tag = 'internal scratch']
  %s0 = inlined_call_operand.vmem [shape: bf16[64,500], index: 0, kind: input, shape index: {}]
  %s1 = inlined_call_operand.vmem [shape: bf16[64,500], index: 1, kind: input, shape index: {}]
  %s2 = inlined_call_operand.vmem [shape: bf16[64,500], index: 2, kind: input, shape index: {}]
  %s3 = inlined_call_operand.vmem [shape: bf16[64,500], index: 3, kind: input, shape index: {}]
  %s4 = inlined_call_operand.vmem [shape: bf16[500,16], index: 4, kind: input, shape index: {}]
  %s5 = inlined_call_operand.vmem [shape: f32[1,16], index: 5, kind: input, shape index: {}]
  %s6 = inlined_call_operand.vmem [shape: bf16[64,16], index: 6, kind: output, shape index: {}]
  %s7 = sld [smem:[#allocation0]]
  $region34: #{net_forward.4} parent=0
    _
  %s9 = ssub.s32 1, %s7
  %s10 = scalar_select 0, %s9, %s7
  // Predicated region
  $region2: #{net_forward.4} parent=0 // pred_check
    _
  $region3: #{net_forward.4} parent=0 // pred_check_branch
    %12 = sbr.rel (0) target = $region5
  $region4: #{net_forward.4} parent=0 // pred_region
    _
  $region5: #{net_forward.4} parent=0 // pred_fallthru
    _
  // Predicated region
  $region6: #{net_forward.4} parent=0 // pred_check
    _
  $region7: #{net_forward.4} parent=0 // pred_check_branch
    %14 = sbr.rel (0) target = $region9
  $region8: #{net_forward.4} parent=0 // pred_region
    _
  $region9: #{net_forward.4} parent=0 // pred_fallthru
    _
  // Predicated region
  $region10: #{net_forward.4} parent=0 // pred_check
    _
  $region11: #{net_forward.4} parent=0 // pred_check_branch
    %16 = sbr.rel (0) target = $region13
  $region12: #{net_forward.4} parent=0 // pred_region
    _
  $region13: #{net_forward.4} parent=0 // pred_fallthru
    _
  // Predicated region
  $region14: #{net_forward.4} parent=0 // pred_check
    _
  $region15: #{net_forward.4} parent=0 // pred_check_branch
    %18 = sbr.rel (0) target = $region17
  $region16: #{net_forward.4} parent=0 // pred_region
    _
  $region17: #{net_forward.4} parent=0 // pred_fallthru
    _
  // Predicated region
  $region18: #{net_forward.4} parent=0 // pred_check
    _
  $region19: #{net_forward.4} parent=0 // pred_check_branch
    %20 = sbr.rel (0) target = $region21
  $region20: #{net_forward.4} parent=0 // pred_region
    _
  $region21: #{net_forward.4} parent=0 // pred_fallthru
    _
  // Predicated region
  $region22: #{net_forward.4} parent=0 // pred_check
    _
  $region23: #{net_forward.4} parent=0 // pred_check_branch
    %22 = sbr.rel (0) target = $region25
  $region24: #{net_forward.4} parent=0 // pred_region
    _
  $region25: #{net_forward.4} parent=0 // pred_fallthru
    _
  %v23 = vld [vmem:[%s4] sm:$0xf]
  %v24 = vld [vmem:[%s4 + $0x4] sm:$0xf]
  %v25 = vld [vmem:[%s4 + $0x8] sm:$0xf]
  %v26 = vld [vmem:[%s4 + $0xc] sm:$0xf]
  %v27 = vld [vmem:[%s4 + $0x10] sm:$0xf]
  %v28 = vld [vmem:[%s4 + $0x14] sm:$0xf]
  %v29 = vld [vmem:[%s4 + $0x18] sm:$0xf]
  %v30 = vld [vmem:[%s4 + $0x1c] sm:$0xf]
  %v31 = vld [vmem:[%s4 + $0x20] sm:$0xf]
  %v32 = vld [vmem:[%s4 + $0x24] sm:$0xf]
  %v33 = vld [vmem:[%s4 + $0x28] sm:$0xf]
  %v34 = vld [vmem:[%s4 + $0x2c] sm:$0xf]
  %v35 = vld [vmem:[%s4 + $0x30] sm:$0xf]
  %v36 = vld [vmem:[%s4 + $0x34] sm:$0xf]
  %v37 = vld [vmem:[%s4 + $0x38] sm:$0xf]
  %v38 = vld [vmem:[%s4 + $0x3c] sm:$0xf]
  %v39 = vld [vmem:[%s4 + $0x40] sm:$0xf]
  %v40 = vld [vmem:[%s4 + $0x44] sm:$0xf]
  %v41 = vld [vmem:[%s4 + $0x48] sm:$0xf]
  %v42 = vld [vmem:[%s4 + $0x4c] sm:$0xf]
  %v43 = vld [vmem:[%s4 + $0x50] sm:$0xf]
  %v44 = vld [vmem:[%s4 + $0x54] sm:$0xf]
  %v45 = vld [vmem:[%s4 + $0x58] sm:$0xf]
  %v46 = vld [vmem:[%s4 + $0x5c] sm:$0xf]
  %v47 = vld [vmem:[%s4 + $0x60] sm:$0xf]
  %v48 = vld [vmem:[%s4 + $0x64] sm:$0xf]
  %v49 = vld [vmem:[%s4 + $0x68] sm:$0xf]
  %v50 = vld [vmem:[%s4 + $0x6c] sm:$0xf]
  %v51 = vld [vmem:[%s4 + $0x70] sm:$0xf]
  %v52 = vld [vmem:[%s4 + $0x74] sm:$0xf]
  %v53 = vld [vmem:[%s4 + $0x78] sm:$0xf]
  %v54 = vld [vmem:[%s4 + $0x7c] sm:$0xf]
  %v55 = vld [vmem:[%s4 + $0x80] sm:$0xf]
  %v56 = vld [vmem:[%s4 + $0x84] sm:$0xf]
  %v57 = vld [vmem:[%s4 + $0x88] sm:$0xf]
  %v58 = vld [vmem:[%s4 + $0x8c] sm:$0xf]
  %v59 = vld [vmem:[%s4 + $0x90] sm:$0xf]
  %v60 = vld [vmem:[%s4 + $0x94] sm:$0xf]
  %v61 = vld [vmem:[%s4 + $0x98] sm:$0xf]
  %v62 = vld [vmem:[%s4 + $0x9c] sm:$0xf]
  %v63 = vld [vmem:[%s4 + $0xa0] sm:$0xf]
  %v64 = vld [vmem:[%s4 + $0xa4] sm:$0xf]
  %v65 = vld [vmem:[%s4 + $0xa8] sm:$0xf]
  %v66 = vld [vmem:[%s4 + $0xac] sm:$0xf]
  %v67 = vld [vmem:[%s4 + $0xb0] sm:$0xf]
  %v68 = vld [vmem:[%s4 + $0xb4] sm:$0xf]
  %v69 = vld [vmem:[%s4 + $0xb8] sm:$0xf]
  %v70 = vld [vmem:[%s4 + $0xbc] sm:$0xf]
  %v71 = vld [vmem:[%s4 + $0xc0] sm:$0xf]
  %v72 = vld [vmem:[%s4 + $0xc4] sm:$0xf]
  %v73 = vld [vmem:[%s4 + $0xc8] sm:$0xf]
  %v74 = vld [vmem:[%s4 + $0xcc] sm:$0xf]
  %v75 = vld [vmem:[%s4 + $0xd0] sm:$0xf]
  %v76 = vld [vmem:[%s4 + $0xd4] sm:$0xf]
  %v77 = vld [vmem:[%s4 + $0xd8] sm:$0xf]
  %v78 = vld [vmem:[%s4 + $0xdc] sm:$0xf]
  %v79 = vld [vmem:[%s4 + $0xe0] sm:$0xf]
  %v80 = vld [vmem:[%s4 + $0xe4] sm:$0xf]
  %v81 = vld [vmem:[%s4 + $0xe8] sm:$0xf]
  %v82 = vld [vmem:[%s4 + $0xec] sm:$0xf]
  %v83 = vld [vmem:[%s4 + $0xf0] sm:$0xf]
  %v84 = vld [vmem:[%s4 + $0xf4] sm:$0xf]
  %v85 = vld [vmem:[%s4 + $0xf8] sm:$0x3]
  %v86 = vld [vmem:[%s5] sm:$0x1]
  %v87 = vld [vmem:[%s0] sm:$0xff]
  %v88 = vld [vmem:[%s0 + $0x8] sm:$0xff]
  %v89 = vld [vmem:[%s0 + $0x10] sm:$0xff]
  %v90 = vld [vmem:[%s0 + $0x18] sm:$0xff]
  %v91 = vld [vmem:[%s0 + $0x20] sm:$0xff]
  %v92 = vld [vmem:[%s0 + $0x28] sm:$0xff]
  %v93 = vld [vmem:[%s0 + $0x30] sm:$0xff]
  %v94 = vld [vmem:[%s0 + $0x38] sm:$0xff]
  %v95 = vld [vmem:[%s0 + $0x40] sm:$0xff]
  %v96 = vld [vmem:[%s0 + $0x48] sm:$0xff]
  %v97 = vld [vmem:[%s0 + $0x50] sm:$0xff]
  %v98 = vld [vmem:[%s0 + $0x58] sm:$0xff]
  %v99 = vld [vmem:[%s0 + $0x60] sm:$0xff]
  %v100 = vld [vmem:[%s0 + $0x68] sm:$0xff]
  %v101 = vld [vmem:[%s0 + $0x70] sm:$0xff]
  %v102 = vld [vmem:[%s0 + $0x78] sm:$0xff]
  %v104 = vperm.slane %v86, 0
  %v122 = vunpack.c.l.b16 %v87
  %v123 = vunpack.c.h.b16 %v87
  %v124 = vunpack.c.l.b16 %v88
  %v125 = vunpack.c.h.b16 %v88
  %v126 = vunpack.c.l.b16 %v89
  %v127 = vunpack.c.h.b16 %v89
  %v128 = vunpack.c.l.b16 %v90
  %v129 = vunpack.c.h.b16 %v90
  %v130 = vunpack.c.l.b16 %v91
  %v131 = vunpack.c.h.b16 %v91
  %v132 = vunpack.c.l.b16 %v92
  %v133 = vunpack.c.h.b16 %v92
  %v134 = vunpack.c.l.b16 %v93
  %v135 = vunpack.c.h.b16 %v93
  %v136 = vunpack.c.l.b16 %v94
  %v137 = vunpack.c.h.b16 %v94
  %v138 = vunpack.c.l.b16 %v95
  %v139 = vunpack.c.h.b16 %v95
  %v140 = vunpack.c.l.b16 %v96
  %v141 = vunpack.c.h.b16 %v96
  %v142 = vunpack.c.l.b16 %v97
  %v143 = vunpack.c.h.b16 %v97
  %v144 = vunpack.c.l.b16 %v98
  %v145 = vunpack.c.h.b16 %v98
  %v146 = vunpack.c.l.b16 %v99
  %v147 = vunpack.c.h.b16 %v99
  %v148 = vunpack.c.l.b16 %v100
  %v149 = vunpack.c.h.b16 %v100
  %v150 = vunpack.c.l.b16 %v101
  %v151 = vunpack.c.h.b16 %v101
  %v152 = vunpack.c.l.b16 %v102
  %v153 = vunpack.c.h.b16 %v102
  %v154 = vpack.c.b16 %v126, %v122
  %v155 = vpack.c.b16 %v127, %v123
  %v156 = vpack.c.b16 %v128, %v124
  %v157 = vpack.c.b16 %v129, %v125
  %v158 = vpack.c.b16 %v134, %v130
  %v159 = vpack.c.b16 %v135, %v131
  %v160 = vpack.c.b16 %v136, %v132
  %v161 = vpack.c.b16 %v137, %v133
  %v162 = vpack.c.b16 %v142, %v138
  %v163 = vpack.c.b16 %v143, %v139
  %v164 = vpack.c.b16 %v144, %v140
  %v165 = vpack.c.b16 %v145, %v141
  %v166 = vpack.c.b16 %v150, %v146
  %v167 = vpack.c.b16 %v151, %v147
  %v168 = vpack.c.b16 %v152, %v148
  %v169 = vpack.c.b16 %v153, %v149
  %v245 = vunpack.c.l.b16 %v23
  %v246 = vunpack.c.l.b16 %v24
  %v247 = vunpack.c.l.b16 %v25
  %v248 = vunpack.c.l.b16 %v26
  %v249 = vunpack.c.l.b16 %v27
  %v250 = vunpack.c.l.b16 %v28
  %v251 = vunpack.c.l.b16 %v29
  %v252 = vunpack.c.l.b16 %v30
  %v253 = vunpack.c.l.b16 %v31
  %v254 = vunpack.c.l.b16 %v32
  %v255 = vunpack.c.l.b16 %v33
  %v256 = vunpack.c.l.b16 %v34
  %v257 = vunpack.c.l.b16 %v35
  %v258 = vunpack.c.l.b16 %v36
  %v259 = vunpack.c.l.b16 %v37
  %v260 = vunpack.c.l.b16 %v38
  %v261 = vunpack.c.l.b16 %v39
  %v262 = vunpack.c.l.b16 %v40
  %v263 = vunpack.c.l.b16 %v41
  %v264 = vunpack.c.l.b16 %v42
  %v265 = vunpack.c.l.b16 %v43
  %v266 = vunpack.c.l.b16 %v44
  %v267 = vunpack.c.l.b16 %v45
  %v268 = vunpack.c.l.b16 %v46
  %v269 = vunpack.c.l.b16 %v47
  %v270 = vunpack.c.l.b16 %v48
  %v271 = vunpack.c.l.b16 %v49
  %v272 = vunpack.c.l.b16 %v50
  %v273 = vunpack.c.l.b16 %v51
  %v274 = vunpack.c.l.b16 %v52
  %v275 = vunpack.c.l.b16 %v53
  %v276 = vunpack.c.l.b16 %v54
  %v277 = vunpack.c.l.b16 %v55
  %v278 = vunpack.c.l.b16 %v56
  %v279 = vunpack.c.l.b16 %v57
  %v280 = vunpack.c.l.b16 %v58
  %v281 = vunpack.c.l.b16 %v59
  %v282 = vunpack.c.l.b16 %v60
  %v283 = vunpack.c.l.b16 %v61
  %v284 = vunpack.c.l.b16 %v62
  %v285 = vunpack.c.l.b16 %v63
  %v286 = vunpack.c.l.b16 %v64
  %v287 = vunpack.c.l.b16 %v65
  %v288 = vunpack.c.l.b16 %v66
  %v289 = vunpack.c.l.b16 %v67
  %v290 = vunpack.c.l.b16 %v68
  %v291 = vunpack.c.l.b16 %v69
  %v292 = vunpack.c.l.b16 %v70
  %v293 = vunpack.c.l.b16 %v71
  %v294 = vunpack.c.l.b16 %v72
  %v295 = vunpack.c.l.b16 %v73
  %v296 = vunpack.c.l.b16 %v74
  %v297 = vunpack.c.l.b16 %v75
  %v298 = vunpack.c.l.b16 %v76
  %v299 = vunpack.c.l.b16 %v77
  %v300 = vunpack.c.l.b16 %v78
  %v301 = vunpack.c.l.b16 %v79
  %v302 = vunpack.c.l.b16 %v80
  %v303 = vunpack.c.l.b16 %v81
  %v304 = vunpack.c.l.b16 %v82
  %v305 = vunpack.c.l.b16 %v83
  %v306 = vunpack.c.l.b16 %v84
  %v307 = vunpack.c.l.b16 %v85
  %v308 = vpack.c.b16 %v246, %v245
  %v309 = vpack.c.b16 %v248, %v247
  %v310 = vpack.c.b16 %v250, %v249
  %v311 = vpack.c.b16 %v252, %v251
  %v312 = vpack.c.b16 %v254, %v253
  %v313 = vpack.c.b16 %v256, %v255
  %v314 = vpack.c.b16 %v258, %v257
  %v315 = vpack.c.b16 %v260, %v259
  %v316 = vpack.c.b16 %v262, %v261
  %v317 = vpack.c.b16 %v264, %v263
  %v318 = vpack.c.b16 %v266, %v265
  %v319 = vpack.c.b16 %v268, %v267
  %v320 = vpack.c.b16 %v270, %v269
  %v321 = vpack.c.b16 %v272, %v271
  %v322 = vpack.c.b16 %v274, %v273
  %v323 = vpack.c.b16 %v276, %v275
  %v324 = vpack.c.b16 %v278, %v277
  %v325 = vpack.c.b16 %v280, %v279
  %v326 = vpack.c.b16 %v282, %v281
  %v327 = vpack.c.b16 %v284, %v283
  %v328 = vpack.c.b16 %v286, %v285
  %v329 = vpack.c.b16 %v288, %v287
  %v330 = vpack.c.b16 %v290, %v289
  %v331 = vpack.c.b16 %v292, %v291
  %v332 = vpack.c.b16 %v294, %v293
  %v333 = vpack.c.b16 %v296, %v295
  %v334 = vpack.c.b16 %v298, %v297
  %v335 = vpack.c.b16 %v300, %v299
  %v336 = vpack.c.b16 %v302, %v301
  %v337 = vpack.c.b16 %v304, %v303
  %v338 = vpack.c.b16 %v306, %v305
  %v339 = vpack.c.b16 %v307, %v307
  %vm371 = vcmask 949248
  %v373 = vsel %vm371, %v157, 0
  %v376 = vsel %vm371, %v161, 0
  %v379 = vsel %vm371, %v165, 0
  %v382 = vsel %vm371, %v169, 0
  %vm384 = vcmask 1041408
  %v386 = vsel %vm384, %v339, 0
  %388 = vmatpush.bf16.msra.mxu0 %v315
  %389 = vmatpush.bf16.msra.mxu0 %v314
  %390 = vmatpush.bf16.msra.mxu0 %v313
  %391 = vmatpush.bf16.msra.mxu0 %v312
  %392 = vmatpush.bf16.msra.mxu0 %v311
  %393 = vmatpush.bf16.msra.mxu0 %v310
  %394 = vmatpush.bf16.msra.mxu0 %v309
  %395 = vmatpush.bf16.msra.mxu0 %v308
  %396 = vmatmul.bf16.gmra.mxu0 %v154
  %v397 = vpop.f32.mrf.mxu0
  %v398 = vadd.f32 %v104, %v397
  %v399 = vpop.f32.mrf.mxu0
  %v400 = vadd.f32 %v104, %v399
  %401 = vmatmul.bf16.gmra.mxu0 %v158
  %v402 = vpop.f32.mrf.mxu0
  %v403 = vadd.f32 %v104, %v402
  %v404 = vpop.f32.mrf.mxu0
  %v405 = vadd.f32 %v104, %v404
  %406 = vmatmul.bf16.gmra.mxu0 %v162
  %v407 = vpop.f32.mrf.mxu0
  %v408 = vadd.f32 %v104, %v407
  %v409 = vpop.f32.mrf.mxu0
  %v410 = vadd.f32 %v104, %v409
  %411 = vmatmul.bf16.gmra.mxu0 %v166
  %v412 = vpop.f32.mrf.mxu0
  %v413 = vadd.f32 %v104, %v412
  %v414 = vpop.f32.mrf.mxu0
  %v415 = vadd.f32 %v104, %v414
  %416 = vdwg.mxu0
  %417 = vmatpush.bf16.msra.mxu0 %v323
  %418 = vmatpush.bf16.msra.mxu0 %v322
  %419 = vmatpush.bf16.msra.mxu0 %v321
  %420 = vmatpush.bf16.msra.mxu0 %v320
  %421 = vmatpush.bf16.msra.mxu0 %v319
  %422 = vmatpush.bf16.msra.mxu0 %v318
  %423 = vmatpush.bf16.msra.mxu0 %v317
  %424 = vmatpush.bf16.msra.mxu0 %v316
  %425 = vmatmul.bf16.gmra.mxu0 %v155
  %v426 = vpop.f32.mrf.mxu0
  %v427 = vadd.f32 %v398, %v426
  %v428 = vpop.f32.mrf.mxu0
  %v429 = vadd.f32 %v400, %v428
  %430 = vmatmul.bf16.gmra.mxu0 %v159
  %v431 = vpop.f32.mrf.mxu0
  %v432 = vadd.f32 %v403, %v431
  %v433 = vpop.f32.mrf.mxu0
  %v434 = vadd.f32 %v405, %v433
  %435 = vmatmul.bf16.gmra.mxu0 %v163
  %v436 = vpop.f32.mrf.mxu0
  %v437 = vadd.f32 %v408, %v436
  %v438 = vpop.f32.mrf.mxu0
  %v439 = vadd.f32 %v410, %v438
  %440 = vmatmul.bf16.gmra.mxu0 %v167
  %v441 = vpop.f32.mrf.mxu0
  %v442 = vadd.f32 %v413, %v441
  %v443 = vpop.f32.mrf.mxu0
  %v444 = vadd.f32 %v415, %v443
  %445 = vdwg.mxu0
  %446 = vmatpush.bf16.msra.mxu0 %v331
  %447 = vmatpush.bf16.msra.mxu0 %v330
  %448 = vmatpush.bf16.msra.mxu0 %v329
  %449 = vmatpush.bf16.msra.mxu0 %v328
  %450 = vmatpush.bf16.msra.mxu0 %v327
  %451 = vmatpush.bf16.msra.mxu0 %v326
  %452 = vmatpush.bf16.msra.mxu0 %v325
  %453 = vmatpush.bf16.msra.mxu0 %v324
  %454 = vmatmul.bf16.gmra.mxu0 %v156
  %v455 = vpop.f32.mrf.mxu0
  %v456 = vadd.f32 %v427, %v455
  %v457 = vpop.f32.mrf.mxu0
  %v458 = vadd.f32 %v429, %v457
  %459 = vmatmul.bf16.gmra.mxu0 %v160
  %v460 = vpop.f32.mrf.mxu0
  %v461 = vadd.f32 %v432, %v460
  %v462 = vpop.f32.mrf.mxu0
  %v463 = vadd.f32 %v434, %v462
  %464 = vmatmul.bf16.gmra.mxu0 %v164
  %v465 = vpop.f32.mrf.mxu0
  %v466 = vadd.f32 %v437, %v465
  %v467 = vpop.f32.mrf.mxu0
  %v468 = vadd.f32 %v439, %v467
  %469 = vmatmul.bf16.gmra.mxu0 %v168
  %v470 = vpop.f32.mrf.mxu0
  %v471 = vadd.f32 %v442, %v470
  %v472 = vpop.f32.mrf.mxu0
  %v473 = vadd.f32 %v444, %v472
  %474 = vdwg.mxu0
  %475 = vmatpush.bf16.msra.mxu0 %v386
  %476 = vmatpush.bf16.msra.mxu0 %v338
  %477 = vmatpush.bf16.msra.mxu0 %v337
  %478 = vmatpush.bf16.msra.mxu0 %v336
  %479 = vmatpush.bf16.msra.mxu0 %v335
  %480 = vmatpush.bf16.msra.mxu0 %v334
  %481 = vmatpush.bf16.msra.mxu0 %v333
  %482 = vmatpush.bf16.msra.mxu0 %v332
  %483 = vmatmul.bf16.gmra.mxu0 %v373
  %v484 = vpop.f32.mrf.mxu0
  %v485 = vadd.f32 %v456, %v484
  %v486 = vpop.f32.mrf.mxu0
  %v487 = vadd.f32 %v458, %v486
  %488 = vmatmul.bf16.gmra.mxu0 %v376
  %v489 = vpop.f32.mrf.mxu0
  %v490 = vadd.f32 %v461, %v489
  %v491 = vpop.f32.mrf.mxu0
  %v492 = vadd.f32 %v463, %v491
  %493 = vmatmul.bf16.gmra.mxu0 %v379
  %v494 = vpop.f32.mrf.mxu0
  %v495 = vadd.f32 %v466, %v494
  %v496 = vpop.f32.mrf.mxu0
  %v497 = vadd.f32 %v468, %v496
  %498 = vmatmul.bf16.gmra.mxu0 %v382
  %v499 = vpop.f32.mrf.mxu0
  %v500 = vadd.f32 %v471, %v499
  %v501 = vpop.f32.mrf.mxu0
  %v502 = vadd.f32 %v473, %v501
  %503 = vdwg.mxu0
  %v504 = vmax.f32 %v485, 0.0
  %v505 = vmax.f32 %v487, 0.0
  %v506 = vmax.f32 %v490, 0.0
  %v507 = vmax.f32 %v492, 0.0
  %v508 = vmax.f32 %v495, 0.0
  %v509 = vmax.f32 %v497, 0.0
  %v510 = vmax.f32 %v500, 0.0
  %v511 = vmax.f32 %v502, 0.0
  %v512 = vld [vmem:[%s1] sm:$0xff]
  %v513 = vld [vmem:[%s1 + $0x8] sm:$0xff]
  %v514 = vld [vmem:[%s1 + $0x10] sm:$0xff]
  %v515 = vld [vmem:[%s1 + $0x18] sm:$0xff]
  %v516 = vld [vmem:[%s1 + $0x20] sm:$0xff]
  %v517 = vld [vmem:[%s1 + $0x28] sm:$0xff]
  %v518 = vld [vmem:[%s1 + $0x30] sm:$0xff]
  %v519 = vld [vmem:[%s1 + $0x38] sm:$0xff]
  %v520 = vld [vmem:[%s1 + $0x40] sm:$0xff]
  %v521 = vld [vmem:[%s1 + $0x48] sm:$0xff]
  %v522 = vld [vmem:[%s1 + $0x50] sm:$0xff]
  %v523 = vld [vmem:[%s1 + $0x58] sm:$0xff]
  %v524 = vld [vmem:[%s1 + $0x60] sm:$0xff]
  %v525 = vld [vmem:[%s1 + $0x68] sm:$0xff]
  %v526 = vld [vmem:[%s1 + $0x70] sm:$0xff]
  %v527 = vld [vmem:[%s1 + $0x78] sm:$0xff]
  %v544 = vunpack.c.l.b16 %v512
  %v545 = vunpack.c.h.b16 %v512
  %v546 = vunpack.c.l.b16 %v513
  %v547 = vunpack.c.h.b16 %v513
  %v548 = vunpack.c.l.b16 %v514
  %v549 = vunpack.c.h.b16 %v514
  %v550 = vunpack.c.l.b16 %v515
  %v551 = vunpack.c.h.b16 %v515
  %v552 = vunpack.c.l.b16 %v516
  %v553 = vunpack.c.h.b16 %v516
  %v554 = vunpack.c.l.b16 %v517
  %v555 = vunpack.c.h.b16 %v517
  %v556 = vunpack.c.l.b16 %v518
  %v557 = vunpack.c.h.b16 %v518
  %v558 = vunpack.c.l.b16 %v519
  %v559 = vunpack.c.h.b16 %v519
  %v560 = vunpack.c.l.b16 %v520
  %v561 = vunpack.c.h.b16 %v520
  %v562 = vunpack.c.l.b16 %v521
  %v563 = vunpack.c.h.b16 %v521
  %v564 = vunpack.c.l.b16 %v522
  %v565 = vunpack.c.h.b16 %v522
  %v566 = vunpack.c.l.b16 %v523
  %v567 = vunpack.c.h.b16 %v523
  %v568 = vunpack.c.l.b16 %v524
  %v569 = vunpack.c.h.b16 %v524
  %v570 = vunpack.c.l.b16 %v525
  %v571 = vunpack.c.h.b16 %v525
  %v572 = vunpack.c.l.b16 %v526
  %v573 = vunpack.c.h.b16 %v526
  %v574 = vunpack.c.l.b16 %v527
  %v575 = vunpack.c.h.b16 %v527
  %v576 = vpack.c.b16 %v548, %v544
  %v577 = vpack.c.b16 %v549, %v545
  %v578 = vpack.c.b16 %v550, %v546
  %v579 = vpack.c.b16 %v551, %v547
  %v580 = vpack.c.b16 %v556, %v552
  %v581 = vpack.c.b16 %v557, %v553
  %v582 = vpack.c.b16 %v558, %v554
  %v583 = vpack.c.b16 %v559, %v555
  %v584 = vpack.c.b16 %v564, %v560
  %v585 = vpack.c.b16 %v565, %v561
  %v586 = vpack.c.b16 %v566, %v562
  %v587 = vpack.c.b16 %v567, %v563
  %v588 = vpack.c.b16 %v572, %v568
  %v589 = vpack.c.b16 %v573, %v569
  %v590 = vpack.c.b16 %v574, %v570
  %v591 = vpack.c.b16 %v575, %v571
  %v605 = vsel %vm371, %v579, 0
  %v608 = vsel %vm371, %v583, 0
  %v611 = vsel %vm371, %v587, 0
  %v614 = vsel %vm371, %v591, 0
  %616 = vmatpush.bf16.msra.mxu0 %v315
  %617 = vmatpush.bf16.msra.mxu0 %v314
  %618 = vmatpush.bf16.msra.mxu0 %v313
  %619 = vmatpush.bf16.msra.mxu0 %v312
  %620 = vmatpush.bf16.msra.mxu0 %v311
  %621 = vmatpush.bf16.msra.mxu0 %v310
  %622 = vmatpush.bf16.msra.mxu0 %v309
  %623 = vmatpush.bf16.msra.mxu0 %v308
  %624 = vmatmul.bf16.gmra.mxu0 %v576
  %v625 = vpop.f32.mrf.mxu0
  %v626 = vadd.f32 %v104, %v625
  %v627 = vpop.f32.mrf.mxu0
  %v628 = vadd.f32 %v104, %v627
  %629 = vmatmul.bf16.gmra.mxu0 %v580
  %v630 = vpop.f32.mrf.mxu0
  %v631 = vadd.f32 %v104, %v630
  %v632 = vpop.f32.mrf.mxu0
  %v633 = vadd.f32 %v104, %v632
  %634 = vmatmul.bf16.gmra.mxu0 %v584
  %v635 = vpop.f32.mrf.mxu0
  %v636 = vadd.f32 %v104, %v635
  %v637 = vpop.f32.mrf.mxu0
  %v638 = vadd.f32 %v104, %v637
  %639 = vmatmul.bf16.gmra.mxu0 %v588
  %v640 = vpop.f32.mrf.mxu0
  %v641 = vadd.f32 %v104, %v640
  %v642 = vpop.f32.mrf.mxu0
  %v643 = vadd.f32 %v104, %v642
  %644 = vdwg.mxu0
  %645 = vmatpush.bf16.msra.mxu0 %v323
  %646 = vmatpush.bf16.msra.mxu0 %v322
  %647 = vmatpush.bf16.msra.mxu0 %v321
  %648 = vmatpush.bf16.msra.mxu0 %v320
  %649 = vmatpush.bf16.msra.mxu0 %v319
  %650 = vmatpush.bf16.msra.mxu0 %v318
  %651 = vmatpush.bf16.msra.mxu0 %v317
  %652 = vmatpush.bf16.msra.mxu0 %v316
  %653 = vmatmul.bf16.gmra.mxu0 %v577
  %v654 = vpop.f32.mrf.mxu0
  %v655 = vadd.f32 %v626, %v654
  %v656 = vpop.f32.mrf.mxu0
  %v657 = vadd.f32 %v628, %v656
  %658 = vmatmul.bf16.gmra.mxu0 %v581
  %v659 = vpop.f32.mrf.mxu0
  %v660 = vadd.f32 %v631, %v659
  %v661 = vpop.f32.mrf.mxu0
  %v662 = vadd.f32 %v633, %v661
  %663 = vmatmul.bf16.gmra.mxu0 %v585
  %v664 = vpop.f32.mrf.mxu0
  %v665 = vadd.f32 %v636, %v664
  %v666 = vpop.f32.mrf.mxu0
  %v667 = vadd.f32 %v638, %v666
  %668 = vmatmul.bf16.gmra.mxu0 %v589
  %v669 = vpop.f32.mrf.mxu0
  %v670 = vadd.f32 %v641, %v669
  %v671 = vpop.f32.mrf.mxu0
  %v672 = vadd.f32 %v643, %v671
  %673 = vdwg.mxu0
  %674 = vmatpush.bf16.msra.mxu0 %v331
  %675 = vmatpush.bf16.msra.mxu0 %v330
  %676 = vmatpush.bf16.msra.mxu0 %v329
  %677 = vmatpush.bf16.msra.mxu0 %v328
  %678 = vmatpush.bf16.msra.mxu0 %v327
  %679 = vmatpush.bf16.msra.mxu0 %v326
  %680 = vmatpush.bf16.msra.mxu0 %v325
  %681 = vmatpush.bf16.msra.mxu0 %v324
  %682 = vmatmul.bf16.gmra.mxu0 %v578
  %v683 = vpop.f32.mrf.mxu0
  %v684 = vadd.f32 %v655, %v683
  %v685 = vpop.f32.mrf.mxu0
  %v686 = vadd.f32 %v657, %v685
  %687 = vmatmul.bf16.gmra.mxu0 %v582
  %v688 = vpop.f32.mrf.mxu0
  %v689 = vadd.f32 %v660, %v688
  %v690 = vpop.f32.mrf.mxu0
  %v691 = vadd.f32 %v662, %v690
  %692 = vmatmul.bf16.gmra.mxu0 %v586
  %v693 = vpop.f32.mrf.mxu0
  %v694 = vadd.f32 %v665, %v693
  %v695 = vpop.f32.mrf.mxu0
  %v696 = vadd.f32 %v667, %v695
  %697 = vmatmul.bf16.gmra.mxu0 %v590
  %v698 = vpop.f32.mrf.mxu0
  %v699 = vadd.f32 %v670, %v698
  %v700 = vpop.f32.mrf.mxu0
  %v701 = vadd.f32 %v672, %v700
  %702 = vdwg.mxu0
  %703 = vmatpush.bf16.msra.mxu0 %v386
  %704 = vmatpush.bf16.msra.mxu0 %v338
  %705 = vmatpush.bf16.msra.mxu0 %v337
  %706 = vmatpush.bf16.msra.mxu0 %v336
  %707 = vmatpush.bf16.msra.mxu0 %v335
  %708 = vmatpush.bf16.msra.mxu0 %v334
  %709 = vmatpush.bf16.msra.mxu0 %v333
  %710 = vmatpush.bf16.msra.mxu0 %v332
  %711 = vmatmul.bf16.gmra.mxu0 %v605
  %v712 = vpop.f32.mrf.mxu0
  %v713 = vadd.f32 %v684, %v712
  %v714 = vpop.f32.mrf.mxu0
  %v715 = vadd.f32 %v686, %v714
  %716 = vmatmul.bf16.gmra.mxu0 %v608
  %v717 = vpop.f32.mrf.mxu0
  %v718 = vadd.f32 %v689, %v717
  %v719 = vpop.f32.mrf.mxu0
  %v720 = vadd.f32 %v691, %v719
  %721 = vmatmul.bf16.gmra.mxu0 %v611
  %v722 = vpop.f32.mrf.mxu0
  %v723 = vadd.f32 %v694, %v722
  %v724 = vpop.f32.mrf.mxu0
  %v725 = vadd.f32 %v696, %v724
  %726 = vmatmul.bf16.gmra.mxu0 %v614
  %v727 = vpop.f32.mrf.mxu0
  %v728 = vadd.f32 %v699, %v727
  %v729 = vpop.f32.mrf.mxu0
  %v730 = vadd.f32 %v701, %v729
  %731 = vdwg.mxu0
  %v732 = vmax.f32 %v713, 0.0
  %v733 = vmax.f32 %v715, 0.0
  %v734 = vmax.f32 %v718, 0.0
  %v735 = vmax.f32 %v720, 0.0
  %v736 = vmax.f32 %v723, 0.0
  %v737 = vmax.f32 %v725, 0.0
  %v738 = vmax.f32 %v728, 0.0
  %v739 = vmax.f32 %v730, 0.0
  %v740 = vmax.f32 %v504, %v732
  %v741 = vmax.f32 %v505, %v733
  %v742 = vmax.f32 %v506, %v734
  %v743 = vmax.f32 %v507, %v735
  %v744 = vmax.f32 %v508, %v736
  %v745 = vmax.f32 %v509, %v737
  %v746 = vmax.f32 %v510, %v738
  %v747 = vmax.f32 %v511, %v739
  %v748 = vld [vmem:[%s2] sm:$0xff]
  %v749 = vld [vmem:[%s2 + $0x8] sm:$0xff]
  %v750 = vld [vmem:[%s2 + $0x10] sm:$0xff]
  %v751 = vld [vmem:[%s2 + $0x18] sm:$0xff]
  %v752 = vld [vmem:[%s2 + $0x20] sm:$0xff]
  %v753 = vld [vmem:[%s2 + $0x28] sm:$0xff]
  %v754 = vld [vmem:[%s2 + $0x30] sm:$0xff]
  %v755 = vld [vmem:[%s2 + $0x38] sm:$0xff]
  %v756 = vld [vmem:[%s2 + $0x40] sm:$0xff]
  %v757 = vld [vmem:[%s2 + $0x48] sm:$0xff]
  %v758 = vld [vmem:[%s2 + $0x50] sm:$0xff]
  %v759 = vld [vmem:[%s2 + $0x58] sm:$0xff]
  %v760 = vld [vmem:[%s2 + $0x60] sm:$0xff]
  %v761 = vld [vmem:[%s2 + $0x68] sm:$0xff]
  %v762 = vld [vmem:[%s2 + $0x70] sm:$0xff]
  %v763 = vld [vmem:[%s2 + $0x78] sm:$0xff]
  %v780 = vunpack.c.l.b16 %v748
  %v781 = vunpack.c.h.b16 %v748
  %v782 = vunpack.c.l.b16 %v749
  %v783 = vunpack.c.h.b16 %v749
  %v784 = vunpack.c.l.b16 %v750
  %v785 = vunpack.c.h.b16 %v750
  %v786 = vunpack.c.l.b16 %v751
  %v787 = vunpack.c.h.b16 %v751
  %v788 = vunpack.c.l.b16 %v752
  %v789 = vunpack.c.h.b16 %v752
  %v790 = vunpack.c.l.b16 %v753
  %v791 = vunpack.c.h.b16 %v753
  %v792 = vunpack.c.l.b16 %v754
  %v793 = vunpack.c.h.b16 %v754
  %v794 = vunpack.c.l.b16 %v755
  %v795 = vunpack.c.h.b16 %v755
  %v796 = vunpack.c.l.b16 %v756
  %v797 = vunpack.c.h.b16 %v756
  %v798 = vunpack.c.l.b16 %v757
  %v799 = vunpack.c.h.b16 %v757
  %v800 = vunpack.c.l.b16 %v758
  %v801 = vunpack.c.h.b16 %v758
  %v802 = vunpack.c.l.b16 %v759
  %v803 = vunpack.c.h.b16 %v759
  %v804 = vunpack.c.l.b16 %v760
  %v805 = vunpack.c.h.b16 %v760
  %v806 = vunpack.c.l.b16 %v761
  %v807 = vunpack.c.h.b16 %v761
  %v808 = vunpack.c.l.b16 %v762
  %v809 = vunpack.c.h.b16 %v762
  %v810 = vunpack.c.l.b16 %v763
  %v811 = vunpack.c.h.b16 %v763
  %v812 = vpack.c.b16 %v784, %v780
  %v813 = vpack.c.b16 %v785, %v781
  %v814 = vpack.c.b16 %v786, %v782
  %v815 = vpack.c.b16 %v787, %v783
  %v816 = vpack.c.b16 %v792, %v788
  %v817 = vpack.c.b16 %v793, %v789
  %v818 = vpack.c.b16 %v794, %v790
  %v819 = vpack.c.b16 %v795, %v791
  %v820 = vpack.c.b16 %v800, %v796
  %v821 = vpack.c.b16 %v801, %v797
  %v822 = vpack.c.b16 %v802, %v798
  %v823 = vpack.c.b16 %v803, %v799
  %v824 = vpack.c.b16 %v808, %v804
  %v825 = vpack.c.b16 %v809, %v805
  %v826 = vpack.c.b16 %v810, %v806
  %v827 = vpack.c.b16 %v811, %v807
  %v841 = vsel %vm371, %v815, 0
  %v844 = vsel %vm371, %v819, 0
  %v847 = vsel %vm371, %v823, 0
  %v850 = vsel %vm371, %v827, 0
  %852 = vmatpush.bf16.msra.mxu0 %v315
  %853 = vmatpush.bf16.msra.mxu0 %v314
  %854 = vmatpush.bf16.msra.mxu0 %v313
  %855 = vmatpush.bf16.msra.mxu0 %v312
  %856 = vmatpush.bf16.msra.mxu0 %v311
  %857 = vmatpush.bf16.msra.mxu0 %v310
  %858 = vmatpush.bf16.msra.mxu0 %v309
  %859 = vmatpush.bf16.msra.mxu0 %v308
  %860 = vmatmul.bf16.gmra.mxu0 %v812
  %v861 = vpop.f32.mrf.mxu0
  %v862 = vadd.f32 %v104, %v861
  %v863 = vpop.f32.mrf.mxu0
  %v864 = vadd.f32 %v104, %v863
  %865 = vmatmul.bf16.gmra.mxu0 %v816
  %v866 = vpop.f32.mrf.mxu0
  %v867 = vadd.f32 %v104, %v866
  %v868 = vpop.f32.mrf.mxu0
  %v869 = vadd.f32 %v104, %v868
  %870 = vmatmul.bf16.gmra.mxu0 %v820
  %v871 = vpop.f32.mrf.mxu0
  %v872 = vadd.f32 %v104, %v871
  %v873 = vpop.f32.mrf.mxu0
  %v874 = vadd.f32 %v104, %v873
  %875 = vmatmul.bf16.gmra.mxu0 %v824
  %v876 = vpop.f32.mrf.mxu0
  %v877 = vadd.f32 %v104, %v876
  %v878 = vpop.f32.mrf.mxu0
  %v879 = vadd.f32 %v104, %v878
  %880 = vdwg.mxu0
  %881 = vmatpush.bf16.msra.mxu0 %v323
  %882 = vmatpush.bf16.msra.mxu0 %v322
  %883 = vmatpush.bf16.msra.mxu0 %v321
  %884 = vmatpush.bf16.msra.mxu0 %v320
  %885 = vmatpush.bf16.msra.mxu0 %v319
  %886 = vmatpush.bf16.msra.mxu0 %v318
  %887 = vmatpush.bf16.msra.mxu0 %v317
  %888 = vmatpush.bf16.msra.mxu0 %v316
  %889 = vmatmul.bf16.gmra.mxu0 %v813
  %v890 = vpop.f32.mrf.mxu0
  %v891 = vadd.f32 %v862, %v890
  %v892 = vpop.f32.mrf.mxu0
  %v893 = vadd.f32 %v864, %v892
  %894 = vmatmul.bf16.gmra.mxu0 %v817
  %v895 = vpop.f32.mrf.mxu0
  %v896 = vadd.f32 %v867, %v895
  %v897 = vpop.f32.mrf.mxu0
  %v898 = vadd.f32 %v869, %v897
  %899 = vmatmul.bf16.gmra.mxu0 %v821
  %v900 = vpop.f32.mrf.mxu0
  %v901 = vadd.f32 %v872, %v900
  %v902 = vpop.f32.mrf.mxu0
  %v903 = vadd.f32 %v874, %v902
  %904 = vmatmul.bf16.gmra.mxu0 %v825
  %v905 = vpop.f32.mrf.mxu0
  %v906 = vadd.f32 %v877, %v905
  %v907 = vpop.f32.mrf.mxu0
  %v908 = vadd.f32 %v879, %v907
  %909 = vdwg.mxu0
  %910 = vmatpush.bf16.msra.mxu0 %v331
  %911 = vmatpush.bf16.msra.mxu0 %v330
  %912 = vmatpush.bf16.msra.mxu0 %v329
  %913 = vmatpush.bf16.msra.mxu0 %v328
  %914 = vmatpush.bf16.msra.mxu0 %v327
  %915 = vmatpush.bf16.msra.mxu0 %v326
  %916 = vmatpush.bf16.msra.mxu0 %v325
  %917 = vmatpush.bf16.msra.mxu0 %v324
  %918 = vmatmul.bf16.gmra.mxu0 %v814
  %v919 = vpop.f32.mrf.mxu0
  %v920 = vadd.f32 %v891, %v919
  %v921 = vpop.f32.mrf.mxu0
  %v922 = vadd.f32 %v893, %v921
  %923 = vmatmul.bf16.gmra.mxu0 %v818
  %v924 = vpop.f32.mrf.mxu0
  %v925 = vadd.f32 %v896, %v924
  %v926 = vpop.f32.mrf.mxu0
  %v927 = vadd.f32 %v898, %v926
  %928 = vmatmul.bf16.gmra.mxu0 %v822
  %v929 = vpop.f32.mrf.mxu0
  %v930 = vadd.f32 %v901, %v929
  %v931 = vpop.f32.mrf.mxu0
  %v932 = vadd.f32 %v903, %v931
  %933 = vmatmul.bf16.gmra.mxu0 %v826
  %v934 = vpop.f32.mrf.mxu0
  %v935 = vadd.f32 %v906, %v934
  %v936 = vpop.f32.mrf.mxu0
  %v937 = vadd.f32 %v908, %v936
  %938 = vdwg.mxu0
  %939 = vmatpush.bf16.msra.mxu0 %v386
  %940 = vmatpush.bf16.msra.mxu0 %v338
  %941 = vmatpush.bf16.msra.mxu0 %v337
  %942 = vmatpush.bf16.msra.mxu0 %v336
  %943 = vmatpush.bf16.msra.mxu0 %v335
  %944 = vmatpush.bf16.msra.mxu0 %v334
  %945 = vmatpush.bf16.msra.mxu0 %v333
  %946 = vmatpush.bf16.msra.mxu0 %v332
  %947 = vmatmul.bf16.gmra.mxu0 %v841
  %v948 = vpop.f32.mrf.mxu0
  %v949 = vadd.f32 %v920, %v948
  %v950 = vpop.f32.mrf.mxu0
  %v951 = vadd.f32 %v922, %v950
  %952 = vmatmul.bf16.gmra.mxu0 %v844
  %v953 = vpop.f32.mrf.mxu0
  %v954 = vadd.f32 %v925, %v953
  %v955 = vpop.f32.mrf.mxu0
  %v956 = vadd.f32 %v927, %v955
  %957 = vmatmul.bf16.gmra.mxu0 %v847
  %v958 = vpop.f32.mrf.mxu0
  %v959 = vadd.f32 %v930, %v958
  %v960 = vpop.f32.mrf.mxu0
  %v961 = vadd.f32 %v932, %v960
  %962 = vmatmul.bf16.gmra.mxu0 %v850
  %v963 = vpop.f32.mrf.mxu0
  %v964 = vadd.f32 %v935, %v963
  %v965 = vpop.f32.mrf.mxu0
  %v966 = vadd.f32 %v937, %v965
  %967 = vdwg.mxu0
  %v968 = vmax.f32 %v949, 0.0
  %v969 = vmax.f32 %v951, 0.0
  %v970 = vmax.f32 %v954, 0.0
  %v971 = vmax.f32 %v956, 0.0
  %v972 = vmax.f32 %v959, 0.0
  %v973 = vmax.f32 %v961, 0.0
  %v974 = vmax.f32 %v964, 0.0
  %v975 = vmax.f32 %v966, 0.0
  %v976 = vmax.f32 %v740, %v968
  %v977 = vmax.f32 %v741, %v969
  %v978 = vmax.f32 %v742, %v970
  %v979 = vmax.f32 %v743, %v971
  %v980 = vmax.f32 %v744, %v972
  %v981 = vmax.f32 %v745, %v973
  %v982 = vmax.f32 %v746, %v974
  %v983 = vmax.f32 %v747, %v975
  %v984 = vld [vmem:[%s3] sm:$0xff]
  %v985 = vld [vmem:[%s3 + $0x8] sm:$0xff]
  %v986 = vld [vmem:[%s3 + $0x10] sm:$0xff]
  %v987 = vld [vmem:[%s3 + $0x18] sm:$0xff]
  %v988 = vld [vmem:[%s3 + $0x20] sm:$0xff]
  %v989 = vld [vmem:[%s3 + $0x28] sm:$0xff]
  %v990 = vld [vmem:[%s3 + $0x30] sm:$0xff]
  %v991 = vld [vmem:[%s3 + $0x38] sm:$0xff]
  %v992 = vld [vmem:[%s3 + $0x40] sm:$0xff]
  %v993 = vld [vmem:[%s3 + $0x48] sm:$0xff]
  %v994 = vld [vmem:[%s3 + $0x50] sm:$0xff]
  %v995 = vld [vmem:[%s3 + $0x58] sm:$0xff]
  %v996 = vld [vmem:[%s3 + $0x60] sm:$0xff]
  %v997 = vld [vmem:[%s3 + $0x68] sm:$0xff]
  %v998 = vld [vmem:[%s3 + $0x70] sm:$0xff]
  %v999 = vld [vmem:[%s3 + $0x78] sm:$0xff]
  %v1016 = vunpack.c.l.b16 %v984
  %v1017 = vunpack.c.h.b16 %v984
  %v1018 = vunpack.c.l.b16 %v985
  %v1019 = vunpack.c.h.b16 %v985
  %v1020 = vunpack.c.l.b16 %v986
  %v1021 = vunpack.c.h.b16 %v986
  %v1022 = vunpack.c.l.b16 %v987
  %v1023 = vunpack.c.h.b16 %v987
  %v1024 = vunpack.c.l.b16 %v988
  %v1025 = vunpack.c.h.b16 %v988
  %v1026 = vunpack.c.l.b16 %v989
  %v1027 = vunpack.c.h.b16 %v989
  %v1028 = vunpack.c.l.b16 %v990
  %v1029 = vunpack.c.h.b16 %v990
  %v1030 = vunpack.c.l.b16 %v991
  %v1031 = vunpack.c.h.b16 %v991
  %v1032 = vunpack.c.l.b16 %v992
  %v1033 = vunpack.c.h.b16 %v992
  %v1034 = vunpack.c.l.b16 %v993
  %v1035 = vunpack.c.h.b16 %v993
  %v1036 = vunpack.c.l.b16 %v994
  %v1037 = vunpack.c.h.b16 %v994
  %v1038 = vunpack.c.l.b16 %v995
  %v1039 = vunpack.c.h.b16 %v995
  %v1040 = vunpack.c.l.b16 %v996
  %v1041 = vunpack.c.h.b16 %v996
  %v1042 = vunpack.c.l.b16 %v997
  %v1043 = vunpack.c.h.b16 %v997
  %v1044 = vunpack.c.l.b16 %v998
  %v1045 = vunpack.c.h.b16 %v998
  %v1046 = vunpack.c.l.b16 %v999
  %v1047 = vunpack.c.h.b16 %v999
  %v1048 = vpack.c.b16 %v1020, %v1016
  %v1049 = vpack.c.b16 %v1021, %v1017
  %v1050 = vpack.c.b16 %v1022, %v1018
  %v1051 = vpack.c.b16 %v1023, %v1019
  %v1052 = vpack.c.b16 %v1028, %v1024
  %v1053 = vpack.c.b16 %v1029, %v1025
  %v1054 = vpack.c.b16 %v1030, %v1026
  %v1055 = vpack.c.b16 %v1031, %v1027
  %v1056 = vpack.c.b16 %v1036, %v1032
  %v1057 = vpack.c.b16 %v1037, %v1033
  %v1058 = vpack.c.b16 %v1038, %v1034
  %v1059 = vpack.c.b16 %v1039, %v1035
  %v1060 = vpack.c.b16 %v1044, %v1040
  %v1061 = vpack.c.b16 %v1045, %v1041
  %v1062 = vpack.c.b16 %v1046, %v1042
  %v1063 = vpack.c.b16 %v1047, %v1043
  %v1077 = vsel %vm371, %v1051, 0
  %v1080 = vsel %vm371, %v1055, 0
  %v1083 = vsel %vm371, %v1059, 0
  %v1086 = vsel %vm371, %v1063, 0
  %1088 = vmatpush.bf16.msra.mxu0 %v315
  %1089 = vmatpush.bf16.msra.mxu0 %v314
  %1090 = vmatpush.bf16.msra.mxu0 %v313
  %1091 = vmatpush.bf16.msra.mxu0 %v312
  %1092 = vmatpush.bf16.msra.mxu0 %v311
  %1093 = vmatpush.bf16.msra.mxu0 %v310
  %1094 = vmatpush.bf16.msra.mxu0 %v309
  %1095 = vmatpush.bf16.msra.mxu0 %v308
  %1096 = vmatmul.bf16.gmra.mxu0 %v1048
  %v1097 = vpop.f32.mrf.mxu0
  %v1098 = vadd.f32 %v104, %v1097
  %v1099 = vpop.f32.mrf.mxu0
  %v1100 = vadd.f32 %v104, %v1099
  %1101 = vmatmul.bf16.gmra.mxu0 %v1052
  %v1102 = vpop.f32.mrf.mxu0
  %v1103 = vadd.f32 %v104, %v1102
  %v1104 = vpop.f32.mrf.mxu0
  %v1105 = vadd.f32 %v104, %v1104
  %1106 = vmatmul.bf16.gmra.mxu0 %v1056
  %v1107 = vpop.f32.mrf.mxu0
  %v1108 = vadd.f32 %v104, %v1107
  %v1109 = vpop.f32.mrf.mxu0
  %v1110 = vadd.f32 %v104, %v1109
  %1111 = vmatmul.bf16.gmra.mxu0 %v1060
  %v1112 = vpop.f32.mrf.mxu0
  %v1113 = vadd.f32 %v104, %v1112
  %v1114 = vpop.f32.mrf.mxu0
  %v1115 = vadd.f32 %v104, %v1114
  %1116 = vdwg.mxu0
  %1117 = vmatpush.bf16.msra.mxu0 %v323
  %1118 = vmatpush.bf16.msra.mxu0 %v322
  %1119 = vmatpush.bf16.msra.mxu0 %v321
  %1120 = vmatpush.bf16.msra.mxu0 %v320
  %1121 = vmatpush.bf16.msra.mxu0 %v319
  %1122 = vmatpush.bf16.msra.mxu0 %v318
  %1123 = vmatpush.bf16.msra.mxu0 %v317
  %1124 = vmatpush.bf16.msra.mxu0 %v316
  %1125 = vmatmul.bf16.gmra.mxu0 %v1049
  %v1126 = vpop.f32.mrf.mxu0
  %v1127 = vadd.f32 %v1098, %v1126
  %v1128 = vpop.f32.mrf.mxu0
  %v1129 = vadd.f32 %v1100, %v1128
  %1130 = vmatmul.bf16.gmra.mxu0 %v1053
  %v1131 = vpop.f32.mrf.mxu0
  %v1132 = vadd.f32 %v1103, %v1131
  %v1133 = vpop.f32.mrf.mxu0
  %v1134 = vadd.f32 %v1105, %v1133
  %1135 = vmatmul.bf16.gmra.mxu0 %v1057
  %v1136 = vpop.f32.mrf.mxu0
  %v1137 = vadd.f32 %v1108, %v1136
  %v1138 = vpop.f32.mrf.mxu0
  %v1139 = vadd.f32 %v1110, %v1138
  %1140 = vmatmul.bf16.gmra.mxu0 %v1061
  %v1141 = vpop.f32.mrf.mxu0
  %v1142 = vadd.f32 %v1113, %v1141
  %v1143 = vpop.f32.mrf.mxu0
  %v1144 = vadd.f32 %v1115, %v1143
  %1145 = vdwg.mxu0
  %1146 = vmatpush.bf16.msra.mxu0 %v331
  %1147 = vmatpush.bf16.msra.mxu0 %v330
  %1148 = vmatpush.bf16.msra.mxu0 %v329
  %1149 = vmatpush.bf16.msra.mxu0 %v328
  %1150 = vmatpush.bf16.msra.mxu0 %v327
  %1151 = vmatpush.bf16.msra.mxu0 %v326
  %1152 = vmatpush.bf16.msra.mxu0 %v325
  %1153 = vmatpush.bf16.msra.mxu0 %v324
  %1154 = vmatmul.bf16.gmra.mxu0 %v1050
  %v1155 = vpop.f32.mrf.mxu0
  %v1156 = vadd.f32 %v1127, %v1155
  %v1157 = vpop.f32.mrf.mxu0
  %v1158 = vadd.f32 %v1129, %v1157
  %1159 = vmatmul.bf16.gmra.mxu0 %v1054
  %v1160 = vpop.f32.mrf.mxu0
  %v1161 = vadd.f32 %v1132, %v1160
  %v1162 = vpop.f32.mrf.mxu0
  %v1163 = vadd.f32 %v1134, %v1162
  %1164 = vmatmul.bf16.gmra.mxu0 %v1058
  %v1165 = vpop.f32.mrf.mxu0
  %v1166 = vadd.f32 %v1137, %v1165
  %v1167 = vpop.f32.mrf.mxu0
  %v1168 = vadd.f32 %v1139, %v1167
  %1169 = vmatmul.bf16.gmra.mxu0 %v1062
  %v1170 = vpop.f32.mrf.mxu0
  %v1171 = vadd.f32 %v1142, %v1170
  %v1172 = vpop.f32.mrf.mxu0
  %v1173 = vadd.f32 %v1144, %v1172
  %1174 = vdwg.mxu0
  %1175 = vmatpush.bf16.msra.mxu0 %v386
  %1176 = vmatpush.bf16.msra.mxu0 %v338
  %1177 = vmatpush.bf16.msra.mxu0 %v337
  %1178 = vmatpush.bf16.msra.mxu0 %v336
  %1179 = vmatpush.bf16.msra.mxu0 %v335
  %1180 = vmatpush.bf16.msra.mxu0 %v334
  %1181 = vmatpush.bf16.msra.mxu0 %v333
  %1182 = vmatpush.bf16.msra.mxu0 %v332
  %1183 = vmatmul.bf16.gmra.mxu0 %v1077
  %v1184 = vpop.f32.mrf.mxu0
  %v1185 = vadd.f32 %v1156, %v1184
  %v1186 = vpop.f32.mrf.mxu0
  %v1187 = vadd.f32 %v1158, %v1186
  %1188 = vmatmul.bf16.gmra.mxu0 %v1080
  %v1189 = vpop.f32.mrf.mxu0
  %v1190 = vadd.f32 %v1161, %v1189
  %v1191 = vpop.f32.mrf.mxu0
  %v1192 = vadd.f32 %v1163, %v1191
  %1193 = vmatmul.bf16.gmra.mxu0 %v1083
  %v1194 = vpop.f32.mrf.mxu0
  %v1195 = vadd.f32 %v1166, %v1194
  %v1196 = vpop.f32.mrf.mxu0
  %v1197 = vadd.f32 %v1168, %v1196
  %1198 = vmatmul.bf16.gmra.mxu0 %v1086
  %v1199 = vpop.f32.mrf.mxu0
  %v1200 = vadd.f32 %v1171, %v1199
  %v1201 = vpop.f32.mrf.mxu0
  %v1202 = vadd.f32 %v1173, %v1201
  %1203 = vdwg.mxu0
  %v1204 = vmax.f32 %v1185, 0.0
  %v1205 = vmax.f32 %v1187, 0.0
  %v1206 = vmax.f32 %v1190, 0.0
  %v1207 = vmax.f32 %v1192, 0.0
  %v1208 = vmax.f32 %v1195, 0.0
  %v1209 = vmax.f32 %v1197, 0.0
  %v1210 = vmax.f32 %v1200, 0.0
  %v1211 = vmax.f32 %v1202, 0.0
  %v1212 = vmax.f32 %v976, %v1204
  %v1213 = vmax.f32 %v977, %v1205
  %v1214 = vmax.f32 %v978, %v1206
  %v1215 = vmax.f32 %v979, %v1207
  %v1216 = vmax.f32 %v980, %v1208
  %v1217 = vmax.f32 %v981, %v1209
  %v1218 = vmax.f32 %v982, %v1210
  %v1219 = vmax.f32 %v983, %v1211
  %v1220 = vpack.c.bf16 %v1212, %v1212
  %v1221 = vpack.c.bf16 %v1213, %v1213
  %v1222 = vpack.c.bf16 %v1214, %v1214
  %v1223 = vpack.c.bf16 %v1215, %v1215
  %v1224 = vpack.c.bf16 %v1216, %v1216
  %v1225 = vpack.c.bf16 %v1217, %v1217
  %v1226 = vpack.c.bf16 %v1218, %v1218
  %v1227 = vpack.c.bf16 %v1219, %v1219
  %vm1228 = vcmask 125952
  %1229 = vst.msk [vmem:[%s6] sm:$0xf] %vm1228, %v1220
  %1230 = vst.msk [vmem:[%s6 + $0x4] sm:$0xf] %vm1228, %v1221
  %1231 = vst.msk [vmem:[%s6 + $0x8] sm:$0xf] %vm1228, %v1222
  %1232 = vst.msk [vmem:[%s6 + $0xc] sm:$0xf] %vm1228, %v1223
  %1233 = vst.msk [vmem:[%s6 + $0x10] sm:$0xf] %vm1228, %v1224
  %1234 = vst.msk [vmem:[%s6 + $0x14] sm:$0xf] %vm1228, %v1225
  %1235 = vst.msk [vmem:[%s6 + $0x18] sm:$0xf] %vm1228, %v1226
  %1236 = vst.msk [vmem:[%s6 + $0x1c] sm:$0xf] %vm1228, %v1227
  // Predicated region
  $region26: #{net_forward.4} parent=0 // pred_check
    _
  $region27: #{net_forward.4} parent=0 // pred_check_branch
    %1238 = sbr.rel (0) target = $region29
  $region28: #{net_forward.4} parent=0 // pred_region
    _
  $region29: #{net_forward.4} parent=0 // pred_fallthru
    _
  // Predicated region
  $region30: #{net_forward.4} parent=0 // pred_check
    _
  $region31: #{net_forward.4} parent=0 // pred_check_branch
    %1240 = sbr.rel (0) target = $region33
  $region32: #{net_forward.4} parent=0 // pred_region
    _
  $region33: #{net_forward.4} parent=0 // pred_fallthru
    _

// kernel: net_forward.5
$region0: #{net_forward.5}
  #allocation0 [shape = 'u32[]', space=smem, size = 0x4, offset = 0x4, fixed_abs, tag = 'smem constant byte address 0x4 - core index']
  #allocation1 [shape = 'u32[72,128]{1,0:T(1,128)}', space=vmem, size = 0x9000, scoped, tag = 'internal scratch']
  %s0 = inlined_call_operand.vmem [shape: bf16[16,400], index: 0, kind: input, shape index: {}]
  %s1 = inlined_call_operand.vmem [shape: bf16[400,120], index: 1, kind: input, shape index: {}]
  %s2 = inlined_call_operand.vmem [shape: f32[1,120], index: 2, kind: input, shape index: {}]
  %s3 = inlined_call_operand.vmem [shape: bf16[120,84], index: 3, kind: input, shape index: {}]
  %s4 = inlined_call_operand.vmem [shape: f32[1,84], index: 4, kind: input, shape index: {}]
  %s5 = inlined_call_operand.vmem [shape: bf16[84,10], index: 5, kind: input, shape index: {}]
  %s6 = inlined_call_operand.vmem [shape: f32[1,10], index: 6, kind: input, shape index: {}]
  %s7 = inlined_call_operand.vmem [shape: f32[16,10], index: 7, kind: output, shape index: {}]
  %s8 = sld [smem:[#allocation0]]
  $region38: #{net_forward.5} parent=0
    _
  %s10 = ssub.s32 1, %s8
  %s11 = scalar_select 0, %s10, %s8
  // Predicated region
  $region2: #{net_forward.5} parent=0 // pred_check
    _
  $region3: #{net_forward.5} parent=0 // pred_check_branch
    %13 = sbr.rel (0) target = $region5
  $region4: #{net_forward.5} parent=0 // pred_region
    _
  $region5: #{net_forward.5} parent=0 // pred_fallthru
    _
  // Predicated region
  $region6: #{net_forward.5} parent=0 // pred_check
    _
  $region7: #{net_forward.5} parent=0 // pred_check_branch
    %15 = sbr.rel (0) target = $region9
  $region8: #{net_forward.5} parent=0 // pred_region
    _
  $region9: #{net_forward.5} parent=0 // pred_fallthru
    _
  // Predicated region
  $region10: #{net_forward.5} parent=0 // pred_check
    _
  $region11: #{net_forward.5} parent=0 // pred_check_branch
    %17 = sbr.rel (0) target = $region13
  $region12: #{net_forward.5} parent=0 // pred_region
    _
  $region13: #{net_forward.5} parent=0 // pred_fallthru
    _
  // Predicated region
  $region14: #{net_forward.5} parent=0 // pred_check
    _
  $region15: #{net_forward.5} parent=0 // pred_check_branch
    %19 = sbr.rel (0) target = $region17
  $region16: #{net_forward.5} parent=0 // pred_region
    _
  $region17: #{net_forward.5} parent=0 // pred_fallthru
    _
  // Predicated region
  $region18: #{net_forward.5} parent=0 // pred_check
    _
  $region19: #{net_forward.5} parent=0 // pred_check_branch
    %21 = sbr.rel (0) target = $region21
  $region20: #{net_forward.5} parent=0 // pred_region
    _
  $region21: #{net_forward.5} parent=0 // pred_fallthru
    _
  // Predicated region
  $region22: #{net_forward.5} parent=0 // pred_check
    _
  $region23: #{net_forward.5} parent=0 // pred_check_branch
    %23 = sbr.rel (0) target = $region25
  $region24: #{net_forward.5} parent=0 // pred_region
    _
  $region25: #{net_forward.5} parent=0 // pred_fallthru
    _
  // Predicated region
  $region26: #{net_forward.5} parent=0 // pred_check
    _
  $region27: #{net_forward.5} parent=0 // pred_check_branch
    %25 = sbr.rel (0) target = $region29
  $region28: #{net_forward.5} parent=0 // pred_region
    _
  $region29: #{net_forward.5} parent=0 // pred_fallthru
    _
  %v27 = vld [vmem:[%s0] sm:$0xff]
  %v28 = vld [vmem:[%s0 + $0x8] sm:$0xff]
  %v29 = vld [vmem:[%s0 + $0x10] sm:$0xff]
  %v30 = vld [vmem:[%s0 + $0x18] sm:$0xff]
  %v31 = vld [vmem:[%s1] sm:$0xf]
  %v32 = vld [vmem:[%s1 + $0x4] sm:$0xf]
  %v33 = vld [vmem:[%s1 + $0x8] sm:$0xf]
  %v34 = vld [vmem:[%s1 + $0xc] sm:$0xf]
  %v35 = vld [vmem:[%s1 + $0x10] sm:$0xf]
  %v36 = vld [vmem:[%s1 + $0x14] sm:$0xf]
  %v37 = vld [vmem:[%s1 + $0x18] sm:$0xf]
  %v38 = vld [vmem:[%s1 + $0x1c] sm:$0xf]
  %v39 = vld [vmem:[%s1 + $0x20] sm:$0xf]
  %v40 = vld [vmem:[%s1 + $0x24] sm:$0xf]
  %v41 = vld [vmem:[%s1 + $0x28] sm:$0xf]
  %v42 = vld [vmem:[%s1 + $0x2c] sm:$0xf]
  %v43 = vld [vmem:[%s1 + $0x30] sm:$0xf]
  %v44 = vld [vmem:[%s1 + $0x34] sm:$0xf]
  %v45 = vld [vmem:[%s1 + $0x38] sm:$0xf]
  %v46 = vld [vmem:[%s1 + $0x3c] sm:$0xf]
  %v47 = vld [vmem:[%s1 + $0x40] sm:$0xf]
  %v48 = vld [vmem:[%s1 + $0x44] sm:$0xf]
  %v49 = vld [vmem:[%s1 + $0x48] sm:$0xf]
  %v50 = vld [vmem:[%s1 + $0x4c] sm:$0xf]
  %v51 = vld [vmem:[%s1 + $0x50] sm:$0xf]
  %v52 = vld [vmem:[%s1 + $0x54] sm:$0xf]
  %v53 = vld [vmem:[%s1 + $0x58] sm:$0xf]
  %v54 = vld [vmem:[%s1 + $0x5c] sm:$0xf]
  %v55 = vld [vmem:[%s1 + $0x60] sm:$0xf]
  %v56 = vld [vmem:[%s1 + $0x64] sm:$0xf]
  %v57 = vld [vmem:[%s1 + $0x68] sm:$0xf]
  %v58 = vld [vmem:[%s1 + $0x6c] sm:$0xf]
  %v59 = vld [vmem:[%s1 + $0x70] sm:$0xf]
  %v60 = vld [vmem:[%s1 + $0x74] sm:$0xf]
  %v61 = vld [vmem:[%s1 + $0x78] sm:$0xf]
  %v62 = vld [vmem:[%s1 + $0x7c] sm:$0xf]
  %v63 = vld [vmem:[%s1 + $0x80] sm:$0xf]
  %v64 = vld [vmem:[%s1 + $0x84] sm:$0xf]
  %v65 = vld [vmem:[%s1 + $0x88] sm:$0xf]
  %v66 = vld [vmem:[%s1 + $0x8c] sm:$0xf]
  %v67 = vld [vmem:[%s1 + $0x90] sm:$0xf]
  %v68 = vld [vmem:[%s1 + $0x94] sm:$0xf]
  %v69 = vld [vmem:[%s1 + $0x98] sm:$0xf]
  %v70 = vld [vmem:[%s1 + $0x9c] sm:$0xf]
  %v71 = vld [vmem:[%s1 + $0xa0] sm:$0xf]
  %v72 = vld [vmem:[%s1 + $0xa4] sm:$0xf]
  %v73 = vld [vmem:[%s1 + $0xa8] sm:$0xf]
  %v74 = vld [vmem:[%s1 + $0xac] sm:$0xf]
  %v75 = vld [vmem:[%s1 + $0xb0] sm:$0xf]
  %v76 = vld [vmem:[%s1 + $0xb4] sm:$0xf]
  %v77 = vld [vmem:[%s1 + $0xb8] sm:$0xf]
  %v78 = vld [vmem:[%s1 + $0xbc] sm:$0xf]
  %v79 = vld [vmem:[%s1 + $0xc0] sm:$0xf]
  %v80 = vld [vmem:[%s1 + $0xc4] sm:$0xf]
  %v81 = vld [vmem:[%s2] sm:$0x1]
  %v83 = vperm.slane %v81, 0
  %v89 = vunpack.c.l.b16 %v27
  %v90 = vunpack.c.h.b16 %v27
  %v91 = vunpack.c.l.b16 %v28
  %v92 = vunpack.c.h.b16 %v28
  %v93 = vunpack.c.l.b16 %v29
  %v94 = vunpack.c.h.b16 %v29
  %v95 = vunpack.c.l.b16 %v30
  %v96 = vunpack.c.h.b16 %v30
  %v97 = vpack.c.b16 %v93, %v89
  %v98 = vpack.c.b16 %v94, %v90
  %v99 = vpack.c.b16 %v95, %v91
  %v100 = vpack.c.b16 %v96, %v92
  %v154 = vunpack.c.l.b16 %v31
  %v155 = vunpack.c.l.b16 %v32
  %v156 = vunpack.c.l.b16 %v33
  %v157 = vunpack.c.l.b16 %v34
  %v158 = vunpack.c.l.b16 %v35
  %v159 = vunpack.c.l.b16 %v36
  %v160 = vunpack.c.l.b16 %v37
  %v161 = vunpack.c.l.b16 %v38
  %v162 = vunpack.c.l.b16 %v39
  %v163 = vunpack.c.l.b16 %v40
  %v164 = vunpack.c.l.b16 %v41
  %v165 = vunpack.c.l.b16 %v42
  %v166 = vunpack.c.l.b16 %v43
  %v167 = vunpack.c.l.b16 %v44
  %v168 = vunpack.c.l.b16 %v45
  %v169 = vunpack.c.l.b16 %v46
  %v170 = vunpack.c.l.b16 %v47
  %v171 = vunpack.c.l.b16 %v48
  %v172 = vunpack.c.l.b16 %v49
  %v173 = vunpack.c.l.b16 %v50
  %v174 = vunpack.c.l.b16 %v51
  %v175 = vunpack.c.l.b16 %v52
  %v176 = vunpack.c.l.b16 %v53
  %v177 = vunpack.c.l.b16 %v54
  %v178 = vunpack.c.l.b16 %v55
  %v179 = vunpack.c.l.b16 %v56
  %v180 = vunpack.c.l.b16 %v57
  %v181 = vunpack.c.l.b16 %v58
  %v182 = vunpack.c.l.b16 %v59
  %v183 = vunpack.c.l.b16 %v60
  %v184 = vunpack.c.l.b16 %v61
  %v185 = vunpack.c.l.b16 %v62
  %v186 = vunpack.c.l.b16 %v63
  %v187 = vunpack.c.l.b16 %v64
  %v188 = vunpack.c.l.b16 %v65
  %v189 = vunpack.c.l.b16 %v66
  %v190 = vunpack.c.l.b16 %v67
  %v191 = vunpack.c.l.b16 %v68
  %v192 = vunpack.c.l.b16 %v69
  %v193 = vunpack.c.l.b16 %v70
  %v194 = vunpack.c.l.b16 %v71
  %v195 = vunpack.c.l.b16 %v72
  %v196 = vunpack.c.l.b16 %v73
  %v197 = vunpack.c.l.b16 %v74
  %v198 = vunpack.c.l.b16 %v75
  %v199 = vunpack.c.l.b16 %v76
  %v200 = vunpack.c.l.b16 %v77
  %v201 = vunpack.c.l.b16 %v78
  %v202 = vunpack.c.l.b16 %v79
  %v203 = vunpack.c.l.b16 %v80
  %v204 = vpack.c.b16 %v155, %v154
  %v205 = vpack.c.b16 %v157, %v156
  %v206 = vpack.c.b16 %v159, %v158
  %v207 = vpack.c.b16 %v161, %v160
  %v208 = vpack.c.b16 %v163, %v162
  %v209 = vpack.c.b16 %v165, %v164
  %v210 = vpack.c.b16 %v167, %v166
  %v211 = vpack.c.b16 %v169, %v168
  %v212 = vpack.c.b16 %v171, %v170
  %v213 = vpack.c.b16 %v173, %v172
  %v214 = vpack.c.b16 %v175, %v174
  %v215 = vpack.c.b16 %v177, %v176
  %v216 = vpack.c.b16 %v179, %v178
  %v217 = vpack.c.b16 %v181, %v180
  %v218 = vpack.c.b16 %v183, %v182
  %v219 = vpack.c.b16 %v185, %v184
  %v220 = vpack.c.b16 %v187, %v186
  %v221 = vpack.c.b16 %v189, %v188
  %v222 = vpack.c.b16 %v191, %v190
  %v223 = vpack.c.b16 %v193, %v192
  %v224 = vpack.c.b16 %v195, %v194
  %v225 = vpack.c.b16 %v197, %v196
  %v226 = vpack.c.b16 %v199, %v198
  %v227 = vpack.c.b16 %v201, %v200
  %v228 = vpack.c.b16 %v203, %v202
  %vm254 = vcmask 130048
  %v256 = vsel %vm254, %v100, 0
  %258 = vmatpush.bf16.msra.mxu0 %v211
  %259 = vmatpush.bf16.msra.mxu0 %v210
  %260 = vmatpush.bf16.msra.mxu0 %v209
  %261 = vmatpush.bf16.msra.mxu0 %v208
  %262 = vmatpush.bf16.msra.mxu0 %v207
  %263 = vmatpush.bf16.msra.mxu0 %v206
  %264 = vmatpush.bf16.msra.mxu0 %v205
  %265 = vmatpush.bf16.msra.mxu0 %v204
  %266 = vmatmul.bf16.gmra.mxu0 %v97
  %v267 = vpop.f32.mrf.mxu0
  %v268 = vadd.f32 %v83, %v267
  %v269 = vpop.f32.mrf.mxu0
  %v270 = vadd.f32 %v83, %v269
  %271 = vdwg.mxu0
  %272 = vmatpush.bf16.msra.mxu0 %v219
  %273 = vmatpush.bf16.msra.mxu0 %v218
  %274 = vmatpush.bf16.msra.mxu0 %v217
  %275 = vmatpush.bf16.msra.mxu0 %v216
  %276 = vmatpush.bf16.msra.mxu0 %v215
  %277 = vmatpush.bf16.msra.mxu0 %v214
  %278 = vmatpush.bf16.msra.mxu0 %v213
  %279 = vmatpush.bf16.msra.mxu0 %v212
  %280 = vmatmul.bf16.gmra.mxu0 %v98
  %v281 = vpop.f32.mrf.mxu0
  %v282 = vadd.f32 %v268, %v281
  %v283 = vpop.f32.mrf.mxu0
  %v284 = vadd.f32 %v270, %v283
  %285 = vdwg.mxu0
  %286 = vmatpush.bf16.msra.mxu0 %v227
  %287 = vmatpush.bf16.msra.mxu0 %v226
  %288 = vmatpush.bf16.msra.mxu0 %v225
  %289 = vmatpush.bf16.msra.mxu0 %v224
  %290 = vmatpush.bf16.msra.mxu0 %v223
  %291 = vmatpush.bf16.msra.mxu0 %v222
  %292 = vmatpush.bf16.msra.mxu0 %v221
  %293 = vmatpush.bf16.msra.mxu0 %v220
  %294 = vmatmul.bf16.gmra.mxu0 %v99
  %v295 = vpop.f32.mrf.mxu0
  %v296 = vadd.f32 %v282, %v295
  %v297 = vpop.f32.mrf.mxu0
  %v298 = vadd.f32 %v284, %v297
  %299 = vdwg.mxu0
  %300 = vmatpush.bf16.msra.mxu0 0
  %301 = vmatpush.bf16.msra.mxu0 0
  %302 = vmatpush.bf16.msra.mxu0 0
  %303 = vmatpush.bf16.msra.mxu0 0
  %304 = vmatpush.bf16.msra.mxu0 0
  %305 = vmatpush.bf16.msra.mxu0 0
  %306 = vmatpush.bf16.msra.mxu0 0
  %307 = vmatpush.bf16.msra.mxu0 %v228
  %308 = vmatmul.bf16.gmra.mxu0 %v256
  %v309 = vpop.f32.mrf.mxu0
  %v310 = vadd.f32 %v296, %v309
  %v311 = vpop.f32.mrf.mxu0
  %v312 = vadd.f32 %v298, %v311
  %313 = vdwg.mxu0
  %v314 = vmax.f32 %v310, 0.0
  %v315 = vmax.f32 %v312, 0.0
  %v316 = vpack.c.bf16 %v315, %v314
  %v317 = vld [vmem:[%s3] sm:$0xf]
  %v318 = vld [vmem:[%s3 + $0x4] sm:$0xf]
  %v319 = vld [vmem:[%s3 + $0x8] sm:$0xf]
  %v320 = vld [vmem:[%s3 + $0xc] sm:$0xf]
  %v321 = vld [vmem:[%s3 + $0x10] sm:$0xf]
  %v322 = vld [vmem:[%s3 + $0x14] sm:$0xf]
  %v323 = vld [vmem:[%s3 + $0x18] sm:$0xf]
  %v324 = vld [vmem:[%s3 + $0x1c] sm:$0xf]
  %v325 = vld [vmem:[%s3 + $0x20] sm:$0xf]
  %v326 = vld [vmem:[%s3 + $0x24] sm:$0xf]
  %v327 = vld [vmem:[%s3 + $0x28] sm:$0xf]
  %v328 = vld [vmem:[%s3 + $0x2c] sm:$0xf]
  %v329 = vld [vmem:[%s3 + $0x30] sm:$0xf]
  %v330 = vld [vmem:[%s3 + $0x34] sm:$0xf]
  %v331 = vld [vmem:[%s3 + $0x38] sm:$0xf]
  %v332 = vld [vmem:[%s4] sm:$0x1]
  %v334 = vperm.slane %v332, 0
  %v351 = vunpack.c.l.b16 %v317
  %v352 = vunpack.c.l.b16 %v318
  %v353 = vunpack.c.l.b16 %v319
  %v354 = vunpack.c.l.b16 %v320
  %v355 = vunpack.c.l.b16 %v321
  %v356 = vunpack.c.l.b16 %v322
  %v357 = vunpack.c.l.b16 %v323
  %v358 = vunpack.c.l.b16 %v324
  %v359 = vunpack.c.l.b16 %v325
  %v360 = vunpack.c.l.b16 %v326
  %v361 = vunpack.c.l.b16 %v327
  %v362 = vunpack.c.l.b16 %v328
  %v363 = vunpack.c.l.b16 %v329
  %v364 = vunpack.c.l.b16 %v330
  %v365 = vunpack.c.l.b16 %v331
  %v366 = vpack.c.b16 %v352, %v351
  %v367 = vpack.c.b16 %v354, %v353
  %v368 = vpack.c.b16 %v356, %v355
  %v369 = vpack.c.b16 %v358, %v357
  %v370 = vpack.c.b16 %v360, %v359
  %v371 = vpack.c.b16 %v362, %v361
  %v372 = vpack.c.b16 %v364, %v363
  %v373 = vpack.c.b16 %v365, %v365
  %vm381 = vcmask 982016
  %v383 = vsel %vm381, %v316, 0
  %vm385 = vcmask 1043456
  %v387 = vsel %vm385, %v373, 0
  %389 = vmatpush.bf16.msra.mxu0 %v387
  %390 = vmatpush.bf16.msra.mxu0 %v372
  %391 = vmatpush.bf16.msra.mxu0 %v371
  %392 = vmatpush.bf16.msra.mxu0 %v370
  %393 = vmatpush.bf16.msra.mxu0 %v369
  %394 = vmatpush.bf16.msra.mxu0 %v368
  %395 = vmatpush.bf16.msra.mxu0 %v367
  %396 = vmatpush.bf16.msra.mxu0 %v366
  %397 = vmatmul.bf16.gmra.mxu0 %v383
  %v398 = vpop.f32.mrf.mxu0
  %v399 = vadd.f32 %v334, %v398
  %v400 = vpop.f32.mrf.mxu0
  %v401 = vadd.f32 %v334, %v400
  %402 = vdwg.mxu0
  %v403 = vmax.f32 %v399, 0.0
  %v404 = vmax.f32 %v401, 0.0
  %v405 = vpack.c.bf16 %v404, %v403
  %v406 = vld [vmem:[%s5] sm:$0xf]
  %v407 = vld [vmem:[%s5 + $0x4] sm:$0xf]
  %v408 = vld [vmem:[%s5 + $0x8] sm:$0xf]
  %v409 = vld [vmem:[%s5 + $0xc] sm:$0xf]
  %v410 = vld [vmem:[%s5 + $0x10] sm:$0xf]
  %v411 = vld [vmem:[%s5 + $0x14] sm:$0xf]
  %v412 = vld [vmem:[%s5 + $0x18] sm:$0xf]
  %v413 = vld [vmem:[%s5 + $0x1c] sm:$0xf]
  %v414 = vld [vmem:[%s5 + $0x20] sm:$0xf]
  %v415 = vld [vmem:[%s5 + $0x24] sm:$0xf]
  %v416 = vld [vmem:[%s5 + $0x28] sm:$0x3]
  %v417 = vld [vmem:[%s6] sm:$0x1]
  %v419 = vperm.slane %v417, 0
  %v432 = vunpack.c.l.b16 %v406
  %v433 = vunpack.c.l.b16 %v407
  %v434 = vunpack.c.l.b16 %v408
  %v435 = vunpack.c.l.b16 %v409
  %v436 = vunpack.c.l.b16 %v410
  %v437 = vunpack.c.l.b16 %v411
  %v438 = vunpack.c.l.b16 %v412
  %v439 = vunpack.c.l.b16 %v413
  %v440 = vunpack.c.l.b16 %v414
  %v441 = vunpack.c.l.b16 %v415
  %v442 = vunpack.c.l.b16 %v416
  %v443 = vpack.c.b16 %v433, %v432
  %v444 = vpack.c.b16 %v435, %v434
  %v445 = vpack.c.b16 %v437, %v436
  %v446 = vpack.c.b16 %v439, %v438
  %v447 = vpack.c.b16 %v441, %v440
  %v448 = vpack.c.b16 %v442, %v442
  %vm454 = vcmask 687104
  %v456 = vsel %vm454, %v405, 0
  %vm458 = vcmask 1041408
  %v460 = vsel %vm458, %v448, 0
  %462 = vmatpush.bf16.msra.mxu0 0
  %463 = vmatpush.bf16.msra.mxu0 0
  %464 = vmatpush.bf16.msra.mxu0 %v460
  %465 = vmatpush.bf16.msra.mxu0 %v447
  %466 = vmatpush.bf16.msra.mxu0 %v446
  %467 = vmatpush.bf16.msra.mxu0 %v445
  %468 = vmatpush.bf16.msra.mxu0 %v444
  %469 = vmatpush.bf16.msra.mxu0 %v443
  %470 = vmatmul.bf16.gmra.mxu0 %v456
  %v471 = vpop.f32.mrf.mxu0
  %v472 = vadd.f32 %v419, %v471
  %v473 = vpop.f32.mrf.mxu0
  %v474 = vadd.f32 %v419, %v473
  %475 = vdwg.mxu0
  %vm476 = vcmask 80896
  %477 = vst.msk [vmem:[%s7] sm:$0xff] %vm476, %v472
  %478 = vst.msk [vmem:[%s7 + $0x8] sm:$0xff] %vm476, %v474
  // Predicated region
  $region30: #{net_forward.5} parent=0 // pred_check
    _
  $region31: #{net_forward.5} parent=0 // pred_check_branch
    %480 = sbr.rel (0) target = $region33
  $region32: #{net_forward.5} parent=0 // pred_region
    _
  $region33: #{net_forward.5} parent=0 // pred_fallthru
    _
  // Predicated region
  $region34: #{net_forward.5} parent=0 // pred_check
    _
  $region35: #{net_forward.5} parent=0 // pred_check_branch
    %482 = sbr.rel (0) target = $region37
  $region36: #{net_forward.5} parent=0 // pred_region
    _
  $region37: #{net_forward.5} parent=0 // pred_fallthru
    _

</llo_original>
